<compile_context>
chip_gen: v7x
topology: tpu7x:2x2x1
jax: 0.10.0
libtpu: 0.0.40
codegen_flags: <defaults>
</compile_context>

<pallas_src>
import functools

import jax
import jax.numpy as jnp
from jax.experimental import pallas as pl
from jax.experimental.pallas import tpu as pltpu

_CO_PAD = 128                     # MXU lane width used for the conv matmuls
_VMEM_LIMIT = 32 * 1024 * 1024    # safe on v5e / v6e / v7x scoped-VMEM budgets
_BN_EPS = 1e-5


# ------------------------------ Pallas kernels ------------------------------

def _conv_stats_kernel(p_ref, w_ref, stats_ref):
    """Pass 1: acc = patches @ W; accumulate per-channel sum / sum-of-squares.

    stats_ref is an (8, Cout) block resident across the M grid axis
    (row 0 = sum, row 1 = sum of squares, rows 2..7 unused).
    """
    @pl.when(pl.program_id(0) == 0)
    def _init():
        stats_ref[...] = jnp.zeros_like(stats_ref)

    acc = jnp.dot(p_ref[...], w_ref[...], preferred_element_type=jnp.float32)
    s = jnp.sum(acc, axis=0, keepdims=True)
    ss = jnp.sum(acc * acc, axis=0, keepdims=True)
    pad = jnp.zeros((stats_ref.shape[0] - 2, acc.shape[1]), jnp.float32)
    stats_ref[...] += jnp.concatenate([s, ss, pad], axis=0)


def _conv_apply_kernel(p_ref, w_ref, scale_ref, shift_ref, o_ref, *, co_real):
    """Pass 2: acc = patches @ W; relu(acc*scale + shift); store real channels."""
    acc = jnp.dot(p_ref[...], w_ref[...], preferred_element_type=jnp.float32)
    y = jnp.maximum(acc * scale_ref[...] + shift_ref[...], 0.0)
    if co_real != y.shape[-1]:
        y = y[:, :co_real]          # drop zero-padded MXU lanes before the store
    o_ref[...] = y.astype(o_ref.dtype)


def _conv_apply_pool_kernel(p_ref, w_ref, scale_ref, shift_ref, o_ref, *, co_real):
    """Pass 2 + fused CBAM channel pool: emit [mean_c, max_c] per output pixel."""
    acc = jnp.dot(p_ref[...], w_ref[...], preferred_element_type=jnp.float32)
    y = jnp.maximum(acc * scale_ref[...] + shift_ref[...], 0.0)
    # Padded channels carry scale=shift=0 -> relu gives exact zeros, so the lane
    # reduce over all 128 lanes is correct (divide by the real channel count;
    # max is unaffected because y >= 0).  Pooled output is tiny (~Cout/2 smaller
    # than f2), so the narrow lane store here is negligible traffic.
    avg = jnp.sum(y, axis=-1, keepdims=True) * (1.0 / co_real)
    mx = jnp.max(y, axis=-1, keepdims=True)
    o_ref[...] = jnp.concatenate([avg, mx], axis=-1).astype(o_ref.dtype)


def _spatial_attn_kernel(w_ref, planes_ref, o_ref, *, kh, kw, ho, wo):
    """7x7 CBAM conv + sigmoid as a VPU stencil over padded (avg, max) planes."""
    acc = jnp.zeros((ho, wo), jnp.float32)
    for c in range(2):
        plane = planes_ref[0, c, :, :]              # (ho+6, wo+6) VMEM tile
        for dy in range(kh):
            for dx in range(kw):
                wv = w_ref[c * kh * kw + dy * kw + dx]   # scalar from SMEM
                acc = acc + wv * plane[dy:dy + ho, dx:dx + wo]
    o_ref[0, :, :] = jax.nn.sigmoid(acc)


# ------------------------------ pallas_call wrappers ------------------------------

def _round_up(x, m):
    return (x + m - 1) // m * m


def _pick_tile(m, tm_max):
    tm_max = max(8, (tm_max // 8) * 8)
    return min(tm_max, _round_up(m, 8))


def conv_bn_stats(patches, w, *, tm):
    mpad, k = patches.shape
    co = w.shape[1]
    return pl.pallas_call(
        _conv_stats_kernel,
        out_shape=jax.ShapeDtypeStruct((8, co), jnp.float32),
        grid=(mpad // tm,),
        in_specs=[pl.BlockSpec((tm, k), lambda i: (i, 0)),
                  pl.BlockSpec((k, co), lambda i: (0, 0))],
        out_specs=pl.BlockSpec((8, co), lambda i: (0, 0)),
        compiler_params=pltpu.CompilerParams(
            dimension_semantics=("arbitrary",),      # resident stats accumulator
            vmem_limit_bytes=_VMEM_LIMIT),
        cost_estimate=pl.CostEstimate(
            flops=2 * mpad * k * co, transcendentals=0,
            bytes_accessed=mpad * k * 2 + k * co * 2 + 8 * co * 4),
    )(patches, w)


def conv_bn_apply(patches, w, scale, shift, *, tm, co_real, pool, out_dtype):
    mpad, k = patches.shape
    co = w.shape[1]
    if pool:
        kern = functools.partial(_conv_apply_pool_kernel, co_real=co_real)
        out_w = 2
    else:
        kern = functools.partial(_conv_apply_kernel, co_real=co_real)
        out_w = co_real
    out_bytes = mpad * out_w * jnp.dtype(out_dtype).itemsize
    return pl.pallas_call(
        kern,
        out_shape=jax.ShapeDtypeStruct((mpad, out_w), out_dtype),
        grid=(mpad // tm,),
        in_specs=[pl.BlockSpec((tm, k), lambda i: (i, 0)),
                  pl.BlockSpec((k, co), lambda i: (0, 0)),
                  pl.BlockSpec((1, co), lambda i: (0, 0)),
                  pl.BlockSpec((1, co), lambda i: (0, 0))],
        out_specs=pl.BlockSpec((tm, out_w), lambda i: (i, 0)),
        compiler_params=pltpu.CompilerParams(
            dimension_semantics=("parallel",),       # megacore-shardable
            vmem_limit_bytes=_VMEM_LIMIT),
        cost_estimate=pl.CostEstimate(
            flops=2 * mpad * k * co, transcendentals=0,
            bytes_accessed=mpad * k * 2 + k * co * 2 + out_bytes),
    )(patches, w, scale, shift)


def spatial_attention(planes, w_flat, *, ho, wo):
    n, c2, hp, wp = planes.shape
    kern = functools.partial(_spatial_attn_kernel, kh=7, kw=7, ho=ho, wo=wo)
    return pl.pallas_call(
        kern,
        out_shape=jax.ShapeDtypeStruct((n, ho, wo), jnp.float32),
        grid=(n,),
        in_specs=[pl.BlockSpec(memory_space=pltpu.MemorySpace.SMEM),
                  pl.BlockSpec((1, c2, hp, wp), lambda i: (i, 0, 0, 0))],
        out_specs=pl.BlockSpec((1, ho, wo), lambda i: (i, 0, 0)),
        compiler_params=pltpu.CompilerParams(
            dimension_semantics=("parallel",),
            vmem_limit_bytes=_VMEM_LIMIT),
        cost_estimate=pl.CostEstimate(
            flops=2 * n * ho * wo * c2 * 49, transcendentals=n * ho * wo,
            bytes_accessed=n * (c2 * hp * wp + ho * wo) * 4 + c2 * 49 * 4),
    )(w_flat, planes)


# ------------------------------ JAX glue ------------------------------

def im2col(x_nhwc, kh, kw, stride, pad):
    """Conv patches: [N, Ho, Wo, kh*kw*C] with (ki, kj, c) ordering."""
    x = x_nhwc
    if pad:
        x = jnp.pad(x, ((0, 0), (pad, pad), (pad, pad), (0, 0)))
    n, h, w, c = x.shape
    ho = (h - kh) // stride + 1
    wo = (w - kw) // stride + 1
    cols = []
    for ki in range(kh):
        for kj in range(kw):
            cols.append(x[:, ki:ki + stride * ho:stride, kj:kj + stride * wo:stride, :])
    patches = jnp.stack(cols, axis=3)                       # [N, Ho, Wo, kh*kw, C]
    return patches.reshape(n, ho, wo, kh * kw * c), ho, wo


def _prep_conv_weight(w_oihw, co_pad):
    """PyTorch [Cout, Cin, kh, kw] -> [kh*kw*Cin, co_pad] bf16 (lane-padded)."""
    cout, cin, kh, kw = w_oihw.shape
    w = jnp.transpose(w_oihw, (2, 3, 1, 0)).reshape(kh * kw * cin, cout)
    w = jnp.pad(w, ((0, 0), (0, co_pad - cout)))
    return w.astype(jnp.bfloat16)


def _pad_rows(p2d, m_pad):
    m = p2d.shape[0]
    return p2d if m == m_pad else jnp.pad(p2d, ((0, m_pad - m), (0, 0)))


def _bn_fold(stats, m_true, gamma, beta, co_pad, eps):
    """Fold batch statistics + affine params into per-channel scale/shift."""
    g = jnp.pad(gamma.astype(jnp.float32), (0, co_pad - gamma.shape[0]))
    b = jnp.pad(beta.astype(jnp.float32), (0, co_pad - beta.shape[0]))
    mean = stats[0] / m_true
    # E[x^2]-E[x]^2 in f32; the clamp guards the (tiny) cancellation error.
    var = jnp.maximum(stats[1] / m_true - mean * mean, 0.0)
    scale = g * jax.lax.rsqrt(var + eps)
    shift = b - mean * scale
    return scale.reshape(1, co_pad), shift.reshape(1, co_pad)


def _conv_bn_relu_stage(x_nhwc, w_oihw, gamma, beta, *, kh, kw, stride, pad,
                        tm_max, pool, out_dtype, eps=_BN_EPS):
    n = x_nhwc.shape[0]
    cout = w_oihw.shape[0]
    patches, ho, wo = im2col(x_nhwc, kh, kw, stride, pad)
    m = n * ho * wo
    k = patches.shape[-1]
    patches = patches.reshape(m, k).astype(jnp.bfloat16)
    tm = _pick_tile(m, tm_max)
    m_pad = _round_up(m, tm)
    patches = _pad_rows(patches, m_pad)
    w = _prep_conv_weight(w_oihw, _CO_PAD)

    stats = conv_bn_stats(patches, w, tm=tm)
    scale, shift = _bn_fold(stats, float(m), gamma, beta, _CO_PAD, eps)
    out = conv_bn_apply(patches, w, scale, shift, tm=tm, co_real=cout,
                        pool=pool, out_dtype=out_dtype)
    return out[:m], ho, wo


def init_params(key, in_channels):
    k1, k2, k3 = jax.random.split(key, 3)

    def kaiming_a1(k, shape):     # kaiming_normal_(a=1) => std = 1/sqrt(fan_in)
        cout, cin, kh, kw = shape
        std = 1.0 / jnp.sqrt(jnp.float32(cin * kh * kw))
        return jax.random.normal(k, shape, jnp.float32) * std

    return {
        "w1": kaiming_a1(k1, (32, in_channels, 3, 3)),
        "g1": jnp.ones((32,), jnp.float32),
        "b1": jnp.zeros((32,), jnp.float32),
        "w2": kaiming_a1(k2, (64, 32, 3, 3)),
        "g2": jnp.ones((64,), jnp.float32),
        "b2": jnp.zeros((64,), jnp.float32),
        "w_sa": kaiming_a1(k3, (1, 2, 7, 7)),
    }


def srm_pixel_attention(x_nchw, params, *, tm=1024):
    """Forward pass. Input NCHW (PyTorch convention); output NCHW [N, 1, H', W']."""
    x = jnp.transpose(x_nchw, (0, 2, 3, 1)).astype(jnp.bfloat16)   # NHWC, bf16 feed
    n = x.shape[0]

    # Conv2d(in, 32, 3, stride=2, pad=0, bias=False) + BN(32) + ReLU
    f1, h1, w1 = _conv_bn_relu_stage(
        x, params["w1"], params["g1"], params["b1"],
        kh=3, kw=3, stride=2, pad=0, tm_max=tm, pool=False, out_dtype=jnp.bfloat16)
    f1 = f1.reshape(n, h1, w1, 32)

    # Conv2d(32, 64, 3, stride=1, pad=0, bias=False) + BN(64) + ReLU, with the
    # CBAM channel mean/max pool fused into the normalize pass (f2 never hits HBM).
    # NOTE: the wrapper-side im2col still writes 9x the f1 volume through HBM;
    # fusing patch construction into the kernel via haloed spatial BlockSpecs
    # would remove that traffic (left as a follow-up).
    pooled, h2, w2 = _conv_bn_relu_stage(
        f1, params["w2"], params["g2"], params["b2"],
        kh=3, kw=3, stride=1, pad=0, tm_max=tm, pool=True, out_dtype=jnp.float32)
    pooled = pooled.reshape(n, h2, w2, 2)

    # SpatialAttention: 7x7 conv (pad=3, bias=False) over [avg_c, max_c] + sigmoid,
    # computed as a VPU stencil over padded spatial planes (no 49x im2col, no
    # width-1 MXU output).
    planes = jnp.transpose(pooled, (0, 3, 1, 2)).astype(jnp.float32)    # (N, 2, H2, W2)
    planes = jnp.pad(planes, ((0, 0), (0, 0), (3, 3), (3, 3)))
    w_sa = params["w_sa"].astype(jnp.float32).reshape(-1)               # (2*7*7,) c,dy,dx
    att = spatial_attention(planes, w_sa, ho=h2, wo=w2)                 # (N, H2, W2)
    return att.reshape(n, 1, h2, w2)


# ------------------------------ pure-JAX reference ------------------------------

def reference_forward(x_nchw, params, eps=_BN_EPS):
    """Reference (train-mode BN, CBAM), with the same bf16 input/weight rounding."""
    f32 = jnp.float32

    def rb(a):
        return a.astype(jnp.bfloat16).astype(f32)

    def conv(x, w_oihw, stride, pad, round_w=True):
        w = rb(w_oihw) if round_w else w_oihw.astype(f32)
        return jax.lax.conv_general_dilated(
            x, jnp.transpose(w, (2, 3, 1, 0)),
            window_strides=(stride, stride),
            padding=((pad, pad), (pad, pad)),
            dimension_numbers=("NHWC", "HWIO", "NHWC"))

    def bn_relu(x, g, b):
        mean = jnp.mean(x, axis=(0, 1, 2))
        var = jnp.mean(jnp.square(x - mean), axis=(0, 1, 2))
        return jnp.maximum((x - mean) * jax.lax.rsqrt(var + eps) * g + b, 0.0)

    x = jnp.transpose(x_nchw, (0, 2, 3, 1)).astype(f32)
    f1 = bn_relu(conv(rb(x), params["w1"], 2, 0), params["g1"], params["b1"])
    f2 = bn_relu(conv(rb(f1), params["w2"], 1, 0), params["g2"], params["b2"])
    pooled = jnp.concatenate([jnp.mean(f2, -1, keepdims=True),
                              jnp.max(f2, -1, keepdims=True)], axis=-1)
    att = jax.nn.sigmoid(conv(pooled, params["w_sa"], 1, 3, round_w=False))
    return jnp.transpose(att, (0, 3, 1, 2))


# ------------------------------ main ------------------------------

if __name__ == "__main__":
    key = jax.random.PRNGKey(0)
    k_x, k_p = jax.random.split(key)

    in_channels = 4
    x = jax.random.normal(k_x, (2, in_channels, 16, 16), jnp.float32)   # NCHW
    params = init_params(k_p, in_channels)

    # Small tm so the toy shapes still exercise the multi-tile grid + resident
    # stats-accumulator path; production would use tm in the 512-2048 range,
    # sized to per-generation scoped VMEM (v7x has half the VMEM of v5e/v6e).
    fwd = jax.jit(functools.partial(srm_pixel_attention, tm=32))
    att_map = jax.block_until_ready(fwd(x, params))

    assert att_map.shape == (2, 1, 5, 5), att_map.shape
    assert bool(jnp.all(jnp.isfinite(att_map)))
    assert bool(jnp.all((att_map > 0.0) & (att_map < 1.0)))   # sigmoid range

    ref = reference_forward(x, params)
    err = float(jnp.max(jnp.abs(att_map - ref)))
    assert err < 2e-2, f"mismatch vs reference: {err}"
    print("KERNEL_OK")
</pallas_src>

<mosaic_0001>
module attributes {stable_mosaic.version = 11 : i64} {
  func.func @_conv_apply_kernel(%arg0: i32, %arg1: memref<32x36xbf16, #tpu.memory_space<vmem>>, %arg2: memref<36x128xbf16, #tpu.memory_space<vmem>>, %arg3: memref<1x128xf32, #tpu.memory_space<vmem>>, %arg4: memref<1x128xf32, #tpu.memory_space<vmem>>, %arg5: memref<32x32xbf16, #tpu.memory_space<vmem>>) attributes {dimension_semantics = [#tpu.dimension_semantics<parallel>], iteration_bounds = array<i64: 4>, scalar_prefetch = 0 : i64, scratch_operands = 0 : i64, tpu.core_type = #tpu.core_type<tc>, window_params = [{transform_indices = @transform_0, window_bounds = array<i64: 32, 36>}, {pipeline_mode = #tpu.pipeline_mode<synchronous>, transform_indices = @transform_1, window_bounds = array<i64: 36, 128>}, {pipeline_mode = #tpu.pipeline_mode<synchronous>, transform_indices = @transform_2, window_bounds = array<i64: 1, 128>}, {pipeline_mode = #tpu.pipeline_mode<synchronous>, transform_indices = @transform_3, window_bounds = array<i64: 1, 128>}, {transform_indices = @transform_4, window_bounds = array<i64: 32, 32>}]} {
    %c0 = arith.constant 0 : index
    %c0_0 = arith.constant 0 : index
    %0 = vector.load %arg1[%c0, %c0_0] : memref<32x36xbf16, #tpu.memory_space<vmem>>, vector<32x36xbf16>
    %c0_1 = arith.constant 0 : index
    %c0_2 = arith.constant 0 : index
    %1 = vector.load %arg2[%c0_1, %c0_2] : memref<36x128xbf16, #tpu.memory_space<vmem>>, vector<36x128xbf16>
    %cst = arith.constant dense<0.000000e+00> : vector<32x128xf32>
    %2 = tpu.matmul %0, %1, %cst {dimension_numbers = #tpu.dot_dimension_numbers<[1], [0], [0], [1], [0, 0, 1, 1], [], []>} : vector<32x36xbf16>, vector<36x128xbf16>, vector<32x128xf32> -> vector<32x128xf32>
    %c0_3 = arith.constant 0 : index
    %c0_4 = arith.constant 0 : index
    %3 = vector.load %arg3[%c0_3, %c0_4] : memref<1x128xf32, #tpu.memory_space<vmem>>, vector<1x128xf32>
    %4 = vector.broadcast %3 : vector<1x128xf32> to vector<32x128xf32>
    %5 = arith.mulf %2, %4 : vector<32x128xf32>
    %c0_5 = arith.constant 0 : index
    %c0_6 = arith.constant 0 : index
    %6 = vector.load %arg4[%c0_5, %c0_6] : memref<1x128xf32, #tpu.memory_space<vmem>>, vector<1x128xf32>
    %7 = vector.broadcast %6 : vector<1x128xf32> to vector<32x128xf32>
    %8 = arith.addf %5, %7 : vector<32x128xf32>
    %cst_7 = arith.constant 0.000000e+00 : f32
    %9 = vector.broadcast %cst_7 : f32 to vector<32x128xf32>
    %10 = arith.maximumf %8, %9 : vector<32x128xf32>
    %11 = vector.extract_strided_slice %10 {offsets = [0, 0], sizes = [32, 32], strides = [1, 1]} : vector<32x128xf32> to vector<32x32xf32>
    %12 = arith.truncf %11 : vector<32x32xf32> to vector<32x32xbf16>
    %c0_8 = arith.constant 0 : index
    %c0_9 = arith.constant 0 : index
    %13 = vector.load %arg5[%c0_8, %c0_9] : memref<32x32xbf16, #tpu.memory_space<vmem>>, vector<32x32xbf16>
    tpu.vector_store %arg5[%c0_8, %c0_9], %12 {strides = array<i32>} : memref<32x32xbf16, #tpu.memory_space<vmem>>, vector<32x32xbf16>,
    return
  }
  func.func @transform_0(%arg0: i32) -> (i32, i32) {
    %c0_i32 = arith.constant 0 : i32
    %c0_i32_0 = arith.constant 0 : i32
    return %arg0, %c0_i32 : i32, i32
  }
  func.func @transform_1(%arg0: i32) -> (i32, i32) {
    %c0_i32 = arith.constant 0 : i32
    %c0_i32_0 = arith.constant 0 : i32
    %c0_i32_1 = arith.constant 0 : i32
    return %c0_i32, %c0_i32_0 : i32, i32
  }
  func.func @transform_2(%arg0: i32) -> (i32, i32) {
    %c0_i32 = arith.constant 0 : i32
    %c0_i32_0 = arith.constant 0 : i32
    %c0_i32_1 = arith.constant 0 : i32
    return %c0_i32, %c0_i32_0 : i32, i32
  }
  func.func @transform_3(%arg0: i32) -> (i32, i32) {
    %c0_i32 = arith.constant 0 : i32
    %c0_i32_0 = arith.constant 0 : i32
    %c0_i32_1 = arith.constant 0 : i32
    return %c0_i32, %c0_i32_0 : i32, i32
  }
  func.func @transform_4(%arg0: i32) -> (i32, i32) {
    %c0_i32 = arith.constant 0 : i32
    %c0_i32_0 = arith.constant 0 : i32
    return %arg0, %c0_i32 : i32, i32
  }
}

module attributes {stable_mosaic.version = 11 : i64} {
  func.func @_conv_stats_kernel(%arg0: i32, %arg1: memref<32x36xbf16, #tpu.memory_space<vmem>>, %arg2: memref<36x128xbf16, #tpu.memory_space<vmem>>, %arg3: memref<8x128xf32, #tpu.memory_space<vmem>>) attributes {dimension_semantics = [#tpu.dimension_semantics<arbitrary>], iteration_bounds = array<i64: 4>, scalar_prefetch = 0 : i64, scratch_operands = 0 : i64, tpu.core_type = #tpu.core_type<tc>, window_params = [{transform_indices = @transform_0, window_bounds = array<i64: 32, 36>}, {pipeline_mode = #tpu.pipeline_mode<synchronous>, transform_indices = @transform_1, window_bounds = array<i64: 36, 128>}, {pipeline_mode = #tpu.pipeline_mode<synchronous>, transform_indices = @transform_2, window_bounds = array<i64: 8, 128>}]} {
    %c0_i32 = arith.constant 0 : i32
    %0 = arith.cmpi eq, %arg0, %c0_i32 : i32
    %1 = arith.extui %0 : i1 to i32
    %c0_i32_0 = arith.constant 0 : i32
    %2 = arith.cmpi ne, %1, %c0_i32_0 : i32
    scf.if %2 {
      %cst_11 = arith.constant 0.000000e+00 : f32
      %16 = vector.broadcast %cst_11 : f32 to vector<8x128xf32>
      %c0_12 = arith.constant 0 : index
      %c0_13 = arith.constant 0 : index
      %17 = vector.load %arg3[%c0_12, %c0_13] : memref<8x128xf32, #tpu.memory_space<vmem>>, vector<8x128xf32>
      tpu.vector_store %arg3[%c0_12, %c0_13], %16 {strides = array<i32>} : memref<8x128xf32, #tpu.memory_space<vmem>>, vector<8x128xf32>,
    } else {
    }
    %c0 = arith.constant 0 : index
    %c0_1 = arith.constant 0 : index
    %3 = vector.load %arg1[%c0, %c0_1] : memref<32x36xbf16, #tpu.memory_space<vmem>>, vector<32x36xbf16>
    %c0_2 = arith.constant 0 : index
    %c0_3 = arith.constant 0 : index
    %4 = vector.load %arg2[%c0_2, %c0_3] : memref<36x128xbf16, #tpu.memory_space<vmem>>, vector<36x128xbf16>
    %cst = arith.constant dense<0.000000e+00> : vector<32x128xf32>
    %5 = tpu.matmul %3, %4, %cst {dimension_numbers = #tpu.dot_dimension_numbers<[1], [0], [0], [1], [0, 0, 1, 1], [], []>} : vector<32x36xbf16>, vector<36x128xbf16>, vector<32x128xf32> -> vector<32x128xf32>
    %cst_4 = arith.constant dense<0.000000e+00> : vector<128xf32>
    %6 = vector.multi_reduction <add>, %5, %cst_4 [0] : vector<32x128xf32> to vector<128xf32>
    %7 = vector.shape_cast %6 : vector<128xf32> to vector<1x128xf32>
    %8 = arith.mulf %5, %5 : vector<32x128xf32>
    %cst_5 = arith.constant dense<0.000000e+00> : vector<128xf32>
    %9 = vector.multi_reduction <add>, %8, %cst_5 [0] : vector<32x128xf32> to vector<128xf32>
    %10 = vector.shape_cast %9 : vector<128xf32> to vector<1x128xf32>
    %cst_6 = arith.constant 0.000000e+00 : f32
    %11 = vector.broadcast %cst_6 : f32 to vector<6x128xf32>
    %c0_7 = arith.constant 0 : index
    %c0_8 = arith.constant 0 : index
    %12 = vector.load %arg3[%c0_7, %c0_8] : memref<8x128xf32, #tpu.memory_space<vmem>>, vector<8x128xf32>
    %13 = tpu.concatenate %7, %10, %11 in 0 : vector<1x128xf32>, vector<1x128xf32>, vector<6x128xf32> -> vector<8x128xf32>
    %14 = arith.addf %12, %13 : vector<8x128xf32>
    %c0_9 = arith.constant 0 : index
    %c0_10 = arith.constant 0 : index
    %15 = vector.load %arg3[%c0_9, %c0_10] : memref<8x128xf32, #tpu.memory_space<vmem>>, vector<8x128xf32>
    tpu.vector_store %arg3[%c0_9, %c0_10], %14 {strides = array<i32>} : memref<8x128xf32, #tpu.memory_space<vmem>>, vector<8x128xf32>,
    return
  }
  func.func @transform_0(%arg0: i32) -> (i32, i32) {
    %c0_i32 = arith.constant 0 : i32
    %c0_i32_0 = arith.constant 0 : i32
    return %arg0, %c0_i32 : i32, i32
  }
  func.func @transform_1(%arg0: i32) -> (i32, i32) {
    %c0_i32 = arith.constant 0 : i32
    %c0_i32_0 = arith.constant 0 : i32
    %c0_i32_1 = arith.constant 0 : i32
    return %c0_i32, %c0_i32_0 : i32, i32
  }
  func.func @transform_2(%arg0: i32) -> (i32, i32) {
    %c0_i32 = arith.constant 0 : i32
    %c0_i32_0 = arith.constant 0 : i32
    %c0_i32_1 = arith.constant 0 : i32
    return %c0_i32, %c0_i32_0 : i32, i32
  }
}

module attributes {stable_mosaic.version = 11 : i64} {
  func.func @_conv_stats_kernel(%arg0: i32, %arg1: memref<32x288xbf16, #tpu.memory_space<vmem>>, %arg2: memref<288x128xbf16, #tpu.memory_space<vmem>>, %arg3: memref<8x128xf32, #tpu.memory_space<vmem>>) attributes {dimension_semantics = [#tpu.dimension_semantics<arbitrary>], iteration_bounds = array<i64: 2>, scalar_prefetch = 0 : i64, scratch_operands = 0 : i64, tpu.core_type = #tpu.core_type<tc>, window_params = [{transform_indices = @transform_0, window_bounds = array<i64: 32, 288>}, {pipeline_mode = #tpu.pipeline_mode<synchronous>, transform_indices = @transform_1, window_bounds = array<i64: 288, 128>}, {pipeline_mode = #tpu.pipeline_mode<synchronous>, transform_indices = @transform_2, window_bounds = array<i64: 8, 128>}]} {
    %c0_i32 = arith.constant 0 : i32
    %0 = arith.cmpi eq, %arg0, %c0_i32 : i32
    %1 = arith.extui %0 : i1 to i32
    %c0_i32_0 = arith.constant 0 : i32
    %2 = arith.cmpi ne, %1, %c0_i32_0 : i32
    scf.if %2 {
      %cst_11 = arith.constant 0.000000e+00 : f32
      %16 = vector.broadcast %cst_11 : f32 to vector<8x128xf32>
      %c0_12 = arith.constant 0 : index
      %c0_13 = arith.constant 0 : index
      %17 = vector.load %arg3[%c0_12, %c0_13] : memref<8x128xf32, #tpu.memory_space<vmem>>, vector<8x128xf32>
      tpu.vector_store %arg3[%c0_12, %c0_13], %16 {strides = array<i32>} : memref<8x128xf32, #tpu.memory_space<vmem>>, vector<8x128xf32>,
    } else {
    }
    %c0 = arith.constant 0 : index
    %c0_1 = arith.constant 0 : index
    %3 = vector.load %arg1[%c0, %c0_1] : memref<32x288xbf16, #tpu.memory_space<vmem>>, vector<32x288xbf16>
    %c0_2 = arith.constant 0 : index
    %c0_3 = arith.constant 0 : index
    %4 = vector.load %arg2[%c0_2, %c0_3] : memref<288x128xbf16, #tpu.memory_space<vmem>>, vector<288x128xbf16>
    %cst = arith.constant dense<0.000000e+00> : vector<32x128xf32>
    %5 = tpu.matmul %3, %4, %cst {dimension_numbers = #tpu.dot_dimension_numbers<[1], [0], [0], [1], [0, 0, 1, 1], [], []>} : vector<32x288xbf16>, vector<288x128xbf16>, vector<32x128xf32> -> vector<32x128xf32>
    %cst_4 = arith.constant dense<0.000000e+00> : vector<128xf32>
    %6 = vector.multi_reduction <add>, %5, %cst_4 [0] : vector<32x128xf32> to vector<128xf32>
    %7 = vector.shape_cast %6 : vector<128xf32> to vector<1x128xf32>
    %8 = arith.mulf %5, %5 : vector<32x128xf32>
    %cst_5 = arith.constant dense<0.000000e+00> : vector<128xf32>
    %9 = vector.multi_reduction <add>, %8, %cst_5 [0] : vector<32x128xf32> to vector<128xf32>
    %10 = vector.shape_cast %9 : vector<128xf32> to vector<1x128xf32>
    %cst_6 = arith.constant 0.000000e+00 : f32
    %11 = vector.broadcast %cst_6 : f32 to vector<6x128xf32>
    %c0_7 = arith.constant 0 : index
    %c0_8 = arith.constant 0 : index
    %12 = vector.load %arg3[%c0_7, %c0_8] : memref<8x128xf32, #tpu.memory_space<vmem>>, vector<8x128xf32>
    %13 = tpu.concatenate %7, %10, %11 in 0 : vector<1x128xf32>, vector<1x128xf32>, vector<6x128xf32> -> vector<8x128xf32>
    %14 = arith.addf %12, %13 : vector<8x128xf32>
    %c0_9 = arith.constant 0 : index
    %c0_10 = arith.constant 0 : index
    %15 = vector.load %arg3[%c0_9, %c0_10] : memref<8x128xf32, #tpu.memory_space<vmem>>, vector<8x128xf32>
    tpu.vector_store %arg3[%c0_9, %c0_10], %14 {strides = array<i32>} : memref<8x128xf32, #tpu.memory_space<vmem>>, vector<8x128xf32>,
    return
  }
  func.func @transform_0(%arg0: i32) -> (i32, i32) {
    %c0_i32 = arith.constant 0 : i32
    %c0_i32_0 = arith.constant 0 : i32
    return %arg0, %c0_i32 : i32, i32
  }
  func.func @transform_1(%arg0: i32) -> (i32, i32) {
    %c0_i32 = arith.constant 0 : i32
    %c0_i32_0 = arith.constant 0 : i32
    %c0_i32_1 = arith.constant 0 : i32
    return %c0_i32, %c0_i32_0 : i32, i32
  }
  func.func @transform_2(%arg0: i32) -> (i32, i32) {
    %c0_i32 = arith.constant 0 : i32
    %c0_i32_0 = arith.constant 0 : i32
    %c0_i32_1 = arith.constant 0 : i32
    return %c0_i32, %c0_i32_0 : i32, i32
  }
}

module attributes {stable_mosaic.version = 11 : i64} {
  func.func @_conv_apply_pool_kernel(%arg0: i32, %arg1: memref<32x288xbf16, #tpu.memory_space<vmem>>, %arg2: memref<288x128xbf16, #tpu.memory_space<vmem>>, %arg3: memref<1x128xf32, #tpu.memory_space<vmem>>, %arg4: memref<1x128xf32, #tpu.memory_space<vmem>>, %arg5: memref<32x2xf32, #tpu.memory_space<vmem>>) attributes {dimension_semantics = [#tpu.dimension_semantics<parallel>], iteration_bounds = array<i64: 2>, scalar_prefetch = 0 : i64, scratch_operands = 0 : i64, tpu.core_type = #tpu.core_type<tc>, window_params = [{transform_indices = @transform_0, window_bounds = array<i64: 32, 288>}, {pipeline_mode = #tpu.pipeline_mode<synchronous>, transform_indices = @transform_1, window_bounds = array<i64: 288, 128>}, {pipeline_mode = #tpu.pipeline_mode<synchronous>, transform_indices = @transform_2, window_bounds = array<i64: 1, 128>}, {pipeline_mode = #tpu.pipeline_mode<synchronous>, transform_indices = @transform_3, window_bounds = array<i64: 1, 128>}, {transform_indices = @transform_4, window_bounds = array<i64: 32, 2>}]} {
    %c0 = arith.constant 0 : index
    %c0_0 = arith.constant 0 : index
    %0 = vector.load %arg1[%c0, %c0_0] : memref<32x288xbf16, #tpu.memory_space<vmem>>, vector<32x288xbf16>
    %c0_1 = arith.constant 0 : index
    %c0_2 = arith.constant 0 : index
    %1 = vector.load %arg2[%c0_1, %c0_2] : memref<288x128xbf16, #tpu.memory_space<vmem>>, vector<288x128xbf16>
    %cst = arith.constant dense<0.000000e+00> : vector<32x128xf32>
    %2 = tpu.matmul %0, %1, %cst {dimension_numbers = #tpu.dot_dimension_numbers<[1], [0], [0], [1], [0, 0, 1, 1], [], []>} : vector<32x288xbf16>, vector<288x128xbf16>, vector<32x128xf32> -> vector<32x128xf32>
    %c0_3 = arith.constant 0 : index
    %c0_4 = arith.constant 0 : index
    %3 = vector.load %arg3[%c0_3, %c0_4] : memref<1x128xf32, #tpu.memory_space<vmem>>, vector<1x128xf32>
    %4 = vector.broadcast %3 : vector<1x128xf32> to vector<32x128xf32>
    %5 = arith.mulf %2, %4 : vector<32x128xf32>
    %c0_5 = arith.constant 0 : index
    %c0_6 = arith.constant 0 : index
    %6 = vector.load %arg4[%c0_5, %c0_6] : memref<1x128xf32, #tpu.memory_space<vmem>>, vector<1x128xf32>
    %7 = vector.broadcast %6 : vector<1x128xf32> to vector<32x128xf32>
    %8 = arith.addf %5, %7 : vector<32x128xf32>
    %cst_7 = arith.constant 0.000000e+00 : f32
    %9 = vector.broadcast %cst_7 : f32 to vector<32x128xf32>
    %10 = arith.maximumf %8, %9 : vector<32x128xf32>
    %cst_8 = arith.constant dense<0.000000e+00> : vector<32xf32>
    %11 = vector.multi_reduction <add>, %10, %cst_8 [1] : vector<32x128xf32> to vector<32xf32>
    %12 = vector.shape_cast %11 : vector<32xf32> to vector<32x1xf32>
    %cst_9 = arith.constant 1.562500e-02 : f32
    %13 = vector.broadcast %cst_9 : f32 to vector<32x1xf32>
    %14 = arith.mulf %12, %13 : vector<32x1xf32>
    %cst_10 = arith.constant dense<0xFF800000> : vector<32xf32>
    %15 = vector.multi_reduction <maximumf>, %10, %cst_10 [1] : vector<32x128xf32> to vector<32xf32>
    %16 = vector.shape_cast %15 : vector<32xf32> to vector<32x1xf32>
    %17 = tpu.concatenate %14, %16 in 1 : vector<32x1xf32>, vector<32x1xf32> -> vector<32x2xf32>
    %c0_11 = arith.constant 0 : index
    %c0_12 = arith.constant 0 : index
    %18 = vector.load %arg5[%c0_11, %c0_12] : memref<32x2xf32, #tpu.memory_space<vmem>>, vector<32x2xf32>
    tpu.vector_store %arg5[%c0_11, %c0_12], %17 {strides = array<i32>} : memref<32x2xf32, #tpu.memory_space<vmem>>, vector<32x2xf32>,
    return
  }
  func.func @transform_0(%arg0: i32) -> (i32, i32) {
    %c0_i32 = arith.constant 0 : i32
    %c0_i32_0 = arith.constant 0 : i32
    return %arg0, %c0_i32 : i32, i32
  }
  func.func @transform_1(%arg0: i32) -> (i32, i32) {
    %c0_i32 = arith.constant 0 : i32
    %c0_i32_0 = arith.constant 0 : i32
    %c0_i32_1 = arith.constant 0 : i32
    return %c0_i32, %c0_i32_0 : i32, i32
  }
  func.func @transform_2(%arg0: i32) -> (i32, i32) {
    %c0_i32 = arith.constant 0 : i32
    %c0_i32_0 = arith.constant 0 : i32
    %c0_i32_1 = arith.constant 0 : i32
    return %c0_i32, %c0_i32_0 : i32, i32
  }
  func.func @transform_3(%arg0: i32) -> (i32, i32) {
    %c0_i32 = arith.constant 0 : i32
    %c0_i32_0 = arith.constant 0 : i32
    %c0_i32_1 = arith.constant 0 : i32
    return %c0_i32, %c0_i32_0 : i32, i32
  }
  func.func @transform_4(%arg0: i32) -> (i32, i32) {
    %c0_i32 = arith.constant 0 : i32
    %c0_i32_0 = arith.constant 0 : i32
    return %arg0, %c0_i32 : i32, i32
  }
}

module attributes {stable_mosaic.version = 11 : i64} {
  func.func @_spatial_attn_kernel(%arg0: i32, %arg1: memref<98xf32, #tpu.memory_space<smem>>, %arg2: memref<1x2x11x11xf32, #tpu.memory_space<vmem>>, %arg3: memref<1x5x5xf32, #tpu.memory_space<vmem>>) attributes {dimension_semantics = [#tpu.dimension_semantics<parallel>], iteration_bounds = array<i64: 2>, scalar_prefetch = 0 : i64, scratch_operands = 0 : i64, tpu.core_type = #tpu.core_type<tc>, window_params = [{transform_indices = @transform_0, window_bounds = array<i64: 98>}, {transform_indices = @transform_1, window_bounds = array<i64: 1, 2, 11, 11>}, {transform_indices = @transform_2, window_bounds = array<i64: 1, 5, 5>}]} {
    %cst = arith.constant 0.000000e+00 : f32
    %0 = vector.broadcast %cst : f32 to vector<5x5xf32>
    %c0 = arith.constant 0 : index
    %c0_0 = arith.constant 0 : index
    %c0_1 = arith.constant 0 : index
    %c0_2 = arith.constant 0 : index
    %1 = vector.load %arg2[%c0, %c0_0, %c0_1, %c0_2] : memref<1x2x11x11xf32, #tpu.memory_space<vmem>>, vector<1x1x11x11xf32>
    %2 = vector.shape_cast %1 : vector<1x1x11x11xf32> to vector<11x11xf32>
    %c0_3 = arith.constant 0 : index
    %3 = memref.load %arg1[%c0_3] : memref<98xf32, #tpu.memory_space<smem>>
    %4 = vector.extract_strided_slice %2 {offsets = [0, 0], sizes = [5, 5], strides = [1, 1]} : vector<11x11xf32> to vector<5x5xf32>
    %5 = vector.broadcast %3 : f32 to vector<5x5xf32>
    %6 = arith.mulf %5, %4 : vector<5x5xf32>
    %7 = arith.addf %0, %6 : vector<5x5xf32>
    %c1 = arith.constant 1 : index
    %8 = memref.load %arg1[%c1] : memref<98xf32, #tpu.memory_space<smem>>
    %9 = vector.extract_strided_slice %2 {offsets = [0, 1], sizes = [5, 5], strides = [1, 1]} : vector<11x11xf32> to vector<5x5xf32>
    %10 = vector.broadcast %8 : f32 to vector<5x5xf32>
    %11 = arith.mulf %10, %9 : vector<5x5xf32>
    %12 = arith.addf %7, %11 : vector<5x5xf32>
    %c2 = arith.constant 2 : index
    %13 = memref.load %arg1[%c2] : memref<98xf32, #tpu.memory_space<smem>>
    %14 = vector.extract_strided_slice %2 {offsets = [0, 2], sizes = [5, 5], strides = [1, 1]} : vector<11x11xf32> to vector<5x5xf32>
    %15 = vector.broadcast %13 : f32 to vector<5x5xf32>
    %16 = arith.mulf %15, %14 : vector<5x5xf32>
    %17 = arith.addf %12, %16 : vector<5x5xf32>
    %c3 = arith.constant 3 : index
    %18 = memref.load %arg1[%c3] : memref<98xf32, #tpu.memory_space<smem>>
    %19 = vector.extract_strided_slice %2 {offsets = [0, 3], sizes = [5, 5], strides = [1, 1]} : vector<11x11xf32> to vector<5x5xf32>
    %20 = vector.broadcast %18 : f32 to vector<5x5xf32>
    %21 = arith.mulf %20, %19 : vector<5x5xf32>
    %22 = arith.addf %17, %21 : vector<5x5xf32>
    %c4 = arith.constant 4 : index
    %23 = memref.load %arg1[%c4] : memref<98xf32, #tpu.memory_space<smem>>
    %24 = vector.extract_strided_slice %2 {offsets = [0, 4], sizes = [5, 5], strides = [1, 1]} : vector<11x11xf32> to vector<5x5xf32>
    %25 = vector.broadcast %23 : f32 to vector<5x5xf32>
    %26 = arith.mulf %25, %24 : vector<5x5xf32>
    %27 = arith.addf %22, %26 : vector<5x5xf32>
    %c5 = arith.constant 5 : index
    %28 = memref.load %arg1[%c5] : memref<98xf32, #tpu.memory_space<smem>>
    %29 = vector.extract_strided_slice %2 {offsets = [0, 5], sizes = [5, 5], strides = [1, 1]} : vector<11x11xf32> to vector<5x5xf32>
    %30 = vector.broadcast %28 : f32 to vector<5x5xf32>
    %31 = arith.mulf %30, %29 : vector<5x5xf32>
    %32 = arith.addf %27, %31 : vector<5x5xf32>
    %c6 = arith.constant 6 : index
    %33 = memref.load %arg1[%c6] : memref<98xf32, #tpu.memory_space<smem>>
    %34 = vector.extract_strided_slice %2 {offsets = [0, 6], sizes = [5, 5], strides = [1, 1]} : vector<11x11xf32> to vector<5x5xf32>
    %35 = vector.broadcast %33 : f32 to vector<5x5xf32>
    %36 = arith.mulf %35, %34 : vector<5x5xf32>
    %37 = arith.addf %32, %36 : vector<5x5xf32>
    %c7 = arith.constant 7 : index
    %38 = memref.load %arg1[%c7] : memref<98xf32, #tpu.memory_space<smem>>
    %39 = vector.extract_strided_slice %2 {offsets = [1, 0], sizes = [5, 5], strides = [1, 1]} : vector<11x11xf32> to vector<5x5xf32>
    %40 = vector.broadcast %38 : f32 to vector<5x5xf32>
    %41 = arith.mulf %40, %39 : vector<5x5xf32>
    %42 = arith.addf %37, %41 : vector<5x5xf32>
    %c8 = arith.constant 8 : index
    %43 = memref.load %arg1[%c8] : memref<98xf32, #tpu.memory_space<smem>>
    %44 = vector.extract_strided_slice %2 {offsets = [1, 1], sizes = [5, 5], strides = [1, 1]} : vector<11x11xf32> to vector<5x5xf32>
    %45 = vector.broadcast %43 : f32 to vector<5x5xf32>
    %46 = arith.mulf %45, %44 : vector<5x5xf32>
    %47 = arith.addf %42, %46 : vector<5x5xf32>
    %c9 = arith.constant 9 : index
    %48 = memref.load %arg1[%c9] : memref<98xf32, #tpu.memory_space<smem>>
    %49 = vector.extract_strided_slice %2 {offsets = [1, 2], sizes = [5, 5], strides = [1, 1]} : vector<11x11xf32> to vector<5x5xf32>
    %50 = vector.broadcast %48 : f32 to vector<5x5xf32>
    %51 = arith.mulf %50, %49 : vector<5x5xf32>
    %52 = arith.addf %47, %51 : vector<5x5xf32>
    %c10 = arith.constant 10 : index
    %53 = memref.load %arg1[%c10] : memref<98xf32, #tpu.memory_space<smem>>
    %54 = vector.extract_strided_slice %2 {offsets = [1, 3], sizes = [5, 5], strides = [1, 1]} : vector<11x11xf32> to vector<5x5xf32>
    %55 = vector.broadcast %53 : f32 to vector<5x5xf32>
    %56 = arith.mulf %55, %54 : vector<5x5xf32>
    %57 = arith.addf %52, %56 : vector<5x5xf32>
    %c11 = arith.constant 11 : index
    %58 = memref.load %arg1[%c11] : memref<98xf32, #tpu.memory_space<smem>>
    %59 = vector.extract_strided_slice %2 {offsets = [1, 4], sizes = [5, 5], strides = [1, 1]} : vector<11x11xf32> to vector<5x5xf32>
    %60 = vector.broadcast %58 : f32 to vector<5x5xf32>
    %61 = arith.mulf %60, %59 : vector<5x5xf32>
    %62 = arith.addf %57, %61 : vector<5x5xf32>
    %c12 = arith.constant 12 : index
    %63 = memref.load %arg1[%c12] : memref<98xf32, #tpu.memory_space<smem>>
    %64 = vector.extract_strided_slice %2 {offsets = [1, 5], sizes = [5, 5], strides = [1, 1]} : vector<11x11xf32> to vector<5x5xf32>
    %65 = vector.broadcast %63 : f32 to vector<5x5xf32>
    %66 = arith.mulf %65, %64 : vector<5x5xf32>
    %67 = arith.addf %62, %66 : vector<5x5xf32>
    %c13 = arith.constant 13 : index
    %68 = memref.load %arg1[%c13] : memref<98xf32, #tpu.memory_space<smem>>
    %69 = vector.extract_strided_slice %2 {offsets = [1, 6], sizes = [5, 5], strides = [1, 1]} : vector<11x11xf32> to vector<5x5xf32>
    %70 = vector.broadcast %68 : f32 to vector<5x5xf32>
    %71 = arith.mulf %70, %69 : vector<5x5xf32>
    %72 = arith.addf %67, %71 : vector<5x5xf32>
    %c14 = arith.constant 14 : index
    %73 = memref.load %arg1[%c14] : memref<98xf32, #tpu.memory_space<smem>>
    %74 = vector.extract_strided_slice %2 {offsets = [2, 0], sizes = [5, 5], strides = [1, 1]} : vector<11x11xf32> to vector<5x5xf32>
    %75 = vector.broadcast %73 : f32 to vector<5x5xf32>
    %76 = arith.mulf %75, %74 : vector<5x5xf32>
    %77 = arith.addf %72, %76 : vector<5x5xf32>
    %c15 = arith.constant 15 : index
    %78 = memref.load %arg1[%c15] : memref<98xf32, #tpu.memory_space<smem>>
    %79 = vector.extract_strided_slice %2 {offsets = [2, 1], sizes = [5, 5], strides = [1, 1]} : vector<11x11xf32> to vector<5x5xf32>
    %80 = vector.broadcast %78 : f32 to vector<5x5xf32>
    %81 = arith.mulf %80, %79 : vector<5x5xf32>
    %82 = arith.addf %77, %81 : vector<5x5xf32>
    %c16 = arith.constant 16 : index
    %83 = memref.load %arg1[%c16] : memref<98xf32, #tpu.memory_space<smem>>
    %84 = vector.extract_strided_slice %2 {offsets = [2, 2], sizes = [5, 5], strides = [1, 1]} : vector<11x11xf32> to vector<5x5xf32>
    %85 = vector.broadcast %83 : f32 to vector<5x5xf32>
    %86 = arith.mulf %85, %84 : vector<5x5xf32>
    %87 = arith.addf %82, %86 : vector<5x5xf32>
    %c17 = arith.constant 17 : index
    %88 = memref.load %arg1[%c17] : memref<98xf32, #tpu.memory_space<smem>>
    %89 = vector.extract_strided_slice %2 {offsets = [2, 3], sizes = [5, 5], strides = [1, 1]} : vector<11x11xf32> to vector<5x5xf32>
    %90 = vector.broadcast %88 : f32 to vector<5x5xf32>
    %91 = arith.mulf %90, %89 : vector<5x5xf32>
    %92 = arith.addf %87, %91 : vector<5x5xf32>
    %c18 = arith.constant 18 : index
    %93 = memref.load %arg1[%c18] : memref<98xf32, #tpu.memory_space<smem>>
    %94 = vector.extract_strided_slice %2 {offsets = [2, 4], sizes = [5, 5], strides = [1, 1]} : vector<11x11xf32> to vector<5x5xf32>
    %95 = vector.broadcast %93 : f32 to vector<5x5xf32>
    %96 = arith.mulf %95, %94 : vector<5x5xf32>
    %97 = arith.addf %92, %96 : vector<5x5xf32>
    %c19 = arith.constant 19 : index
    %98 = memref.load %arg1[%c19] : memref<98xf32, #tpu.memory_space<smem>>
    %99 = vector.extract_strided_slice %2 {offsets = [2, 5], sizes = [5, 5], strides = [1, 1]} : vector<11x11xf32> to vector<5x5xf32>
    %100 = vector.broadcast %98 : f32 to vector<5x5xf32>
    %101 = arith.mulf %100, %99 : vector<5x5xf32>
    %102 = arith.addf %97, %101 : vector<5x5xf32>
    %c20 = arith.constant 20 : index
    %103 = memref.load %arg1[%c20] : memref<98xf32, #tpu.memory_space<smem>>
    %104 = vector.extract_strided_slice %2 {offsets = [2, 6], sizes = [5, 5], strides = [1, 1]} : vector<11x11xf32> to vector<5x5xf32>
    %105 = vector.broadcast %103 : f32 to vector<5x5xf32>
    %106 = arith.mulf %105, %104 : vector<5x5xf32>
    %107 = arith.addf %102, %106 : vector<5x5xf32>
    %c21 = arith.constant 21 : index
    %108 = memref.load %arg1[%c21] : memref<98xf32, #tpu.memory_space<smem>>
    %109 = vector.extract_strided_slice %2 {offsets = [3, 0], sizes = [5, 5], strides = [1, 1]} : vector<11x11xf32> to vector<5x5xf32>
    %110 = vector.broadcast %108 : f32 to vector<5x5xf32>
    %111 = arith.mulf %110, %109 : vector<5x5xf32>
    %112 = arith.addf %107, %111 : vector<5x5xf32>
    %c22 = arith.constant 22 : index
    %113 = memref.load %arg1[%c22] : memref<98xf32, #tpu.memory_space<smem>>
    %114 = vector.extract_strided_slice %2 {offsets = [3, 1], sizes = [5, 5], strides = [1, 1]} : vector<11x11xf32> to vector<5x5xf32>
    %115 = vector.broadcast %113 : f32 to vector<5x5xf32>
    %116 = arith.mulf %115, %114 : vector<5x5xf32>
    %117 = arith.addf %112, %116 : vector<5x5xf32>
    %c23 = arith.constant 23 : index
    %118 = memref.load %arg1[%c23] : memref<98xf32, #tpu.memory_space<smem>>
    %119 = vector.extract_strided_slice %2 {offsets = [3, 2], sizes = [5, 5], strides = [1, 1]} : vector<11x11xf32> to vector<5x5xf32>
    %120 = vector.broadcast %118 : f32 to vector<5x5xf32>
    %121 = arith.mulf %120, %119 : vector<5x5xf32>
    %122 = arith.addf %117, %121 : vector<5x5xf32>
    %c24 = arith.constant 24 : index
    %123 = memref.load %arg1[%c24] : memref<98xf32, #tpu.memory_space<smem>>
    %124 = vector.extract_strided_slice %2 {offsets = [3, 3], sizes = [5, 5], strides = [1, 1]} : vector<11x11xf32> to vector<5x5xf32>
    %125 = vector.broadcast %123 : f32 to vector<5x5xf32>
    %126 = arith.mulf %125, %124 : vector<5x5xf32>
    %127 = arith.addf %122, %126 : vector<5x5xf32>
    %c25 = arith.constant 25 : index
    %128 = memref.load %arg1[%c25] : memref<98xf32, #tpu.memory_space<smem>>
    %129 = vector.extract_strided_slice %2 {offsets = [3, 4], sizes = [5, 5], strides = [1, 1]} : vector<11x11xf32> to vector<5x5xf32>
    %130 = vector.broadcast %128 : f32 to vector<5x5xf32>
    %131 = arith.mulf %130, %129 : vector<5x5xf32>
    %132 = arith.addf %127, %131 : vector<5x5xf32>
    %c26 = arith.constant 26 : index
    %133 = memref.load %arg1[%c26] : memref<98xf32, #tpu.memory_space<smem>>
    %134 = vector.extract_strided_slice %2 {offsets = [3, 5], sizes = [5, 5], strides = [1, 1]} : vector<11x11xf32> to vector<5x5xf32>
    %135 = vector.broadcast %133 : f32 to vector<5x5xf32>
    %136 = arith.mulf %135, %134 : vector<5x5xf32>
    %137 = arith.addf %132, %136 : vector<5x5xf32>
    %c27 = arith.constant 27 : index
    %138 = memref.load %arg1[%c27] : memref<98xf32, #tpu.memory_space<smem>>
    %139 = vector.extract_strided_slice %2 {offsets = [3, 6], sizes = [5, 5], strides = [1, 1]} : vector<11x11xf32> to vector<5x5xf32>
    %140 = vector.broadcast %138 : f32 to vector<5x5xf32>
    %141 = arith.mulf %140, %139 : vector<5x5xf32>
    %142 = arith.addf %137, %141 : vector<5x5xf32>
    %c28 = arith.constant 28 : index
    %143 = memref.load %arg1[%c28] : memref<98xf32, #tpu.memory_space<smem>>
    %144 = vector.extract_strided_slice %2 {offsets = [4, 0], sizes = [5, 5], strides = [1, 1]} : vector<11x11xf32> to vector<5x5xf32>
    %145 = vector.broadcast %143 : f32 to vector<5x5xf32>
    %146 = arith.mulf %145, %144 : vector<5x5xf32>
    %147 = arith.addf %142, %146 : vector<5x5xf32>
    %c29 = arith.constant 29 : index
    %148 = memref.load %arg1[%c29] : memref<98xf32, #tpu.memory_space<smem>>
    %149 = vector.extract_strided_slice %2 {offsets = [4, 1], sizes = [5, 5], strides = [1, 1]} : vector<11x11xf32> to vector<5x5xf32>
    %150 = vector.broadcast %148 : f32 to vector<5x5xf32>
    %151 = arith.mulf %150, %149 : vector<5x5xf32>
    %152 = arith.addf %147, %151 : vector<5x5xf32>
    %c30 = arith.constant 30 : index
    %153 = memref.load %arg1[%c30] : memref<98xf32, #tpu.memory_space<smem>>
    %154 = vector.extract_strided_slice %2 {offsets = [4, 2], sizes = [5, 5], strides = [1, 1]} : vector<11x11xf32> to vector<5x5xf32>
    %155 = vector.broadcast %153 : f32 to vector<5x5xf32>
    %156 = arith.mulf %155, %154 : vector<5x5xf32>
    %157 = arith.addf %152, %156 : vector<5x5xf32>
    %c31 = arith.constant 31 : index
    %158 = memref.load %arg1[%c31] : memref<98xf32, #tpu.memory_space<smem>>
    %159 = vector.extract_strided_slice %2 {offsets = [4, 3], sizes = [5, 5], strides = [1, 1]} : vector<11x11xf32> to vector<5x5xf32>
    %160 = vector.broadcast %158 : f32 to vector<5x5xf32>
    %161 = arith.mulf %160, %159 : vector<5x5xf32>
    %162 = arith.addf %157, %161 : vector<5x5xf32>
    %c32 = arith.constant 32 : index
    %163 = memref.load %arg1[%c32] : memref<98xf32, #tpu.memory_space<smem>>
    %164 = vector.extract_strided_slice %2 {offsets = [4, 4], sizes = [5, 5], strides = [1, 1]} : vector<11x11xf32> to vector<5x5xf32>
    %165 = vector.broadcast %163 : f32 to vector<5x5xf32>
    %166 = arith.mulf %165, %164 : vector<5x5xf32>
    %167 = arith.addf %162, %166 : vector<5x5xf32>
    %c33 = arith.constant 33 : index
    %168 = memref.load %arg1[%c33] : memref<98xf32, #tpu.memory_space<smem>>
    %169 = vector.extract_strided_slice %2 {offsets = [4, 5], sizes = [5, 5], strides = [1, 1]} : vector<11x11xf32> to vector<5x5xf32>
    %170 = vector.broadcast %168 : f32 to vector<5x5xf32>
    %171 = arith.mulf %170, %169 : vector<5x5xf32>
    %172 = arith.addf %167, %171 : vector<5x5xf32>
    %c34 = arith.constant 34 : index
    %173 = memref.load %arg1[%c34] : memref<98xf32, #tpu.memory_space<smem>>
    %174 = vector.extract_strided_slice %2 {offsets = [4, 6], sizes = [5, 5], strides = [1, 1]} : vector<11x11xf32> to vector<5x5xf32>
    %175 = vector.broadcast %173 : f32 to vector<5x5xf32>
    %176 = arith.mulf %175, %174 : vector<5x5xf32>
    %177 = arith.addf %172, %176 : vector<5x5xf32>
    %c35 = arith.constant 35 : index
    %178 = memref.load %arg1[%c35] : memref<98xf32, #tpu.memory_space<smem>>
    %179 = vector.extract_strided_slice %2 {offsets = [5, 0], sizes = [5, 5], strides = [1, 1]} : vector<11x11xf32> to vector<5x5xf32>
    %180 = vector.broadcast %178 : f32 to vector<5x5xf32>
    %181 = arith.mulf %180, %179 : vector<5x5xf32>
    %182 = arith.addf %177, %181 : vector<5x5xf32>
    %c36 = arith.constant 36 : index
    %183 = memref.load %arg1[%c36] : memref<98xf32, #tpu.memory_space<smem>>
    %184 = vector.extract_strided_slice %2 {offsets = [5, 1], sizes = [5, 5], strides = [1, 1]} : vector<11x11xf32> to vector<5x5xf32>
    %185 = vector.broadcast %183 : f32 to vector<5x5xf32>
    %186 = arith.mulf %185, %184 : vector<5x5xf32>
    %187 = arith.addf %182, %186 : vector<5x5xf32>
    %c37 = arith.constant 37 : index
    %188 = memref.load %arg1[%c37] : memref<98xf32, #tpu.memory_space<smem>>
    %189 = vector.extract_strided_slice %2 {offsets = [5, 2], sizes = [5, 5], strides = [1, 1]} : vector<11x11xf32> to vector<5x5xf32>
    %190 = vector.broadcast %188 : f32 to vector<5x5xf32>
    %191 = arith.mulf %190, %189 : vector<5x5xf32>
    %192 = arith.addf %187, %191 : vector<5x5xf32>
    %c38 = arith.constant 38 : index
    %193 = memref.load %arg1[%c38] : memref<98xf32, #tpu.memory_space<smem>>
    %194 = vector.extract_strided_slice %2 {offsets = [5, 3], sizes = [5, 5], strides = [1, 1]} : vector<11x11xf32> to vector<5x5xf32>
    %195 = vector.broadcast %193 : f32 to vector<5x5xf32>
    %196 = arith.mulf %195, %194 : vector<5x5xf32>
    %197 = arith.addf %192, %196 : vector<5x5xf32>
    %c39 = arith.constant 39 : index
    %198 = memref.load %arg1[%c39] : memref<98xf32, #tpu.memory_space<smem>>
    %199 = vector.extract_strided_slice %2 {offsets = [5, 4], sizes = [5, 5], strides = [1, 1]} : vector<11x11xf32> to vector<5x5xf32>
    %200 = vector.broadcast %198 : f32 to vector<5x5xf32>
    %201 = arith.mulf %200, %199 : vector<5x5xf32>
    %202 = arith.addf %197, %201 : vector<5x5xf32>
    %c40 = arith.constant 40 : index
    %203 = memref.load %arg1[%c40] : memref<98xf32, #tpu.memory_space<smem>>
    %204 = vector.extract_strided_slice %2 {offsets = [5, 5], sizes = [5, 5], strides = [1, 1]} : vector<11x11xf32> to vector<5x5xf32>
    %205 = vector.broadcast %203 : f32 to vector<5x5xf32>
    %206 = arith.mulf %205, %204 : vector<5x5xf32>
    %207 = arith.addf %202, %206 : vector<5x5xf32>
    %c41 = arith.constant 41 : index
    %208 = memref.load %arg1[%c41] : memref<98xf32, #tpu.memory_space<smem>>
    %209 = vector.extract_strided_slice %2 {offsets = [5, 6], sizes = [5, 5], strides = [1, 1]} : vector<11x11xf32> to vector<5x5xf32>
    %210 = vector.broadcast %208 : f32 to vector<5x5xf32>
    %211 = arith.mulf %210, %209 : vector<5x5xf32>
    %212 = arith.addf %207, %211 : vector<5x5xf32>
    %c42 = arith.constant 42 : index
    %213 = memref.load %arg1[%c42] : memref<98xf32, #tpu.memory_space<smem>>
    %214 = vector.extract_strided_slice %2 {offsets = [6, 0], sizes = [5, 5], strides = [1, 1]} : vector<11x11xf32> to vector<5x5xf32>
    %215 = vector.broadcast %213 : f32 to vector<5x5xf32>
    %216 = arith.mulf %215, %214 : vector<5x5xf32>
    %217 = arith.addf %212, %216 : vector<5x5xf32>
    %c43 = arith.constant 43 : index
    %218 = memref.load %arg1[%c43] : memref<98xf32, #tpu.memory_space<smem>>
    %219 = vector.extract_strided_slice %2 {offsets = [6, 1], sizes = [5, 5], strides = [1, 1]} : vector<11x11xf32> to vector<5x5xf32>
    %220 = vector.broadcast %218 : f32 to vector<5x5xf32>
    %221 = arith.mulf %220, %219 : vector<5x5xf32>
    %222 = arith.addf %217, %221 : vector<5x5xf32>
    %c44 = arith.constant 44 : index
    %223 = memref.load %arg1[%c44] : memref<98xf32, #tpu.memory_space<smem>>
    %224 = vector.extract_strided_slice %2 {offsets = [6, 2], sizes = [5, 5], strides = [1, 1]} : vector<11x11xf32> to vector<5x5xf32>
    %225 = vector.broadcast %223 : f32 to vector<5x5xf32>
    %226 = arith.mulf %225, %224 : vector<5x5xf32>
    %227 = arith.addf %222, %226 : vector<5x5xf32>
    %c45 = arith.constant 45 : index
    %228 = memref.load %arg1[%c45] : memref<98xf32, #tpu.memory_space<smem>>
    %229 = vector.extract_strided_slice %2 {offsets = [6, 3], sizes = [5, 5], strides = [1, 1]} : vector<11x11xf32> to vector<5x5xf32>
    %230 = vector.broadcast %228 : f32 to vector<5x5xf32>
    %231 = arith.mulf %230, %229 : vector<5x5xf32>
    %232 = arith.addf %227, %231 : vector<5x5xf32>
    %c46 = arith.constant 46 : index
    %233 = memref.load %arg1[%c46] : memref<98xf32, #tpu.memory_space<smem>>
    %234 = vector.extract_strided_slice %2 {offsets = [6, 4], sizes = [5, 5], strides = [1, 1]} : vector<11x11xf32> to vector<5x5xf32>
    %235 = vector.broadcast %233 : f32 to vector<5x5xf32>
    %236 = arith.mulf %235, %234 : vector<5x5xf32>
    %237 = arith.addf %232, %236 : vector<5x5xf32>
    %c47 = arith.constant 47 : index
    %238 = memref.load %arg1[%c47] : memref<98xf32, #tpu.memory_space<smem>>
    %239 = vector.extract_strided_slice %2 {offsets = [6, 5], sizes = [5, 5], strides = [1, 1]} : vector<11x11xf32> to vector<5x5xf32>
    %240 = vector.broadcast %238 : f32 to vector<5x5xf32>
    %241 = arith.mulf %240, %239 : vector<5x5xf32>
    %242 = arith.addf %237, %241 : vector<5x5xf32>
    %c48 = arith.constant 48 : index
    %243 = memref.load %arg1[%c48] : memref<98xf32, #tpu.memory_space<smem>>
    %244 = vector.extract_strided_slice %2 {offsets = [6, 6], sizes = [5, 5], strides = [1, 1]} : vector<11x11xf32> to vector<5x5xf32>
    %245 = vector.broadcast %243 : f32 to vector<5x5xf32>
    %246 = arith.mulf %245, %244 : vector<5x5xf32>
    %247 = arith.addf %242, %246 : vector<5x5xf32>
    %c0_4 = arith.constant 0 : index
    %c1_5 = arith.constant 1 : index
    %c0_6 = arith.constant 0 : index
    %c0_7 = arith.constant 0 : index
    %248 = vector.load %arg2[%c0_4, %c1_5, %c0_6, %c0_7] : memref<1x2x11x11xf32, #tpu.memory_space<vmem>>, vector<1x1x11x11xf32>
    %249 = vector.shape_cast %248 : vector<1x1x11x11xf32> to vector<11x11xf32>
    %c49 = arith.constant 49 : index
    %250 = memref.load %arg1[%c49] : memref<98xf32, #tpu.memory_space<smem>>
    %251 = vector.extract_strided_slice %249 {offsets = [0, 0], sizes = [5, 5], strides = [1, 1]} : vector<11x11xf32> to vector<5x5xf32>
    %252 = vector.broadcast %250 : f32 to vector<5x5xf32>
    %253 = arith.mulf %252, %251 : vector<5x5xf32>
    %254 = arith.addf %247, %253 : vector<5x5xf32>
    %c50 = arith.constant 50 : index
    %255 = memref.load %arg1[%c50] : memref<98xf32, #tpu.memory_space<smem>>
    %256 = vector.extract_strided_slice %249 {offsets = [0, 1], sizes = [5, 5], strides = [1, 1]} : vector<11x11xf32> to vector<5x5xf32>
    %257 = vector.broadcast %255 : f32 to vector<5x5xf32>
    %258 = arith.mulf %257, %256 : vector<5x5xf32>
    %259 = arith.addf %254, %258 : vector<5x5xf32>
    %c51 = arith.constant 51 : index
    %260 = memref.load %arg1[%c51] : memref<98xf32, #tpu.memory_space<smem>>
    %261 = vector.extract_strided_slice %249 {offsets = [0, 2], sizes = [5, 5], strides = [1, 1]} : vector<11x11xf32> to vector<5x5xf32>
    %262 = vector.broadcast %260 : f32 to vector<5x5xf32>
    %263 = arith.mulf %262, %261 : vector<5x5xf32>
    %264 = arith.addf %259, %263 : vector<5x5xf32>
    %c52 = arith.constant 52 : index
    %265 = memref.load %arg1[%c52] : memref<98xf32, #tpu.memory_space<smem>>
    %266 = vector.extract_strided_slice %249 {offsets = [0, 3], sizes = [5, 5], strides = [1, 1]} : vector<11x11xf32> to vector<5x5xf32>
    %267 = vector.broadcast %265 : f32 to vector<5x5xf32>
    %268 = arith.mulf %267, %266 : vector<5x5xf32>
    %269 = arith.addf %264, %268 : vector<5x5xf32>
    %c53 = arith.constant 53 : index
    %270 = memref.load %arg1[%c53] : memref<98xf32, #tpu.memory_space<smem>>
    %271 = vector.extract_strided_slice %249 {offsets = [0, 4], sizes = [5, 5], strides = [1, 1]} : vector<11x11xf32> to vector<5x5xf32>
    %272 = vector.broadcast %270 : f32 to vector<5x5xf32>
    %273 = arith.mulf %272, %271 : vector<5x5xf32>
    %274 = arith.addf %269, %273 : vector<5x5xf32>
    %c54 = arith.constant 54 : index
    %275 = memref.load %arg1[%c54] : memref<98xf32, #tpu.memory_space<smem>>
    %276 = vector.extract_strided_slice %249 {offsets = [0, 5], sizes = [5, 5], strides = [1, 1]} : vector<11x11xf32> to vector<5x5xf32>
    %277 = vector.broadcast %275 : f32 to vector<5x5xf32>
    %278 = arith.mulf %277, %276 : vector<5x5xf32>
    %279 = arith.addf %274, %278 : vector<5x5xf32>
    %c55 = arith.constant 55 : index
    %280 = memref.load %arg1[%c55] : memref<98xf32, #tpu.memory_space<smem>>
    %281 = vector.extract_strided_slice %249 {offsets = [0, 6], sizes = [5, 5], strides = [1, 1]} : vector<11x11xf32> to vector<5x5xf32>
    %282 = vector.broadcast %280 : f32 to vector<5x5xf32>
    %283 = arith.mulf %282, %281 : vector<5x5xf32>
    %284 = arith.addf %279, %283 : vector<5x5xf32>
    %c56 = arith.constant 56 : index
    %285 = memref.load %arg1[%c56] : memref<98xf32, #tpu.memory_space<smem>>
    %286 = vector.extract_strided_slice %249 {offsets = [1, 0], sizes = [5, 5], strides = [1, 1]} : vector<11x11xf32> to vector<5x5xf32>
    %287 = vector.broadcast %285 : f32 to vector<5x5xf32>
    %288 = arith.mulf %287, %286 : vector<5x5xf32>
    %289 = arith.addf %284, %288 : vector<5x5xf32>
    %c57 = arith.constant 57 : index
    %290 = memref.load %arg1[%c57] : memref<98xf32, #tpu.memory_space<smem>>
    %291 = vector.extract_strided_slice %249 {offsets = [1, 1], sizes = [5, 5], strides = [1, 1]} : vector<11x11xf32> to vector<5x5xf32>
    %292 = vector.broadcast %290 : f32 to vector<5x5xf32>
    %293 = arith.mulf %292, %291 : vector<5x5xf32>
    %294 = arith.addf %289, %293 : vector<5x5xf32>
    %c58 = arith.constant 58 : index
    %295 = memref.load %arg1[%c58] : memref<98xf32, #tpu.memory_space<smem>>
    %296 = vector.extract_strided_slice %249 {offsets = [1, 2], sizes = [5, 5], strides = [1, 1]} : vector<11x11xf32> to vector<5x5xf32>
    %297 = vector.broadcast %295 : f32 to vector<5x5xf32>
    %298 = arith.mulf %297, %296 : vector<5x5xf32>
    %299 = arith.addf %294, %298 : vector<5x5xf32>
    %c59 = arith.constant 59 : index
    %300 = memref.load %arg1[%c59] : memref<98xf32, #tpu.memory_space<smem>>
    %301 = vector.extract_strided_slice %249 {offsets = [1, 3], sizes = [5, 5], strides = [1, 1]} : vector<11x11xf32> to vector<5x5xf32>
    %302 = vector.broadcast %300 : f32 to vector<5x5xf32>
    %303 = arith.mulf %302, %301 : vector<5x5xf32>
    %304 = arith.addf %299, %303 : vector<5x5xf32>
    %c60 = arith.constant 60 : index
    %305 = memref.load %arg1[%c60] : memref<98xf32, #tpu.memory_space<smem>>
    %306 = vector.extract_strided_slice %249 {offsets = [1, 4], sizes = [5, 5], strides = [1, 1]} : vector<11x11xf32> to vector<5x5xf32>
    %307 = vector.broadcast %305 : f32 to vector<5x5xf32>
    %308 = arith.mulf %307, %306 : vector<5x5xf32>
    %309 = arith.addf %304, %308 : vector<5x5xf32>
    %c61 = arith.constant 61 : index
    %310 = memref.load %arg1[%c61] : memref<98xf32, #tpu.memory_space<smem>>
    %311 = vector.extract_strided_slice %249 {offsets = [1, 5], sizes = [5, 5], strides = [1, 1]} : vector<11x11xf32> to vector<5x5xf32>
    %312 = vector.broadcast %310 : f32 to vector<5x5xf32>
    %313 = arith.mulf %312, %311 : vector<5x5xf32>
    %314 = arith.addf %309, %313 : vector<5x5xf32>
    %c62 = arith.constant 62 : index
    %315 = memref.load %arg1[%c62] : memref<98xf32, #tpu.memory_space<smem>>
    %316 = vector.extract_strided_slice %249 {offsets = [1, 6], sizes = [5, 5], strides = [1, 1]} : vector<11x11xf32> to vector<5x5xf32>
    %317 = vector.broadcast %315 : f32 to vector<5x5xf32>
    %318 = arith.mulf %317, %316 : vector<5x5xf32>
    %319 = arith.addf %314, %318 : vector<5x5xf32>
    %c63 = arith.constant 63 : index
    %320 = memref.load %arg1[%c63] : memref<98xf32, #tpu.memory_space<smem>>
    %321 = vector.extract_strided_slice %249 {offsets = [2, 0], sizes = [5, 5], strides = [1, 1]} : vector<11x11xf32> to vector<5x5xf32>
    %322 = vector.broadcast %320 : f32 to vector<5x5xf32>
    %323 = arith.mulf %322, %321 : vector<5x5xf32>
    %324 = arith.addf %319, %323 : vector<5x5xf32>
    %c64 = arith.constant 64 : index
    %325 = memref.load %arg1[%c64] : memref<98xf32, #tpu.memory_space<smem>>
    %326 = vector.extract_strided_slice %249 {offsets = [2, 1], sizes = [5, 5], strides = [1, 1]} : vector<11x11xf32> to vector<5x5xf32>
    %327 = vector.broadcast %325 : f32 to vector<5x5xf32>
    %328 = arith.mulf %327, %326 : vector<5x5xf32>
    %329 = arith.addf %324, %328 : vector<5x5xf32>
    %c65 = arith.constant 65 : index
    %330 = memref.load %arg1[%c65] : memref<98xf32, #tpu.memory_space<smem>>
    %331 = vector.extract_strided_slice %249 {offsets = [2, 2], sizes = [5, 5], strides = [1, 1]} : vector<11x11xf32> to vector<5x5xf32>
    %332 = vector.broadcast %330 : f32 to vector<5x5xf32>
    %333 = arith.mulf %332, %331 : vector<5x5xf32>
    %334 = arith.addf %329, %333 : vector<5x5xf32>
    %c66 = arith.constant 66 : index
    %335 = memref.load %arg1[%c66] : memref<98xf32, #tpu.memory_space<smem>>
    %336 = vector.extract_strided_slice %249 {offsets = [2, 3], sizes = [5, 5], strides = [1, 1]} : vector<11x11xf32> to vector<5x5xf32>
    %337 = vector.broadcast %335 : f32 to vector<5x5xf32>
    %338 = arith.mulf %337, %336 : vector<5x5xf32>
    %339 = arith.addf %334, %338 : vector<5x5xf32>
    %c67 = arith.constant 67 : index
    %340 = memref.load %arg1[%c67] : memref<98xf32, #tpu.memory_space<smem>>
    %341 = vector.extract_strided_slice %249 {offsets = [2, 4], sizes = [5, 5], strides = [1, 1]} : vector<11x11xf32> to vector<5x5xf32>
    %342 = vector.broadcast %340 : f32 to vector<5x5xf32>
    %343 = arith.mulf %342, %341 : vector<5x5xf32>
    %344 = arith.addf %339, %343 : vector<5x5xf32>
    %c68 = arith.constant 68 : index
    %345 = memref.load %arg1[%c68] : memref<98xf32, #tpu.memory_space<smem>>
    %346 = vector.extract_strided_slice %249 {offsets = [2, 5], sizes = [5, 5], strides = [1, 1]} : vector<11x11xf32> to vector<5x5xf32>
    %347 = vector.broadcast %345 : f32 to vector<5x5xf32>
    %348 = arith.mulf %347, %346 : vector<5x5xf32>
    %349 = arith.addf %344, %348 : vector<5x5xf32>
    %c69 = arith.constant 69 : index
    %350 = memref.load %arg1[%c69] : memref<98xf32, #tpu.memory_space<smem>>
    %351 = vector.extract_strided_slice %249 {offsets = [2, 6], sizes = [5, 5], strides = [1, 1]} : vector<11x11xf32> to vector<5x5xf32>
    %352 = vector.broadcast %350 : f32 to vector<5x5xf32>
    %353 = arith.mulf %352, %351 : vector<5x5xf32>
    %354 = arith.addf %349, %353 : vector<5x5xf32>
    %c70 = arith.constant 70 : index
    %355 = memref.load %arg1[%c70] : memref<98xf32, #tpu.memory_space<smem>>
    %356 = vector.extract_strided_slice %249 {offsets = [3, 0], sizes = [5, 5], strides = [1, 1]} : vector<11x11xf32> to vector<5x5xf32>
    %357 = vector.broadcast %355 : f32 to vector<5x5xf32>
    %358 = arith.mulf %357, %356 : vector<5x5xf32>
    %359 = arith.addf %354, %358 : vector<5x5xf32>
    %c71 = arith.constant 71 : index
    %360 = memref.load %arg1[%c71] : memref<98xf32, #tpu.memory_space<smem>>
    %361 = vector.extract_strided_slice %249 {offsets = [3, 1], sizes = [5, 5], strides = [1, 1]} : vector<11x11xf32> to vector<5x5xf32>
    %362 = vector.broadcast %360 : f32 to vector<5x5xf32>
    %363 = arith.mulf %362, %361 : vector<5x5xf32>
    %364 = arith.addf %359, %363 : vector<5x5xf32>
    %c72 = arith.constant 72 : index
    %365 = memref.load %arg1[%c72] : memref<98xf32, #tpu.memory_space<smem>>
    %366 = vector.extract_strided_slice %249 {offsets = [3, 2], sizes = [5, 5], strides = [1, 1]} : vector<11x11xf32> to vector<5x5xf32>
    %367 = vector.broadcast %365 : f32 to vector<5x5xf32>
    %368 = arith.mulf %367, %366 : vector<5x5xf32>
    %369 = arith.addf %364, %368 : vector<5x5xf32>
    %c73 = arith.constant 73 : index
    %370 = memref.load %arg1[%c73] : memref<98xf32, #tpu.memory_space<smem>>
    %371 = vector.extract_strided_slice %249 {offsets = [3, 3], sizes = [5, 5], strides = [1, 1]} : vector<11x11xf32> to vector<5x5xf32>
    %372 = vector.broadcast %370 : f32 to vector<5x5xf32>
    %373 = arith.mulf %372, %371 : vector<5x5xf32>
    %374 = arith.addf %369, %373 : vector<5x5xf32>
    %c74 = arith.constant 74 : index
    %375 = memref.load %arg1[%c74] : memref<98xf32, #tpu.memory_space<smem>>
    %376 = vector.extract_strided_slice %249 {offsets = [3, 4], sizes = [5, 5], strides = [1, 1]} : vector<11x11xf32> to vector<5x5xf32>
    %377 = vector.broadcast %375 : f32 to vector<5x5xf32>
    %378 = arith.mulf %377, %376 : vector<5x5xf32>
    %379 = arith.addf %374, %378 : vector<5x5xf32>
    %c75 = arith.constant 75 : index
    %380 = memref.load %arg1[%c75] : memref<98xf32, #tpu.memory_space<smem>>
    %381 = vector.extract_strided_slice %249 {offsets = [3, 5], sizes = [5, 5], strides = [1, 1]} : vector<11x11xf32> to vector<5x5xf32>
    %382 = vector.broadcast %380 : f32 to vector<5x5xf32>
    %383 = arith.mulf %382, %381 : vector<5x5xf32>
    %384 = arith.addf %379, %383 : vector<5x5xf32>
    %c76 = arith.constant 76 : index
    %385 = memref.load %arg1[%c76] : memref<98xf32, #tpu.memory_space<smem>>
    %386 = vector.extract_strided_slice %249 {offsets = [3, 6], sizes = [5, 5], strides = [1, 1]} : vector<11x11xf32> to vector<5x5xf32>
    %387 = vector.broadcast %385 : f32 to vector<5x5xf32>
    %388 = arith.mulf %387, %386 : vector<5x5xf32>
    %389 = arith.addf %384, %388 : vector<5x5xf32>
    %c77 = arith.constant 77 : index
    %390 = memref.load %arg1[%c77] : memref<98xf32, #tpu.memory_space<smem>>
    %391 = vector.extract_strided_slice %249 {offsets = [4, 0], sizes = [5, 5], strides = [1, 1]} : vector<11x11xf32> to vector<5x5xf32>
    %392 = vector.broadcast %390 : f32 to vector<5x5xf32>
    %393 = arith.mulf %392, %391 : vector<5x5xf32>
    %394 = arith.addf %389, %393 : vector<5x5xf32>
    %c78 = arith.constant 78 : index
    %395 = memref.load %arg1[%c78] : memref<98xf32, #tpu.memory_space<smem>>
    %396 = vector.extract_strided_slice %249 {offsets = [4, 1], sizes = [5, 5], strides = [1, 1]} : vector<11x11xf32> to vector<5x5xf32>
    %397 = vector.broadcast %395 : f32 to vector<5x5xf32>
    %398 = arith.mulf %397, %396 : vector<5x5xf32>
    %399 = arith.addf %394, %398 : vector<5x5xf32>
    %c79 = arith.constant 79 : index
    %400 = memref.load %arg1[%c79] : memref<98xf32, #tpu.memory_space<smem>>
    %401 = vector.extract_strided_slice %249 {offsets = [4, 2], sizes = [5, 5], strides = [1, 1]} : vector<11x11xf32> to vector<5x5xf32>
    %402 = vector.broadcast %400 : f32 to vector<5x5xf32>
    %403 = arith.mulf %402, %401 : vector<5x5xf32>
    %404 = arith.addf %399, %403 : vector<5x5xf32>
    %c80 = arith.constant 80 : index
    %405 = memref.load %arg1[%c80] : memref<98xf32, #tpu.memory_space<smem>>
    %406 = vector.extract_strided_slice %249 {offsets = [4, 3], sizes = [5, 5], strides = [1, 1]} : vector<11x11xf32> to vector<5x5xf32>
    %407 = vector.broadcast %405 : f32 to vector<5x5xf32>
    %408 = arith.mulf %407, %406 : vector<5x5xf32>
    %409 = arith.addf %404, %408 : vector<5x5xf32>
    %c81 = arith.constant 81 : index
    %410 = memref.load %arg1[%c81] : memref<98xf32, #tpu.memory_space<smem>>
    %411 = vector.extract_strided_slice %249 {offsets = [4, 4], sizes = [5, 5], strides = [1, 1]} : vector<11x11xf32> to vector<5x5xf32>
    %412 = vector.broadcast %410 : f32 to vector<5x5xf32>
    %413 = arith.mulf %412, %411 : vector<5x5xf32>
    %414 = arith.addf %409, %413 : vector<5x5xf32>
    %c82 = arith.constant 82 : index
    %415 = memref.load %arg1[%c82] : memref<98xf32, #tpu.memory_space<smem>>
    %416 = vector.extract_strided_slice %249 {offsets = [4, 5], sizes = [5, 5], strides = [1, 1]} : vector<11x11xf32> to vector<5x5xf32>
    %417 = vector.broadcast %415 : f32 to vector<5x5xf32>
    %418 = arith.mulf %417, %416 : vector<5x5xf32>
    %419 = arith.addf %414, %418 : vector<5x5xf32>
    %c83 = arith.constant 83 : index
    %420 = memref.load %arg1[%c83] : memref<98xf32, #tpu.memory_space<smem>>
    %421 = vector.extract_strided_slice %249 {offsets = [4, 6], sizes = [5, 5], strides = [1, 1]} : vector<11x11xf32> to vector<5x5xf32>
    %422 = vector.broadcast %420 : f32 to vector<5x5xf32>
    %423 = arith.mulf %422, %421 : vector<5x5xf32>
    %424 = arith.addf %419, %423 : vector<5x5xf32>
    %c84 = arith.constant 84 : index
    %425 = memref.load %arg1[%c84] : memref<98xf32, #tpu.memory_space<smem>>
    %426 = vector.extract_strided_slice %249 {offsets = [5, 0], sizes = [5, 5], strides = [1, 1]} : vector<11x11xf32> to vector<5x5xf32>
    %427 = vector.broadcast %425 : f32 to vector<5x5xf32>
    %428 = arith.mulf %427, %426 : vector<5x5xf32>
    %429 = arith.addf %424, %428 : vector<5x5xf32>
    %c85 = arith.constant 85 : index
    %430 = memref.load %arg1[%c85] : memref<98xf32, #tpu.memory_space<smem>>
    %431 = vector.extract_strided_slice %249 {offsets = [5, 1], sizes = [5, 5], strides = [1, 1]} : vector<11x11xf32> to vector<5x5xf32>
    %432 = vector.broadcast %430 : f32 to vector<5x5xf32>
    %433 = arith.mulf %432, %431 : vector<5x5xf32>
    %434 = arith.addf %429, %433 : vector<5x5xf32>
    %c86 = arith.constant 86 : index
    %435 = memref.load %arg1[%c86] : memref<98xf32, #tpu.memory_space<smem>>
    %436 = vector.extract_strided_slice %249 {offsets = [5, 2], sizes = [5, 5], strides = [1, 1]} : vector<11x11xf32> to vector<5x5xf32>
    %437 = vector.broadcast %435 : f32 to vector<5x5xf32>
    %438 = arith.mulf %437, %436 : vector<5x5xf32>
    %439 = arith.addf %434, %438 : vector<5x5xf32>
    %c87 = arith.constant 87 : index
    %440 = memref.load %arg1[%c87] : memref<98xf32, #tpu.memory_space<smem>>
    %441 = vector.extract_strided_slice %249 {offsets = [5, 3], sizes = [5, 5], strides = [1, 1]} : vector<11x11xf32> to vector<5x5xf32>
    %442 = vector.broadcast %440 : f32 to vector<5x5xf32>
    %443 = arith.mulf %442, %441 : vector<5x5xf32>
    %444 = arith.addf %439, %443 : vector<5x5xf32>
    %c88 = arith.constant 88 : index
    %445 = memref.load %arg1[%c88] : memref<98xf32, #tpu.memory_space<smem>>
    %446 = vector.extract_strided_slice %249 {offsets = [5, 4], sizes = [5, 5], strides = [1, 1]} : vector<11x11xf32> to vector<5x5xf32>
    %447 = vector.broadcast %445 : f32 to vector<5x5xf32>
    %448 = arith.mulf %447, %446 : vector<5x5xf32>
    %449 = arith.addf %444, %448 : vector<5x5xf32>
    %c89 = arith.constant 89 : index
    %450 = memref.load %arg1[%c89] : memref<98xf32, #tpu.memory_space<smem>>
    %451 = vector.extract_strided_slice %249 {offsets = [5, 5], sizes = [5, 5], strides = [1, 1]} : vector<11x11xf32> to vector<5x5xf32>
    %452 = vector.broadcast %450 : f32 to vector<5x5xf32>
    %453 = arith.mulf %452, %451 : vector<5x5xf32>
    %454 = arith.addf %449, %453 : vector<5x5xf32>
    %c90 = arith.constant 90 : index
    %455 = memref.load %arg1[%c90] : memref<98xf32, #tpu.memory_space<smem>>
    %456 = vector.extract_strided_slice %249 {offsets = [5, 6], sizes = [5, 5], strides = [1, 1]} : vector<11x11xf32> to vector<5x5xf32>
    %457 = vector.broadcast %455 : f32 to vector<5x5xf32>
    %458 = arith.mulf %457, %456 : vector<5x5xf32>
    %459 = arith.addf %454, %458 : vector<5x5xf32>
    %c91 = arith.constant 91 : index
    %460 = memref.load %arg1[%c91] : memref<98xf32, #tpu.memory_space<smem>>
    %461 = vector.extract_strided_slice %249 {offsets = [6, 0], sizes = [5, 5], strides = [1, 1]} : vector<11x11xf32> to vector<5x5xf32>
    %462 = vector.broadcast %460 : f32 to vector<5x5xf32>
    %463 = arith.mulf %462, %461 : vector<5x5xf32>
    %464 = arith.addf %459, %463 : vector<5x5xf32>
    %c92 = arith.constant 92 : index
    %465 = memref.load %arg1[%c92] : memref<98xf32, #tpu.memory_space<smem>>
    %466 = vector.extract_strided_slice %249 {offsets = [6, 1], sizes = [5, 5], strides = [1, 1]} : vector<11x11xf32> to vector<5x5xf32>
    %467 = vector.broadcast %465 : f32 to vector<5x5xf32>
    %468 = arith.mulf %467, %466 : vector<5x5xf32>
    %469 = arith.addf %464, %468 : vector<5x5xf32>
    %c93 = arith.constant 93 : index
    %470 = memref.load %arg1[%c93] : memref<98xf32, #tpu.memory_space<smem>>
    %471 = vector.extract_strided_slice %249 {offsets = [6, 2], sizes = [5, 5], strides = [1, 1]} : vector<11x11xf32> to vector<5x5xf32>
    %472 = vector.broadcast %470 : f32 to vector<5x5xf32>
    %473 = arith.mulf %472, %471 : vector<5x5xf32>
    %474 = arith.addf %469, %473 : vector<5x5xf32>
    %c94 = arith.constant 94 : index
    %475 = memref.load %arg1[%c94] : memref<98xf32, #tpu.memory_space<smem>>
    %476 = vector.extract_strided_slice %249 {offsets = [6, 3], sizes = [5, 5], strides = [1, 1]} : vector<11x11xf32> to vector<5x5xf32>
    %477 = vector.broadcast %475 : f32 to vector<5x5xf32>
    %478 = arith.mulf %477, %476 : vector<5x5xf32>
    %479 = arith.addf %474, %478 : vector<5x5xf32>
    %c95 = arith.constant 95 : index
    %480 = memref.load %arg1[%c95] : memref<98xf32, #tpu.memory_space<smem>>
    %481 = vector.extract_strided_slice %249 {offsets = [6, 4], sizes = [5, 5], strides = [1, 1]} : vector<11x11xf32> to vector<5x5xf32>
    %482 = vector.broadcast %480 : f32 to vector<5x5xf32>
    %483 = arith.mulf %482, %481 : vector<5x5xf32>
    %484 = arith.addf %479, %483 : vector<5x5xf32>
    %c96 = arith.constant 96 : index
    %485 = memref.load %arg1[%c96] : memref<98xf32, #tpu.memory_space<smem>>
    %486 = vector.extract_strided_slice %249 {offsets = [6, 5], sizes = [5, 5], strides = [1, 1]} : vector<11x11xf32> to vector<5x5xf32>
    %487 = vector.broadcast %485 : f32 to vector<5x5xf32>
    %488 = arith.mulf %487, %486 : vector<5x5xf32>
    %489 = arith.addf %484, %488 : vector<5x5xf32>
    %c97 = arith.constant 97 : index
    %490 = memref.load %arg1[%c97] : memref<98xf32, #tpu.memory_space<smem>>
    %491 = vector.extract_strided_slice %249 {offsets = [6, 6], sizes = [5, 5], strides = [1, 1]} : vector<11x11xf32> to vector<5x5xf32>
    %492 = vector.broadcast %490 : f32 to vector<5x5xf32>
    %493 = arith.mulf %492, %491 : vector<5x5xf32>
    %494 = arith.addf %489, %493 : vector<5x5xf32>
    %495 = arith.negf %494 : vector<5x5xf32>
    %496 = math.exp %495 : vector<5x5xf32>
    %cst_8 = arith.constant 1.000000e+00 : f32
    %497 = vector.broadcast %cst_8 : f32 to vector<5x5xf32>
    %498 = arith.addf %497, %496 : vector<5x5xf32>
    %499 = arith.divf %497, %498 : vector<5x5xf32>
    %c0_9 = arith.constant 0 : index
    %c0_10 = arith.constant 0 : index
    %c0_11 = arith.constant 0 : index
    %500 = vector.load %arg3[%c0_9, %c0_10, %c0_11] : memref<1x5x5xf32, #tpu.memory_space<vmem>>, vector<1x5x5xf32>
    %501 = vector.shape_cast %500 : vector<1x5x5xf32> to vector<5x5xf32>
    %502 = vector.shape_cast %499 : vector<5x5xf32> to vector<1x5x5xf32>
    tpu.vector_store %arg3[%c0_9, %c0_10, %c0_11], %502 {strides = array<i32>} : memref<1x5x5xf32, #tpu.memory_space<vmem>>, vector<1x5x5xf32>,
    return
  }
  func.func @transform_0(%arg0: i32) -> i32 {
    %c0_i32 = arith.constant 0 : i32
    %c0_i32_0 = arith.constant 0 : i32
    return %c0_i32 : i32
  }
  func.func @transform_1(%arg0: i32) -> (i32, i32, i32, i32) {
    %c0_i32 = arith.constant 0 : i32
    %c0_i32_0 = arith.constant 0 : i32
    %c0_i32_1 = arith.constant 0 : i32
    %c0_i32_2 = arith.constant 0 : i32
    return %arg0, %c0_i32, %c0_i32_0, %c0_i32_1 : i32, i32, i32, i32
  }
  func.func @transform_2(%arg0: i32) -> (i32, i32, i32) {
    %c0_i32 = arith.constant 0 : i32
    %c0_i32_0 = arith.constant 0 : i32
    %c0_i32_1 = arith.constant 0 : i32
    return %arg0, %c0_i32, %c0_i32_0 : i32, i32, i32
  }
}

</mosaic_0001>

<llo_original>
// kernel: srm_pixel_attention.6
$region0: #{srm_pixel_attention.6}
  #allocation0 [shape = 'u32[]', space=smem, size = 0x4, offset = 0x4, fixed_abs, tag = 'smem constant byte address 0x4 - core index']
  #allocation1 [shape = 'u32[144,128]{1,0:T(1,128)}', space=vmem, size = 0x12000, scoped, tag = 'internal scratch']
  %s0 = inlined_call_operand.vmem [shape: bf16[128,36], index: 0, kind: input, shape index: {}]
  %s1 = inlined_call_operand.vmem [shape: bf16[36,128], index: 1, kind: input, shape index: {}]
  %s2 = inlined_call_operand.vmem [shape: f32[1,128], index: 2, kind: input, shape index: {}]
  %s3 = inlined_call_operand.vmem [shape: f32[1,128], index: 3, kind: input, shape index: {}]
  %s4 = inlined_call_operand.vmem [shape: bf16[128,32], index: 4, kind: output, shape index: {}]
  %s5 = sld [smem:[#allocation0]]
  $region49: #{srm_pixel_attention.6} parent=0
    _
  %s7 = ssub.s32 1, %s5
  %s8 = scalar_select 0, %s7, %s5
  loop: start=0, step=1, limit=6
  $region2: #{srm_pixel_attention.6} parent=0 // loop_pre_header
    _
  $region3: #{srm_pixel_attention.6} parent=0 // loop_header
    %s10 = sphi 0, %s14
    %p11 = scmp.ge.s32.totalorder %s10, 6
    %s20 = sphi 0, %s22
    %s23 = sphi 0, %s20
    %s24 = sphi 0, %s23
    %s40 = sphi 0, %s24
    %s44 = sphi 0, %s44
    %s46 = sphi 0, %s44
    %s47 = sphi 0, %s46
    %s61 = sphi 0, %s47
    %s65 = sphi 0, %s65
    %s67 = sphi 0, %s65
    %s68 = sphi 0, %s67
    %s82 = sphi 0, %s68
    %s86 = sphi 0, %s86
    %s88 = sphi 0, %s86
    %s89 = sphi 0, %s88
    %s103 = sphi 0, %s89
    %s109 = sphi 0, %s111
    %s112 = sphi 0, %s109
    %s113 = sphi 0, %s112
    %s129 = sphi 0, %s113
  $region4: #{srm_pixel_attention.6} parent=0 // loop_header_branch
    %13 = sbr.rel (%p11) target = $region8
  $region5: #{srm_pixel_attention.6} parent=0 // loop_body
    %s15 = ssub.s32 %s10, 1
    %s16 = ssub.s32 %s10, 2
    %s17 = sadd.s32 %s10, 1
    %s18 = ssub.s32 %s10, %s17
    %p19 = scmp.eq.s32.totalorder %s18, 0
    %s21 = sadd.s32 %s20, 1
    %s22 = scalar_select %p19, %s20, %s21
    %p25 = pneg %p19
    %p26 = scmp.eq.s32.totalorder %s10, 3
    %p27 = por %p25, %p26
    %p28 = scmp.ne.s32.totalorder %s20, %s23
    %p29 = scmp.eq.s32.totalorder %s10, 0
    %p30 = por %p28, %p29
    %p31 = scmp.ne.s32.totalorder %s20, %s23
    %p32 = scmp.eq.s32.totalorder %s15, 3
    %p33 = por %p31, %p32
    %p34 = scmp.ne.s32.totalorder %s23, %s24
    %p35 = scmp.eq.s32.totalorder %s15, 0
    %p36 = por %p34, %p35
    %p37 = scmp.ne.s32.totalorder %s23, %s24
    %p38 = scmp.eq.s32.totalorder %s16, 3
    %p39 = por %p37, %p38
    %p41 = scmp.ne.s32.totalorder %s24, %s40
    %p42 = scmp.eq.s32.totalorder %s16, 0
    %p43 = por %p41, %p42
    %s45 = sadd.s32 %s44, 1
    %p48 = scmp.eq.s32.totalorder %s10, 3
    %p49 = scmp.ne.s32.totalorder %s44, %s46
    %p50 = scmp.eq.s32.totalorder %s10, 0
    %p51 = por %p49, %p50
    %p52 = scmp.ne.s32.totalorder %s44, %s46
    %p53 = scmp.eq.s32.totalorder %s15, 3
    %p54 = por %p52, %p53
    %p55 = scmp.ne.s32.totalorder %s46, %s47
    %p56 = scmp.eq.s32.totalorder %s15, 0
    %p57 = por %p55, %p56
    %p58 = scmp.ne.s32.totalorder %s46, %s47
    %p59 = scmp.eq.s32.totalorder %s16, 3
    %p60 = por %p58, %p59
    %p62 = scmp.ne.s32.totalorder %s47, %s61
    %p63 = scmp.eq.s32.totalorder %s16, 0
    %p64 = por %p62, %p63
    %s66 = sadd.s32 %s65, 1
    %p69 = scmp.eq.s32.totalorder %s10, 3
    %p70 = scmp.ne.s32.totalorder %s65, %s67
    %p71 = scmp.eq.s32.totalorder %s10, 0
    %p72 = por %p70, %p71
    %p73 = scmp.ne.s32.totalorder %s65, %s67
    %p74 = scmp.eq.s32.totalorder %s15, 3
    %p75 = por %p73, %p74
    %p76 = scmp.ne.s32.totalorder %s67, %s68
    %p77 = scmp.eq.s32.totalorder %s15, 0
    %p78 = por %p76, %p77
    %p79 = scmp.ne.s32.totalorder %s67, %s68
    %p80 = scmp.eq.s32.totalorder %s16, 3
    %p81 = por %p79, %p80
    %p83 = scmp.ne.s32.totalorder %s68, %s82
    %p84 = scmp.eq.s32.totalorder %s16, 0
    %p85 = por %p83, %p84
    %s87 = sadd.s32 %s86, 1
    %p90 = scmp.eq.s32.totalorder %s10, 3
    %p91 = scmp.ne.s32.totalorder %s86, %s88
    %p92 = scmp.eq.s32.totalorder %s10, 0
    %p93 = por %p91, %p92
    %p94 = scmp.ne.s32.totalorder %s86, %s88
    %p95 = scmp.eq.s32.totalorder %s15, 3
    %p96 = por %p94, %p95
    %p97 = scmp.ne.s32.totalorder %s88, %s89
    %p98 = scmp.eq.s32.totalorder %s15, 0
    %p99 = por %p97, %p98
    %p100 = scmp.ne.s32.totalorder %s88, %s89
    %p101 = scmp.eq.s32.totalorder %s16, 3
    %p102 = por %p100, %p101
    %p104 = scmp.ne.s32.totalorder %s89, %s103
    %p105 = scmp.eq.s32.totalorder %s16, 0
    %p106 = por %p104, %p105
    %s107 = ssub.s32 %s10, %s17
    %p108 = scmp.eq.s32.totalorder %s107, 0
    %s110 = sadd.s32 %s109, 1
    %s111 = scalar_select %p108, %s109, %s110
    %p114 = pneg %p108
    %p115 = scmp.eq.s32.totalorder %s10, 3
    %p116 = por %p114, %p115
    %p117 = scmp.ne.s32.totalorder %s109, %s112
    %p118 = scmp.eq.s32.totalorder %s10, 0
    %p119 = por %p117, %p118
    %p120 = scmp.ne.s32.totalorder %s109, %s112
    %p121 = scmp.eq.s32.totalorder %s15, 3
    %p122 = por %p120, %p121
    %p123 = scmp.ne.s32.totalorder %s112, %s113
    %p124 = scmp.eq.s32.totalorder %s15, 0
    %p125 = por %p123, %p124
    %p126 = scmp.ne.s32.totalorder %s112, %s113
    %p127 = scmp.eq.s32.totalorder %s16, 3
    %p128 = por %p126, %p127
    %p130 = scmp.ne.s32.totalorder %s113, %s129
    %p131 = scmp.eq.s32.totalorder %s16, 0
    %p132 = por %p130, %p131
    %p133 = scmp.le.s32.totalorder 1, %s10
    %p134 = scmp.lt.s32.totalorder %s10, 5
    %p135 = pnand %p133, %p134
    %p136 = pneg %p135
    // Predicated region
    $region9: #{srm_pixel_attention.6} parent=5 // pred_check
      _
    $region10: #{srm_pixel_attention.6} parent=5 // pred_check_branch
      %138 = sbr.rel (%p135) target = $region12
    $region11: #{srm_pixel_attention.6} parent=5 // pred_region
      %s139 = ssub.s32 %s10, 1
      // Predicated region
      $region13: #{srm_pixel_attention.6} parent=11 // pred_check
        %p140 = pneg %p57
      $region14: #{srm_pixel_attention.6} parent=11 // pred_check_branch
        %142 = sbr.rel (%p140) target = $region16
      $region15: #{srm_pixel_attention.6} parent=11 // pred_region
        _
      $region16: #{srm_pixel_attention.6} parent=11 // pred_fallthru
        _
      // Predicated region
      $region17: #{srm_pixel_attention.6} parent=11 // pred_check
        %p143 = pneg %p78
      $region18: #{srm_pixel_attention.6} parent=11 // pred_check_branch
        %145 = sbr.rel (%p143) target = $region20
      $region19: #{srm_pixel_attention.6} parent=11 // pred_region
        _
      $region20: #{srm_pixel_attention.6} parent=11 // pred_fallthru
        _
      // Predicated region
      $region21: #{srm_pixel_attention.6} parent=11 // pred_check
        %p146 = pneg %p99
      $region22: #{srm_pixel_attention.6} parent=11 // pred_check_branch
        %148 = sbr.rel (%p146) target = $region24
      $region23: #{srm_pixel_attention.6} parent=11 // pred_region
        _
      $region24: #{srm_pixel_attention.6} parent=11 // pred_fallthru
        _
    $region12: #{srm_pixel_attention.6} parent=5 // pred_fallthru
      _
    %p149 = scmp.lt.s32.totalorder %s10, 4
    // Predicated region
    $region25: #{srm_pixel_attention.6} parent=5 // pred_check
      %p150 = pneg %p149
    $region26: #{srm_pixel_attention.6} parent=5 // pred_check_branch
      %152 = sbr.rel (%p150) target = $region28
    $region27: #{srm_pixel_attention.6} parent=5 // pred_region
      // Predicated region
      $region29: #{srm_pixel_attention.6} parent=27 // pred_check
        %p153 = pneg %p30
      $region30: #{srm_pixel_attention.6} parent=27 // pred_check_branch
        %155 = sbr.rel (%p153) target = $region32
      $region31: #{srm_pixel_attention.6} parent=27 // pred_region
        %s156 = smul.u32 4, %s10
        %p157 = scmp.lt.s32.totalorder %s156, 15
        %s158 = scalar_select %p157, %s156, 15
        %s159 = smul.addr %s158, 4
        %s160 = scalar_lea.vmem %s0, %s159
        %s161 = smul.u32 4, %s10
      $region32: #{srm_pixel_attention.6} parent=27 // pred_fallthru
        _
    $region28: #{srm_pixel_attention.6} parent=5 // pred_fallthru
      _
    %p162 = scmp.le.s32.totalorder 1, %s10
    %p163 = scmp.lt.s32.totalorder %s10, 5
    %p164 = pnand %p162, %p163
    %p165 = pneg %p164
    // Predicated region
    $region33: #{srm_pixel_attention.6} parent=5 // pred_check
      _
    $region34: #{srm_pixel_attention.6} parent=5 // pred_check_branch
      %167 = sbr.rel (%p164) target = $region36
    $region35: #{srm_pixel_attention.6} parent=5 // pred_region
      %s168 = ssub.s32 %s10, 1
      %s169 = smul.u32 4, %s15
      %p170 = scmp.lt.s32.totalorder %s169, 15
      %s171 = scalar_select %p170, %s169, 15
      %s172 = smul.addr %s171, 4
      %s173 = scalar_lea.vmem %s0, %s172
      %p174 = pneg %p36
      %p175 = pneg %p33
      %p176 = pneg %p57
      %p177 = pneg %p54
      %p178 = pneg %p78
      %p179 = pneg %p75
      %p180 = pneg %p99
      %p181 = pneg %p96
      %p182 = pneg %p125
      %p183 = pneg %p122
      %s184 = smul.u32 4, %s15
      %p185 = scmp.lt.s32.totalorder %s184, 15
      %s186 = scalar_select %p185, %s184, 15
      %s187 = smul.addr %s186, 4
      %s188 = scalar_lea.vmem %s4, %s187
      %s189 = smul.u32 4, %s15
      %p190 = scmp.lt.s32.totalorder %s189, 15
      %s191 = scalar_select %p190, %s189, 15
      %s192 = smul.addr %s191, 4
      %s193 = scalar_lea.vmem %s0, %s192
      %s194 = smul.u32 4, %s15
      %s195 = smul.u32 4, %s15
      %p196 = scmp.lt.s32.totalorder %s195, 15
      %s197 = scalar_select %p196, %s195, 15
      %s198 = smul.addr %s197, 4
      %s199 = scalar_lea.vmem %s4, %s198
      %s200 = smul.u32 4, %s15
      %v202 = vld [vmem:[%s193] sm:$0xf]
      %v203 = vld [vmem:[%s193 + $0x4] sm:$0xf]
      %v204 = vld [vmem:[%s193 + $0x8] sm:$0xf]
      %v205 = vld [vmem:[%s193 + $0xc] sm:$0xf]
      %v206 = vld [vmem:[%s1] sm:$0xf]
      %v207 = vld [vmem:[%s1 + $0x4] sm:$0xf]
      %v208 = vld [vmem:[%s1 + $0x8] sm:$0xf]
      %v209 = vld [vmem:[%s1 + $0xc] sm:$0xf]
      %v210 = vld [vmem:[%s1 + $0x10] sm:$0x3]
      %v215 = vunpack.c.l.b16 %v202
      %v216 = vunpack.c.l.b16 %v203
      %v217 = vunpack.c.l.b16 %v204
      %v218 = vunpack.c.l.b16 %v205
      %v219 = vpack.c.b16 %v216, %v215
      %v220 = vpack.c.b16 %v218, %v217
      %v226 = vunpack.c.l.b16 %v206
      %v227 = vunpack.c.l.b16 %v207
      %v228 = vunpack.c.l.b16 %v208
      %v229 = vunpack.c.l.b16 %v209
      %v230 = vunpack.c.l.b16 %v210
      %v231 = vpack.c.b16 %v227, %v226
      %v232 = vpack.c.b16 %v229, %v228
      %v233 = vpack.c.b16 %v230, %v230
      %vm236 = vcmask 293888
      %v238 = vsel %vm236, %v219, 0
      %v241 = vsel %vm236, %v220, 0
      %vm243 = vcmask 1041408
      %v245 = vsel %vm243, %v233, 0
      %247 = vmatprep.subr.bf16.mxu0 0
      %248 = vmatpush1.bf16.msra.mxu0 %v231
      %249 = vmatprep.subr.bf16.mxu0 0
      %250 = vmatpush1.bf16.msra.mxu0 %v232
      %251 = vmatprep.subr.bf16.mxu0 0
      %252 = vmatpush1.bf16.msra.mxu0 %v245
      %253 = vmatprep.subr.bf16.mxu0 0
      %254 = vmatpush1.bf16.msra.mxu0 0
      %255 = vmatprep.subr.bf16.mxu0 0
      %256 = vmatpush1.bf16.msra.mxu0 0
      %257 = vmatprep.subr.bf16.mxu0 0
      %258 = vmatpush1.bf16.msra.mxu0 0
      %259 = vmatprep.subr.bf16.mxu0 0
      %260 = vmatpush1.bf16.msra.mxu0 0
      %261 = vmatprep.subr.bf16.mxu0 0
      %262 = vmatpush1.bf16.msra.mxu0 0
      %263 = vmatprep.subr.bf16.mxu0 0
      %264 = vmatpush1.bf16.msra.mxu0 0
      %265 = vmatprep.subr.bf16.mxu0 0
      %266 = vmatpush1.bf16.msra.mxu0 0
      %267 = vmatprep.subr.bf16.mxu0 0
      %268 = vmatpush1.bf16.msra.mxu0 0
      %269 = vmatprep.subr.bf16.mxu0 0
      %270 = vmatpush1.bf16.msra.mxu0 0
      %271 = vmatprep.subr.bf16.mxu0 0
      %272 = vmatpush1.bf16.msra.mxu0 0
      %273 = vmatprep.subr.bf16.mxu0 0
      %274 = vmatpush1.bf16.msra.mxu0 0
      %275 = vmatprep.subr.bf16.mxu0 0
      %276 = vmatpush1.bf16.msra.mxu0 0
      %277 = vmatprep.subr.bf16.mxu0 0
      %278 = vmatpush1.bf16.msra.mxu0 0
      %279 = vmatprep.mubr.bf16.mxu0 0
      %280 = vmatmul.mubr.bf16.gmra.mrb[0].mxu0 %v238
      %v281 = vpop.f32.mrb[0].mxu0
      %v282 = vadd.f32 0.0, %v281
      %v283 = vpop.f32.mrb[0].mxu0
      %v284 = vpop.f32.mrb[0].mxu0
      %v285 = vadd.f32 0.0, %v284
      %v286 = vpop.f32.mrb[0].mxu0
      %287 = vmatprep.mubr.bf16.mxu0 0
      %288 = vmatmul.mubr.bf16.gmra.mrb[0].mxu0 %v241
      %v289 = vpop.f32.mrb[0].mxu0
      %v290 = vadd.f32 0.0, %v289
      %v291 = vpop.f32.mrb[0].mxu0
      %v292 = vpop.f32.mrb[0].mxu0
      %v293 = vadd.f32 0.0, %v292
      %v294 = vpop.f32.mrb[0].mxu0
      %295 = vdwg.mxu0
      %v296 = vld [vmem:[%s2] sm:$0x1]
      %v298 = vlaneseq
      %v299 = vshrl.u32 %v298, 7
      %v300 = vsub.s32 0, %v299
      %v301 = vrot.slane %v296, %v300
      %v303 = vmul.f32 %v282, %v301
      %v304 = vmul.f32 %v285, %v301
      %v305 = vmul.f32 %v290, %v301
      %v306 = vmul.f32 %v293, %v301
      %v307 = vld [vmem:[%s3] sm:$0x1]
      %v309 = vlaneseq
      %v310 = vshrl.u32 %v309, 7
      %v311 = vsub.s32 0, %v310
      %v312 = vrot.slane %v307, %v311
      %v314 = vadd.f32 %v303, %v312
      %v315 = vadd.f32 %v304, %v312
      %v316 = vadd.f32 %v305, %v312
      %v317 = vadd.f32 %v306, %v312
      %v318 = vmax.f32 %v314, 0.0
      %v319 = vmax.f32 %v315, 0.0
      %v320 = vmax.f32 %v316, 0.0
      %v321 = vmax.f32 %v317, 0.0
      %v322 = vpack.c.bf16 %v319, %v318
      %v323 = vpack.c.bf16 %v321, %v320
      %v326 = vunpack.c.l.b16 %v322
      %v327 = vunpack.c.h.b16 %v322
      %v328 = vunpack.c.l.b16 %v323
      %v329 = vunpack.c.h.b16 %v323
      %v330 = vpack.c.b16 %v326, %v326
      %v331 = vpack.c.b16 %v327, %v327
      %v332 = vpack.c.b16 %v328, %v328
      %v333 = vpack.c.b16 %v329, %v329
      %vm338 = vcmask 257024
      %339 = vst.msk [vmem:[%s199] sm:$0xf] %vm338, %v330
      %340 = vst.msk [vmem:[%s199 + $0x4] sm:$0xf] %vm338, %v331
      %341 = vst.msk [vmem:[%s199 + $0x8] sm:$0xf] %vm338, %v332
      %342 = vst.msk [vmem:[%s199 + $0xc] sm:$0xf] %vm338, %v333
      %s343 = smul.u32 4, %s15
      %p344 = scmp.lt.s32.totalorder %s343, 15
      %s345 = scalar_select %p344, %s343, 15
      %s346 = smul.addr %s345, 4
      %s347 = scalar_lea.vmem %s4, %s346
      // Predicated region
      $region37: #{srm_pixel_attention.6} parent=35 // pred_check
        %p348 = pneg %p122
      $region38: #{srm_pixel_attention.6} parent=35 // pred_check_branch
        %350 = sbr.rel (%p348) target = $region40
      $region39: #{srm_pixel_attention.6} parent=35 // pred_region
        %s351 = smul.u32 4, %s15
      $region40: #{srm_pixel_attention.6} parent=35 // pred_fallthru
        _
    $region36: #{srm_pixel_attention.6} parent=5 // pred_fallthru
      _
    %p352 = scmp.le.s32.totalorder 2, %s10
    // Predicated region
    $region41: #{srm_pixel_attention.6} parent=5 // pred_check
      %p353 = pneg %p352
    $region42: #{srm_pixel_attention.6} parent=5 // pred_check_branch
      %355 = sbr.rel (%p353) target = $region44
    $region43: #{srm_pixel_attention.6} parent=5 // pred_region
      %s356 = ssub.s32 %s10, 2
      // Predicated region
      $region45: #{srm_pixel_attention.6} parent=43 // pred_check
        %p357 = pneg %p128
      $region46: #{srm_pixel_attention.6} parent=43 // pred_check_branch
        %359 = sbr.rel (%p357) target = $region48
      $region47: #{srm_pixel_attention.6} parent=43 // pred_region
        %s360 = smul.u32 4, %s16
        %p361 = scmp.lt.s32.totalorder %s360, 15
        %s362 = scalar_select %p361, %s360, 15
        %s363 = smul.addr %s362, 4
        %s364 = scalar_lea.vmem %s4, %s363
      $region48: #{srm_pixel_attention.6} parent=43 // pred_fallthru
        _
    $region44: #{srm_pixel_attention.6} parent=5 // pred_fallthru
      _
  $region6: #{srm_pixel_attention.6} parent=0 // loop_footer
    %s14 = sadd.s32 1, %s10
  $region7: #{srm_pixel_attention.6} parent=0 // loop_footer_branch
    %9 = sbr.rel target = $region3
  $region8: #{srm_pixel_attention.6} parent=0 // loop_exit
    _

// kernel: srm_pixel_attention.5
$region0: #{srm_pixel_attention.5}
  #allocation0 [shape = 'u32[]', space=smem, size = 0x4, offset = 0x4, fixed_abs, tag = 'smem constant byte address 0x4 - core index']
  #allocation1 [shape = 'u32[144,128]{1,0:T(1,128)}', space=vmem, size = 0x12000, scoped, tag = 'internal scratch']
  %s0 = inlined_call_operand.vmem [shape: bf16[128,36], index: 0, kind: input, shape index: {}]
  %s1 = inlined_call_operand.vmem [shape: bf16[36,128], index: 1, kind: input, shape index: {}]
  %s2 = inlined_call_operand.vmem [shape: f32[8,128], index: 2, kind: output, shape index: {}]
  %s3 = sld [smem:[#allocation0]]
  $region45: #{srm_pixel_attention.5} parent=0
    _
  %s5 = ssub.s32 1, %s3
  %s6 = scalar_select 0, %s5, %s3
  loop: start=0, step=1, limit=6
  $region2: #{srm_pixel_attention.5} parent=0 // loop_pre_header
    _
  $region3: #{srm_pixel_attention.5} parent=0 // loop_header
    %s8 = sphi 0, %s12
    %p9 = scmp.ge.s32.totalorder %s8, 6
    %s18 = sphi 0, %s20
    %s21 = sphi 0, %s18
    %s22 = sphi 0, %s21
    %s38 = sphi 0, %s22
    %s42 = sphi 0, %s42
    %s44 = sphi 0, %s42
    %s45 = sphi 0, %s44
    %s59 = sphi 0, %s45
    %s63 = sphi 0, %s63
    %s65 = sphi 0, %s63
    %s66 = sphi 0, %s65
    %s80 = sphi 0, %s66
  $region4: #{srm_pixel_attention.5} parent=0 // loop_header_branch
    %11 = sbr.rel (%p9) target = $region8
  $region5: #{srm_pixel_attention.5} parent=0 // loop_body
    %s13 = ssub.s32 %s8, 1
    %s14 = ssub.s32 %s8, 2
    %s15 = sadd.s32 %s8, 1
    %s16 = ssub.s32 %s8, %s15
    %p17 = scmp.eq.s32.totalorder %s16, 0
    %s19 = sadd.s32 %s18, 1
    %s20 = scalar_select %p17, %s18, %s19
    %p23 = pneg %p17
    %p24 = scmp.eq.s32.totalorder %s8, 3
    %p25 = por %p23, %p24
    %p26 = scmp.ne.s32.totalorder %s18, %s21
    %p27 = scmp.eq.s32.totalorder %s8, 0
    %p28 = por %p26, %p27
    %p29 = scmp.ne.s32.totalorder %s18, %s21
    %p30 = scmp.eq.s32.totalorder %s13, 3
    %p31 = por %p29, %p30
    %p32 = scmp.ne.s32.totalorder %s21, %s22
    %p33 = scmp.eq.s32.totalorder %s13, 0
    %p34 = por %p32, %p33
    %p35 = scmp.ne.s32.totalorder %s21, %s22
    %p36 = scmp.eq.s32.totalorder %s14, 3
    %p37 = por %p35, %p36
    %p39 = scmp.ne.s32.totalorder %s22, %s38
    %p40 = scmp.eq.s32.totalorder %s14, 0
    %p41 = por %p39, %p40
    %s43 = sadd.s32 %s42, 1
    %p46 = scmp.eq.s32.totalorder %s8, 3
    %p47 = scmp.ne.s32.totalorder %s42, %s44
    %p48 = scmp.eq.s32.totalorder %s8, 0
    %p49 = por %p47, %p48
    %p50 = scmp.ne.s32.totalorder %s42, %s44
    %p51 = scmp.eq.s32.totalorder %s13, 3
    %p52 = por %p50, %p51
    %p53 = scmp.ne.s32.totalorder %s44, %s45
    %p54 = scmp.eq.s32.totalorder %s13, 0
    %p55 = por %p53, %p54
    %p56 = scmp.ne.s32.totalorder %s44, %s45
    %p57 = scmp.eq.s32.totalorder %s14, 3
    %p58 = por %p56, %p57
    %p60 = scmp.ne.s32.totalorder %s45, %s59
    %p61 = scmp.eq.s32.totalorder %s14, 0
    %p62 = por %p60, %p61
    %s64 = sadd.s32 %s63, 1
    %p67 = scmp.eq.s32.totalorder %s8, 3
    %p68 = scmp.ne.s32.totalorder %s63, %s65
    %p69 = scmp.eq.s32.totalorder %s8, 0
    %p70 = por %p68, %p69
    %p71 = scmp.ne.s32.totalorder %s63, %s65
    %p72 = scmp.eq.s32.totalorder %s13, 3
    %p73 = por %p71, %p72
    %p74 = scmp.ne.s32.totalorder %s65, %s66
    %p75 = scmp.eq.s32.totalorder %s13, 0
    %p76 = por %p74, %p75
    %p77 = scmp.ne.s32.totalorder %s65, %s66
    %p78 = scmp.eq.s32.totalorder %s14, 3
    %p79 = por %p77, %p78
    %p81 = scmp.ne.s32.totalorder %s66, %s80
    %p82 = scmp.eq.s32.totalorder %s14, 0
    %p83 = por %p81, %p82
    %p84 = scmp.le.s32.totalorder 1, %s8
    %p85 = scmp.lt.s32.totalorder %s8, 5
    %p86 = pnand %p84, %p85
    %p87 = pneg %p86
    // Predicated region
    $region9: #{srm_pixel_attention.5} parent=5 // pred_check
      _
    $region10: #{srm_pixel_attention.5} parent=5 // pred_check_branch
      %89 = sbr.rel (%p86) target = $region12
    $region11: #{srm_pixel_attention.5} parent=5 // pred_region
      %s90 = ssub.s32 %s8, 1
      // Predicated region
      $region13: #{srm_pixel_attention.5} parent=11 // pred_check
        %p91 = pneg %p55
      $region14: #{srm_pixel_attention.5} parent=11 // pred_check_branch
        %93 = sbr.rel (%p91) target = $region16
      $region15: #{srm_pixel_attention.5} parent=11 // pred_region
        _
      $region16: #{srm_pixel_attention.5} parent=11 // pred_fallthru
        _
    $region12: #{srm_pixel_attention.5} parent=5 // pred_fallthru
      _
    %p94 = scmp.lt.s32.totalorder %s8, 4
    // Predicated region
    $region17: #{srm_pixel_attention.5} parent=5 // pred_check
      %p95 = pneg %p94
    $region18: #{srm_pixel_attention.5} parent=5 // pred_check_branch
      %97 = sbr.rel (%p95) target = $region20
    $region19: #{srm_pixel_attention.5} parent=5 // pred_region
      // Predicated region
      $region21: #{srm_pixel_attention.5} parent=19 // pred_check
        %p98 = pneg %p28
      $region22: #{srm_pixel_attention.5} parent=19 // pred_check_branch
        %100 = sbr.rel (%p98) target = $region24
      $region23: #{srm_pixel_attention.5} parent=19 // pred_region
        %s101 = smul.u32 4, %s8
        %p102 = scmp.lt.s32.totalorder %s101, 15
        %s103 = scalar_select %p102, %s101, 15
        %s104 = smul.addr %s103, 4
        %s105 = scalar_lea.vmem %s0, %s104
        %s106 = smul.u32 4, %s8
      $region24: #{srm_pixel_attention.5} parent=19 // pred_fallthru
        _
    $region20: #{srm_pixel_attention.5} parent=5 // pred_fallthru
      _
    %p107 = scmp.le.s32.totalorder 1, %s8
    %p108 = scmp.lt.s32.totalorder %s8, 5
    %p109 = pnand %p107, %p108
    %p110 = pneg %p109
    // Predicated region
    $region25: #{srm_pixel_attention.5} parent=5 // pred_check
      _
    $region26: #{srm_pixel_attention.5} parent=5 // pred_check_branch
      %112 = sbr.rel (%p109) target = $region28
    $region27: #{srm_pixel_attention.5} parent=5 // pred_region
      %s113 = ssub.s32 %s8, 1
      %s114 = smul.u32 4, %s13
      %p115 = scmp.lt.s32.totalorder %s114, 15
      %s116 = scalar_select %p115, %s114, 15
      %s117 = smul.addr %s116, 4
      %s118 = scalar_lea.vmem %s0, %s117
      %p119 = pneg %p34
      %p120 = pneg %p31
      %p121 = pneg %p55
      %p122 = pneg %p52
      %p123 = pneg %p76
      %p124 = pneg %p73
      %s125 = smul.u32 4, %s13
      %p126 = scmp.lt.s32.totalorder %s125, 15
      %s127 = scalar_select %p126, %s125, 15
      %s128 = smul.addr %s127, 4
      %s129 = scalar_lea.vmem %s0, %s128
      %s130 = smul.u32 4, %s13
      %p132 = scmp.eq.s32.totalorder %s13, 0
      // Predicated region
      $region29: #{srm_pixel_attention.5} parent=27 // pred_check
        %p133 = pneg %p132
      $region30: #{srm_pixel_attention.5} parent=27 // pred_check_branch
        %135 = sbr.rel (%p133) target = $region32
      $region31: #{srm_pixel_attention.5} parent=27 // pred_region
        %136 = vst [vmem:[%s2] sm:$0xff] 0.0
      $region32: #{srm_pixel_attention.5} parent=27 // pred_fallthru
        _
      %v137 = vld [vmem:[%s129] sm:$0xf]
      %v138 = vld [vmem:[%s129 + $0x4] sm:$0xf]
      %v139 = vld [vmem:[%s129 + $0x8] sm:$0xf]
      %v140 = vld [vmem:[%s129 + $0xc] sm:$0xf]
      %v141 = vld [vmem:[%s1] sm:$0xf]
      %v142 = vld [vmem:[%s1 + $0x4] sm:$0xf]
      %v143 = vld [vmem:[%s1 + $0x8] sm:$0xf]
      %v144 = vld [vmem:[%s1 + $0xc] sm:$0xf]
      %v145 = vld [vmem:[%s1 + $0x10] sm:$0x3]
      %v150 = vunpack.c.l.b16 %v137
      %v151 = vunpack.c.l.b16 %v138
      %v152 = vunpack.c.l.b16 %v139
      %v153 = vunpack.c.l.b16 %v140
      %v154 = vpack.c.b16 %v151, %v150
      %v155 = vpack.c.b16 %v153, %v152
      %v161 = vunpack.c.l.b16 %v141
      %v162 = vunpack.c.l.b16 %v142
      %v163 = vunpack.c.l.b16 %v143
      %v164 = vunpack.c.l.b16 %v144
      %v165 = vunpack.c.l.b16 %v145
      %v166 = vpack.c.b16 %v162, %v161
      %v167 = vpack.c.b16 %v164, %v163
      %v168 = vpack.c.b16 %v165, %v165
      %vm171 = vcmask 293888
      %v173 = vsel %vm171, %v154, 0
      %v176 = vsel %vm171, %v155, 0
      %vm178 = vcmask 1041408
      %v180 = vsel %vm178, %v168, 0
      %182 = vmatprep.subr.bf16.mxu0 0
      %183 = vmatpush1.bf16.msra.mxu0 %v166
      %184 = vmatprep.subr.bf16.mxu0 0
      %185 = vmatpush1.bf16.msra.mxu0 %v167
      %186 = vmatprep.subr.bf16.mxu0 0
      %187 = vmatpush1.bf16.msra.mxu0 %v180
      %188 = vmatprep.subr.bf16.mxu0 0
      %189 = vmatpush1.bf16.msra.mxu0 0
      %190 = vmatprep.subr.bf16.mxu0 0
      %191 = vmatpush1.bf16.msra.mxu0 0
      %192 = vmatprep.subr.bf16.mxu0 0
      %193 = vmatpush1.bf16.msra.mxu0 0
      %194 = vmatprep.subr.bf16.mxu0 0
      %195 = vmatpush1.bf16.msra.mxu0 0
      %196 = vmatprep.subr.bf16.mxu0 0
      %197 = vmatpush1.bf16.msra.mxu0 0
      %198 = vmatprep.subr.bf16.mxu0 0
      %199 = vmatpush1.bf16.msra.mxu0 0
      %200 = vmatprep.subr.bf16.mxu0 0
      %201 = vmatpush1.bf16.msra.mxu0 0
      %202 = vmatprep.subr.bf16.mxu0 0
      %203 = vmatpush1.bf16.msra.mxu0 0
      %204 = vmatprep.subr.bf16.mxu0 0
      %205 = vmatpush1.bf16.msra.mxu0 0
      %206 = vmatprep.subr.bf16.mxu0 0
      %207 = vmatpush1.bf16.msra.mxu0 0
      %208 = vmatprep.subr.bf16.mxu0 0
      %209 = vmatpush1.bf16.msra.mxu0 0
      %210 = vmatprep.subr.bf16.mxu0 0
      %211 = vmatpush1.bf16.msra.mxu0 0
      %212 = vmatprep.subr.bf16.mxu0 0
      %213 = vmatpush1.bf16.msra.mxu0 0
      %214 = vmatprep.mubr.bf16.mxu0 0
      %215 = vmatmul.mubr.bf16.gmra.mrb[0].mxu0 %v173
      %v216 = vpop.f32.mrb[0].mxu0
      %v217 = vadd.f32 0.0, %v216
      %v218 = vpop.f32.mrb[0].mxu0
      %v219 = vpop.f32.mrb[0].mxu0
      %v220 = vadd.f32 0.0, %v219
      %v221 = vpop.f32.mrb[0].mxu0
      %222 = vmatprep.mubr.bf16.mxu0 0
      %223 = vmatmul.mubr.bf16.gmra.mrb[0].mxu0 %v176
      %v224 = vpop.f32.mrb[0].mxu0
      %v225 = vadd.f32 0.0, %v224
      %v226 = vpop.f32.mrb[0].mxu0
      %v227 = vpop.f32.mrb[0].mxu0
      %v228 = vadd.f32 0.0, %v227
      %v229 = vpop.f32.mrb[0].mxu0
      %230 = vdwg.mxu0
      %v231 = vadd.f32 %v217, %v220
      %v232 = vadd.f32 %v231, %v225
      %v233 = vadd.f32 %v232, %v228
      %v234 = vrot.slane %v233, 4
      %v235 = vadd.f32 %v233, %v234
      %v236 = vrot.slane %v235, 2
      %v237 = vadd.f32 %v235, %v236
      %v238 = vrot.slane %v237, 1
      %v239 = vadd.f32 %v237, %v238
      %v240 = vmul.f32 %v217, %v217
      %v241 = vmul.f32 %v220, %v220
      %v242 = vmul.f32 %v225, %v225
      %v243 = vmul.f32 %v228, %v228
      %v244 = vadd.f32 %v240, %v241
      %v245 = vadd.f32 %v244, %v242
      %v246 = vadd.f32 %v245, %v243
      %v247 = vrot.slane %v246, 4
      %v248 = vadd.f32 %v246, %v247
      %v249 = vrot.slane %v248, 2
      %v250 = vadd.f32 %v248, %v249
      %v251 = vrot.slane %v250, 1
      %v252 = vadd.f32 %v250, %v251
      %v253 = vld [vmem:[%s2] sm:$0xff]
      %vm254 = vcmask 1040384
      %v255 = vsel %vm254, %v239, %v252
      %v256 = vsel %vm178, %v255, 0.0
      %v257 = vadd.f32 %v253, %v256
      %258 = vst [vmem:[%s2] sm:$0xff] %v257
      // Predicated region
      $region33: #{srm_pixel_attention.5} parent=27 // pred_check
        %p259 = pneg %p73
      $region34: #{srm_pixel_attention.5} parent=27 // pred_check_branch
        %261 = sbr.rel (%p259) target = $region36
      $region35: #{srm_pixel_attention.5} parent=27 // pred_region
        _
      $region36: #{srm_pixel_attention.5} parent=27 // pred_fallthru
        _
      // Predicated region
      $region37: #{srm_pixel_attention.5} parent=27 // pred_check
        %p262 = pneg %p73
      $region38: #{srm_pixel_attention.5} parent=27 // pred_check_branch
        %264 = sbr.rel (%p262) target = $region40
      $region39: #{srm_pixel_attention.5} parent=27 // pred_region
        _
      $region40: #{srm_pixel_attention.5} parent=27 // pred_fallthru
        _
    $region28: #{srm_pixel_attention.5} parent=5 // pred_fallthru
      _
    %p265 = scmp.le.s32.totalorder 2, %s8
    // Predicated region
    $region41: #{srm_pixel_attention.5} parent=5 // pred_check
      %p266 = pneg %p265
    $region42: #{srm_pixel_attention.5} parent=5 // pred_check_branch
      %268 = sbr.rel (%p266) target = $region44
    $region43: #{srm_pixel_attention.5} parent=5 // pred_region
      %s269 = ssub.s32 %s8, 2
    $region44: #{srm_pixel_attention.5} parent=5 // pred_fallthru
      _
  $region6: #{srm_pixel_attention.5} parent=0 // loop_footer
    %s12 = sadd.s32 1, %s8
  $region7: #{srm_pixel_attention.5} parent=0 // loop_footer_branch
    %7 = sbr.rel target = $region3
  $region8: #{srm_pixel_attention.5} parent=0 // loop_exit
    _

// kernel: srm_pixel_attention.8
$region0: #{srm_pixel_attention.8}
  #allocation0 [shape = 'u32[]', space=smem, size = 0x4, offset = 0x4, fixed_abs, tag = 'smem constant byte address 0x4 - core index']
  #allocation1 [shape = 'u32[144,128]{1,0:T(1,128)}', space=vmem, size = 0x12000, scoped, tag = 'internal scratch']
  %s0 = inlined_call_operand.vmem [shape: bf16[64,288], index: 0, kind: input, shape index: {}]
  %s1 = inlined_call_operand.vmem [shape: bf16[288,128], index: 1, kind: input, shape index: {}]
  %s2 = inlined_call_operand.vmem [shape: f32[1,128], index: 2, kind: input, shape index: {}]
  %s3 = inlined_call_operand.vmem [shape: f32[1,128], index: 3, kind: input, shape index: {}]
  %s4 = inlined_call_operand.vmem [shape: f32[64,2], index: 4, kind: output, shape index: {}]
  %s5 = sld [smem:[#allocation0]]
  $region49: #{srm_pixel_attention.8} parent=0
    _
  %s7 = ssub.s32 1, %s5
  %s8 = scalar_select 0, %s7, %s5
  loop: start=0, step=1, limit=4
  $region2: #{srm_pixel_attention.8} parent=0 // loop_pre_header
    _
  $region3: #{srm_pixel_attention.8} parent=0 // loop_header
    %s10 = sphi 0, %s14
    %p11 = scmp.ge.s32.totalorder %s10, 4
    %s20 = sphi 0, %s22
    %s23 = sphi 0, %s20
    %s24 = sphi 0, %s23
    %s40 = sphi 0, %s24
    %s44 = sphi 0, %s44
    %s46 = sphi 0, %s44
    %s47 = sphi 0, %s46
    %s61 = sphi 0, %s47
    %s65 = sphi 0, %s65
    %s67 = sphi 0, %s65
    %s68 = sphi 0, %s67
    %s82 = sphi 0, %s68
    %s86 = sphi 0, %s86
    %s88 = sphi 0, %s86
    %s89 = sphi 0, %s88
    %s103 = sphi 0, %s89
    %s109 = sphi 0, %s111
    %s112 = sphi 0, %s109
    %s113 = sphi 0, %s112
    %s129 = sphi 0, %s113
  $region4: #{srm_pixel_attention.8} parent=0 // loop_header_branch
    %13 = sbr.rel (%p11) target = $region8
  $region5: #{srm_pixel_attention.8} parent=0 // loop_body
    %s15 = ssub.s32 %s10, 1
    %s16 = ssub.s32 %s10, 2
    %s17 = sadd.s32 %s10, 1
    %s18 = ssub.s32 %s10, %s17
    %p19 = scmp.eq.s32.totalorder %s18, 0
    %s21 = sadd.s32 %s20, 1
    %s22 = scalar_select %p19, %s20, %s21
    %p25 = pneg %p19
    %p26 = scmp.eq.s32.totalorder %s10, 1
    %p27 = por %p25, %p26
    %p28 = scmp.ne.s32.totalorder %s20, %s23
    %p29 = scmp.eq.s32.totalorder %s10, 0
    %p30 = por %p28, %p29
    %p31 = scmp.ne.s32.totalorder %s20, %s23
    %p32 = scmp.eq.s32.totalorder %s15, 1
    %p33 = por %p31, %p32
    %p34 = scmp.ne.s32.totalorder %s23, %s24
    %p35 = scmp.eq.s32.totalorder %s15, 0
    %p36 = por %p34, %p35
    %p37 = scmp.ne.s32.totalorder %s23, %s24
    %p38 = scmp.eq.s32.totalorder %s16, 1
    %p39 = por %p37, %p38
    %p41 = scmp.ne.s32.totalorder %s24, %s40
    %p42 = scmp.eq.s32.totalorder %s16, 0
    %p43 = por %p41, %p42
    %s45 = sadd.s32 %s44, 1
    %p48 = scmp.eq.s32.totalorder %s10, 1
    %p49 = scmp.ne.s32.totalorder %s44, %s46
    %p50 = scmp.eq.s32.totalorder %s10, 0
    %p51 = por %p49, %p50
    %p52 = scmp.ne.s32.totalorder %s44, %s46
    %p53 = scmp.eq.s32.totalorder %s15, 1
    %p54 = por %p52, %p53
    %p55 = scmp.ne.s32.totalorder %s46, %s47
    %p56 = scmp.eq.s32.totalorder %s15, 0
    %p57 = por %p55, %p56
    %p58 = scmp.ne.s32.totalorder %s46, %s47
    %p59 = scmp.eq.s32.totalorder %s16, 1
    %p60 = por %p58, %p59
    %p62 = scmp.ne.s32.totalorder %s47, %s61
    %p63 = scmp.eq.s32.totalorder %s16, 0
    %p64 = por %p62, %p63
    %s66 = sadd.s32 %s65, 1
    %p69 = scmp.eq.s32.totalorder %s10, 1
    %p70 = scmp.ne.s32.totalorder %s65, %s67
    %p71 = scmp.eq.s32.totalorder %s10, 0
    %p72 = por %p70, %p71
    %p73 = scmp.ne.s32.totalorder %s65, %s67
    %p74 = scmp.eq.s32.totalorder %s15, 1
    %p75 = por %p73, %p74
    %p76 = scmp.ne.s32.totalorder %s67, %s68
    %p77 = scmp.eq.s32.totalorder %s15, 0
    %p78 = por %p76, %p77
    %p79 = scmp.ne.s32.totalorder %s67, %s68
    %p80 = scmp.eq.s32.totalorder %s16, 1
    %p81 = por %p79, %p80
    %p83 = scmp.ne.s32.totalorder %s68, %s82
    %p84 = scmp.eq.s32.totalorder %s16, 0
    %p85 = por %p83, %p84
    %s87 = sadd.s32 %s86, 1
    %p90 = scmp.eq.s32.totalorder %s10, 1
    %p91 = scmp.ne.s32.totalorder %s86, %s88
    %p92 = scmp.eq.s32.totalorder %s10, 0
    %p93 = por %p91, %p92
    %p94 = scmp.ne.s32.totalorder %s86, %s88
    %p95 = scmp.eq.s32.totalorder %s15, 1
    %p96 = por %p94, %p95
    %p97 = scmp.ne.s32.totalorder %s88, %s89
    %p98 = scmp.eq.s32.totalorder %s15, 0
    %p99 = por %p97, %p98
    %p100 = scmp.ne.s32.totalorder %s88, %s89
    %p101 = scmp.eq.s32.totalorder %s16, 1
    %p102 = por %p100, %p101
    %p104 = scmp.ne.s32.totalorder %s89, %s103
    %p105 = scmp.eq.s32.totalorder %s16, 0
    %p106 = por %p104, %p105
    %s107 = ssub.s32 %s10, %s17
    %p108 = scmp.eq.s32.totalorder %s107, 0
    %s110 = sadd.s32 %s109, 1
    %s111 = scalar_select %p108, %s109, %s110
    %p114 = pneg %p108
    %p115 = scmp.eq.s32.totalorder %s10, 1
    %p116 = por %p114, %p115
    %p117 = scmp.ne.s32.totalorder %s109, %s112
    %p118 = scmp.eq.s32.totalorder %s10, 0
    %p119 = por %p117, %p118
    %p120 = scmp.ne.s32.totalorder %s109, %s112
    %p121 = scmp.eq.s32.totalorder %s15, 1
    %p122 = por %p120, %p121
    %p123 = scmp.ne.s32.totalorder %s112, %s113
    %p124 = scmp.eq.s32.totalorder %s15, 0
    %p125 = por %p123, %p124
    %p126 = scmp.ne.s32.totalorder %s112, %s113
    %p127 = scmp.eq.s32.totalorder %s16, 1
    %p128 = por %p126, %p127
    %p130 = scmp.ne.s32.totalorder %s113, %s129
    %p131 = scmp.eq.s32.totalorder %s16, 0
    %p132 = por %p130, %p131
    %p133 = scmp.le.s32.totalorder 1, %s10
    %p134 = scmp.lt.s32.totalorder %s10, 3
    %p135 = pnand %p133, %p134
    %p136 = pneg %p135
    // Predicated region
    $region9: #{srm_pixel_attention.8} parent=5 // pred_check
      _
    $region10: #{srm_pixel_attention.8} parent=5 // pred_check_branch
      %138 = sbr.rel (%p135) target = $region12
    $region11: #{srm_pixel_attention.8} parent=5 // pred_region
      %s139 = ssub.s32 %s10, 1
      // Predicated region
      $region13: #{srm_pixel_attention.8} parent=11 // pred_check
        %p140 = pneg %p57
      $region14: #{srm_pixel_attention.8} parent=11 // pred_check_branch
        %142 = sbr.rel (%p140) target = $region16
      $region15: #{srm_pixel_attention.8} parent=11 // pred_region
        _
      $region16: #{srm_pixel_attention.8} parent=11 // pred_fallthru
        _
      // Predicated region
      $region17: #{srm_pixel_attention.8} parent=11 // pred_check
        %p143 = pneg %p78
      $region18: #{srm_pixel_attention.8} parent=11 // pred_check_branch
        %145 = sbr.rel (%p143) target = $region20
      $region19: #{srm_pixel_attention.8} parent=11 // pred_region
        _
      $region20: #{srm_pixel_attention.8} parent=11 // pred_fallthru
        _
      // Predicated region
      $region21: #{srm_pixel_attention.8} parent=11 // pred_check
        %p146 = pneg %p99
      $region22: #{srm_pixel_attention.8} parent=11 // pred_check_branch
        %148 = sbr.rel (%p146) target = $region24
      $region23: #{srm_pixel_attention.8} parent=11 // pred_region
        _
      $region24: #{srm_pixel_attention.8} parent=11 // pred_fallthru
        _
    $region12: #{srm_pixel_attention.8} parent=5 // pred_fallthru
      _
    %p149 = scmp.lt.s32.totalorder %s10, 2
    // Predicated region
    $region25: #{srm_pixel_attention.8} parent=5 // pred_check
      %p150 = pneg %p149
    $region26: #{srm_pixel_attention.8} parent=5 // pred_check_branch
      %152 = sbr.rel (%p150) target = $region28
    $region27: #{srm_pixel_attention.8} parent=5 // pred_region
      // Predicated region
      $region29: #{srm_pixel_attention.8} parent=27 // pred_check
        %p153 = pneg %p30
      $region30: #{srm_pixel_attention.8} parent=27 // pred_check_branch
        %155 = sbr.rel (%p153) target = $region32
      $region31: #{srm_pixel_attention.8} parent=27 // pred_region
        %s156 = smul.u32 4, %s10
        %p157 = scmp.lt.s32.totalorder %s156, 7
        %s158 = scalar_select %p157, %s156, 7
        %s159 = smul.addr %s158, 3
        %s160 = smul.addr %s159, 4
        %s161 = scalar_lea.vmem %s0, %s160
        %s162 = smul.u32 4, %s10
      $region32: #{srm_pixel_attention.8} parent=27 // pred_fallthru
        _
    $region28: #{srm_pixel_attention.8} parent=5 // pred_fallthru
      _
    %p163 = scmp.le.s32.totalorder 1, %s10
    %p164 = scmp.lt.s32.totalorder %s10, 3
    %p165 = pnand %p163, %p164
    %p166 = pneg %p165
    // Predicated region
    $region33: #{srm_pixel_attention.8} parent=5 // pred_check
      _
    $region34: #{srm_pixel_attention.8} parent=5 // pred_check_branch
      %168 = sbr.rel (%p165) target = $region36
    $region35: #{srm_pixel_attention.8} parent=5 // pred_region
      %s169 = ssub.s32 %s10, 1
      %s170 = smul.u32 4, %s15
      %p171 = scmp.lt.s32.totalorder %s170, 7
      %s172 = scalar_select %p171, %s170, 7
      %s173 = smul.addr %s172, 3
      %s174 = smul.addr %s173, 4
      %s175 = scalar_lea.vmem %s0, %s174
      %p176 = pneg %p36
      %p177 = pneg %p33
      %p178 = pneg %p57
      %p179 = pneg %p54
      %p180 = pneg %p78
      %p181 = pneg %p75
      %p182 = pneg %p99
      %p183 = pneg %p96
      %p184 = pneg %p125
      %p185 = pneg %p122
      %s186 = smul.u32 4, %s15
      %p187 = scmp.lt.s32.totalorder %s186, 7
      %s188 = scalar_select %p187, %s186, 7
      %s189 = smul.addr %s188, 8
      %s190 = scalar_lea.vmem %s4, %s189
      %s191 = smul.u32 4, %s15
      %p192 = scmp.lt.s32.totalorder %s191, 7
      %s193 = scalar_select %p192, %s191, 7
      %s194 = smul.addr %s193, 3
      %s195 = smul.addr %s194, 4
      %s196 = scalar_lea.vmem %s0, %s195
      %s197 = smul.u32 4, %s15
      %s198 = smul.u32 4, %s15
      %p199 = scmp.lt.s32.totalorder %s198, 7
      %s200 = scalar_select %p199, %s198, 7
      %s201 = smul.addr %s200, 8
      %s202 = scalar_lea.vmem %s4, %s201
      %s203 = smul.u32 4, %s15
      %v205 = vld [vmem:[%s196] sm:$0xff]
      %v206 = vld [vmem:[%s196 + $0x8] sm:$0xf]
      %v207 = vld [vmem:[%s196 + $0xc] sm:$0xff]
      %v208 = vld [vmem:[%s196 + $0x14] sm:$0xf]
      %v209 = vld [vmem:[%s196 + $0x18] sm:$0xff]
      %v210 = vld [vmem:[%s196 + $0x20] sm:$0xf]
      %v211 = vld [vmem:[%s196 + $0x24] sm:$0xff]
      %v212 = vld [vmem:[%s196 + $0x2c] sm:$0xf]
      %v213 = vld [vmem:[%s1] sm:$0xf]
      %v214 = vld [vmem:[%s1 + $0x4] sm:$0xf]
      %v215 = vld [vmem:[%s1 + $0x8] sm:$0xf]
      %v216 = vld [vmem:[%s1 + $0xc] sm:$0xf]
      %v217 = vld [vmem:[%s1 + $0x10] sm:$0xf]
      %v218 = vld [vmem:[%s1 + $0x14] sm:$0xf]
      %v219 = vld [vmem:[%s1 + $0x18] sm:$0xf]
      %v220 = vld [vmem:[%s1 + $0x1c] sm:$0xf]
      %v221 = vld [vmem:[%s1 + $0x20] sm:$0xf]
      %v222 = vld [vmem:[%s1 + $0x24] sm:$0xf]
      %v223 = vld [vmem:[%s1 + $0x28] sm:$0xf]
      %v224 = vld [vmem:[%s1 + $0x2c] sm:$0xf]
      %v225 = vld [vmem:[%s1 + $0x30] sm:$0xf]
      %v226 = vld [vmem:[%s1 + $0x34] sm:$0xf]
      %v227 = vld [vmem:[%s1 + $0x38] sm:$0xf]
      %v228 = vld [vmem:[%s1 + $0x3c] sm:$0xf]
      %v229 = vld [vmem:[%s1 + $0x40] sm:$0xf]
      %v230 = vld [vmem:[%s1 + $0x44] sm:$0xf]
      %v231 = vld [vmem:[%s1 + $0x48] sm:$0xf]
      %v232 = vld [vmem:[%s1 + $0x4c] sm:$0xf]
      %v233 = vld [vmem:[%s1 + $0x50] sm:$0xf]
      %v234 = vld [vmem:[%s1 + $0x54] sm:$0xf]
      %v235 = vld [vmem:[%s1 + $0x58] sm:$0xf]
      %v236 = vld [vmem:[%s1 + $0x5c] sm:$0xf]
      %v237 = vld [vmem:[%s1 + $0x60] sm:$0xf]
      %v238 = vld [vmem:[%s1 + $0x64] sm:$0xf]
      %v239 = vld [vmem:[%s1 + $0x68] sm:$0xf]
      %v240 = vld [vmem:[%s1 + $0x6c] sm:$0xf]
      %v241 = vld [vmem:[%s1 + $0x70] sm:$0xf]
      %v242 = vld [vmem:[%s1 + $0x74] sm:$0xf]
      %v243 = vld [vmem:[%s1 + $0x78] sm:$0xf]
      %v244 = vld [vmem:[%s1 + $0x7c] sm:$0xf]
      %v245 = vld [vmem:[%s1 + $0x80] sm:$0xf]
      %v246 = vld [vmem:[%s1 + $0x84] sm:$0xf]
      %v247 = vld [vmem:[%s1 + $0x88] sm:$0xf]
      %v248 = vld [vmem:[%s1 + $0x8c] sm:$0xf]
      %v257 = vunpack.c.l.b16 %v205
      %v258 = vunpack.c.h.b16 %v205
      %v259 = vunpack.c.l.b16 %v206
      %v260 = vunpack.c.l.b16 %v207
      %v261 = vunpack.c.h.b16 %v207
      %v262 = vunpack.c.l.b16 %v208
      %v263 = vunpack.c.l.b16 %v209
      %v264 = vunpack.c.h.b16 %v209
      %v265 = vunpack.c.l.b16 %v210
      %v266 = vunpack.c.l.b16 %v211
      %v267 = vunpack.c.h.b16 %v211
      %v268 = vunpack.c.l.b16 %v212
      %v269 = vpack.c.b16 %v260, %v257
      %v270 = vpack.c.b16 %v261, %v258
      %v271 = vpack.c.b16 %v262, %v259
      %v272 = vpack.c.b16 %v266, %v263
      %v273 = vpack.c.b16 %v267, %v264
      %v274 = vpack.c.b16 %v268, %v265
      %v315 = vunpack.c.l.b16 %v213
      %v316 = vunpack.c.l.b16 %v214
      %v317 = vunpack.c.l.b16 %v215
      %v318 = vunpack.c.l.b16 %v216
      %v319 = vunpack.c.l.b16 %v217
      %v320 = vunpack.c.l.b16 %v218
      %v321 = vunpack.c.l.b16 %v219
      %v322 = vunpack.c.l.b16 %v220
      %v323 = vunpack.c.l.b16 %v221
      %v324 = vunpack.c.l.b16 %v222
      %v325 = vunpack.c.l.b16 %v223
      %v326 = vunpack.c.l.b16 %v224
      %v327 = vunpack.c.l.b16 %v225
      %v328 = vunpack.c.l.b16 %v226
      %v329 = vunpack.c.l.b16 %v227
      %v330 = vunpack.c.l.b16 %v228
      %v331 = vunpack.c.l.b16 %v229
      %v332 = vunpack.c.l.b16 %v230
      %v333 = vunpack.c.l.b16 %v231
      %v334 = vunpack.c.l.b16 %v232
      %v335 = vunpack.c.l.b16 %v233
      %v336 = vunpack.c.l.b16 %v234
      %v337 = vunpack.c.l.b16 %v235
      %v338 = vunpack.c.l.b16 %v236
      %v339 = vunpack.c.l.b16 %v237
      %v340 = vunpack.c.l.b16 %v238
      %v341 = vunpack.c.l.b16 %v239
      %v342 = vunpack.c.l.b16 %v240
      %v343 = vunpack.c.l.b16 %v241
      %v344 = vunpack.c.l.b16 %v242
      %v345 = vunpack.c.l.b16 %v243
      %v346 = vunpack.c.l.b16 %v244
      %v347 = vunpack.c.l.b16 %v245
      %v348 = vunpack.c.l.b16 %v246
      %v349 = vunpack.c.l.b16 %v247
      %v350 = vunpack.c.l.b16 %v248
      %v351 = vpack.c.b16 %v316, %v315
      %v352 = vpack.c.b16 %v318, %v317
      %v353 = vpack.c.b16 %v320, %v319
      %v354 = vpack.c.b16 %v322, %v321
      %v355 = vpack.c.b16 %v324, %v323
      %v356 = vpack.c.b16 %v326, %v325
      %v357 = vpack.c.b16 %v328, %v327
      %v358 = vpack.c.b16 %v330, %v329
      %v359 = vpack.c.b16 %v332, %v331
      %v360 = vpack.c.b16 %v334, %v333
      %v361 = vpack.c.b16 %v336, %v335
      %v362 = vpack.c.b16 %v338, %v337
      %v363 = vpack.c.b16 %v340, %v339
      %v364 = vpack.c.b16 %v342, %v341
      %v365 = vpack.c.b16 %v344, %v343
      %v366 = vpack.c.b16 %v346, %v345
      %v367 = vpack.c.b16 %v348, %v347
      %v368 = vpack.c.b16 %v350, %v349
      %vm387 = vcmask 261120
      %v389 = vsel %vm387, %v271, 0
      %v392 = vsel %vm387, %v274, 0
      %394 = vmatprep.subr.bf16.mxu0 0
      %395 = vmatpush1.bf16.msra.mxu0 %v351
      %396 = vmatprep.subr.bf16.mxu0 0
      %397 = vmatpush1.bf16.msra.mxu0 %v352
      %398 = vmatprep.subr.bf16.mxu0 0
      %399 = vmatpush1.bf16.msra.mxu0 %v353
      %400 = vmatprep.subr.bf16.mxu0 0
      %401 = vmatpush1.bf16.msra.mxu0 %v354
      %402 = vmatprep.subr.bf16.mxu0 0
      %403 = vmatpush1.bf16.msra.mxu0 %v355
      %404 = vmatprep.subr.bf16.mxu0 0
      %405 = vmatpush1.bf16.msra.mxu0 %v356
      %406 = vmatprep.subr.bf16.mxu0 0
      %407 = vmatpush1.bf16.msra.mxu0 %v357
      %408 = vmatprep.subr.bf16.mxu0 0
      %409 = vmatpush1.bf16.msra.mxu0 %v358
      %410 = vmatprep.subr.bf16.mxu0 0
      %411 = vmatpush1.bf16.msra.mxu0 %v359
      %412 = vmatprep.subr.bf16.mxu0 0
      %413 = vmatpush1.bf16.msra.mxu0 %v360
      %414 = vmatprep.subr.bf16.mxu0 0
      %415 = vmatpush1.bf16.msra.mxu0 %v361
      %416 = vmatprep.subr.bf16.mxu0 0
      %417 = vmatpush1.bf16.msra.mxu0 %v362
      %418 = vmatprep.subr.bf16.mxu0 0
      %419 = vmatpush1.bf16.msra.mxu0 %v363
      %420 = vmatprep.subr.bf16.mxu0 0
      %421 = vmatpush1.bf16.msra.mxu0 %v364
      %422 = vmatprep.subr.bf16.mxu0 0
      %423 = vmatpush1.bf16.msra.mxu0 %v365
      %424 = vmatprep.subr.bf16.mxu0 0
      %425 = vmatpush1.bf16.msra.mxu0 %v366
      %426 = vmatprep.mubr.bf16.mxu0 %v270
      %427 = vmatmul.mubr.bf16.gmra.mrb[0].mxu0 %v269
      %v428 = vpop.f32.mrb[0].mxu0
      %v429 = vadd.f32 0.0, %v428
      %v430 = vpop.f32.mrb[0].mxu0
      %v431 = vpop.f32.mrb[0].mxu0
      %v432 = vadd.f32 0.0, %v431
      %v433 = vpop.f32.mrb[0].mxu0
      %434 = vmatprep.mubr.bf16.mxu0 %v273
      %435 = vmatmul.mubr.bf16.gmra.mrb[0].mxu0 %v272
      %v436 = vpop.f32.mrb[0].mxu0
      %v437 = vadd.f32 0.0, %v436
      %v438 = vpop.f32.mrb[0].mxu0
      %v439 = vpop.f32.mrb[0].mxu0
      %v440 = vadd.f32 0.0, %v439
      %v441 = vpop.f32.mrb[0].mxu0
      %442 = vdwg.mxu0
      %443 = vmatprep.subr.bf16.mxu0 0
      %444 = vmatpush1.bf16.msra.mxu0 %v367
      %445 = vmatprep.subr.bf16.mxu0 0
      %446 = vmatpush1.bf16.msra.mxu0 %v368
      %447 = vmatprep.subr.bf16.mxu0 0
      %448 = vmatpush1.bf16.msra.mxu0 0
      %449 = vmatprep.subr.bf16.mxu0 0
      %450 = vmatpush1.bf16.msra.mxu0 0
      %451 = vmatprep.subr.bf16.mxu0 0
      %452 = vmatpush1.bf16.msra.mxu0 0
      %453 = vmatprep.subr.bf16.mxu0 0
      %454 = vmatpush1.bf16.msra.mxu0 0
      %455 = vmatprep.subr.bf16.mxu0 0
      %456 = vmatpush1.bf16.msra.mxu0 0
      %457 = vmatprep.subr.bf16.mxu0 0
      %458 = vmatpush1.bf16.msra.mxu0 0
      %459 = vmatprep.subr.bf16.mxu0 0
      %460 = vmatpush1.bf16.msra.mxu0 0
      %461 = vmatprep.subr.bf16.mxu0 0
      %462 = vmatpush1.bf16.msra.mxu0 0
      %463 = vmatprep.subr.bf16.mxu0 0
      %464 = vmatpush1.bf16.msra.mxu0 0
      %465 = vmatprep.subr.bf16.mxu0 0
      %466 = vmatpush1.bf16.msra.mxu0 0
      %467 = vmatprep.subr.bf16.mxu0 0
      %468 = vmatpush1.bf16.msra.mxu0 0
      %469 = vmatprep.subr.bf16.mxu0 0
      %470 = vmatpush1.bf16.msra.mxu0 0
      %471 = vmatprep.subr.bf16.mxu0 0
      %472 = vmatpush1.bf16.msra.mxu0 0
      %473 = vmatprep.subr.bf16.mxu0 0
      %474 = vmatpush1.bf16.msra.mxu0 0
      %475 = vmatprep.mubr.bf16.mxu0 0
      %476 = vmatmul.mubr.bf16.gmra.mrb[0].mxu0 %v389
      %v477 = vpop.f32.mrb[0].mxu0
      %v478 = vadd.f32 %v429, %v477
      %v479 = vpop.f32.mrb[0].mxu0
      %v480 = vpop.f32.mrb[0].mxu0
      %v481 = vadd.f32 %v432, %v480
      %v482 = vpop.f32.mrb[0].mxu0
      %483 = vmatprep.mubr.bf16.mxu0 0
      %484 = vmatmul.mubr.bf16.gmra.mrb[0].mxu0 %v392
      %v485 = vpop.f32.mrb[0].mxu0
      %v486 = vadd.f32 %v437, %v485
      %v487 = vpop.f32.mrb[0].mxu0
      %v488 = vpop.f32.mrb[0].mxu0
      %v489 = vadd.f32 %v440, %v488
      %v490 = vpop.f32.mrb[0].mxu0
      %491 = vdwg.mxu0
      %v492 = vld [vmem:[%s2] sm:$0x1]
      %v494 = vlaneseq
      %v495 = vshrl.u32 %v494, 7
      %v496 = vsub.s32 0, %v495
      %v497 = vrot.slane %v492, %v496
      %v499 = vmul.f32 %v478, %v497
      %v500 = vmul.f32 %v481, %v497
      %v501 = vmul.f32 %v486, %v497
      %v502 = vmul.f32 %v489, %v497
      %v503 = vld [vmem:[%s3] sm:$0x1]
      %v505 = vlaneseq
      %v506 = vshrl.u32 %v505, 7
      %v507 = vsub.s32 0, %v506
      %v508 = vrot.slane %v503, %v507
      %v510 = vadd.f32 %v499, %v508
      %v511 = vadd.f32 %v500, %v508
      %v512 = vadd.f32 %v501, %v508
      %v513 = vadd.f32 %v502, %v508
      %v514 = vmax.f32 %v510, 0.0
      %v515 = vmax.f32 %v511, 0.0
      %v516 = vmax.f32 %v512, 0.0
      %v517 = vmax.f32 %v513, 0.0
      %518 = vadd.xlane.f32.xlu0 %v514
      %v519 = vpop.xlane.xlu0 %518
      %520 = vadd.xlane.f32.xlu0 %v515
      %v521 = vpop.xlane.xlu0 %520
      %522 = vadd.xlane.f32.xlu0 %v516
      %v523 = vpop.xlane.xlu0 %522
      %524 = vadd.xlane.f32.xlu0 %v517
      %v525 = vpop.xlane.xlu0 %524
      %v526 = vmul.f32 %v519, 0.015625
      %v527 = vmul.f32 %v521, 0.015625
      %v528 = vmul.f32 %v523, 0.015625
      %v529 = vmul.f32 %v525, 0.015625
      %530 = vmax.xlane.f32.xlu0 %v514
      %v531 = vpop.xlane.xlu0 %530
      %532 = vmax.xlane.f32.xlu0 %v515
      %v533 = vpop.xlane.xlu0 %532
      %534 = vmax.xlane.f32.xlu0 %v516
      %v535 = vpop.xlane.xlu0 %534
      %536 = vmax.xlane.f32.xlu0 %v517
      %v537 = vpop.xlane.xlu0 %536
      %vm538 = vcmask 7168
      %v539 = vsel %vm538, %v526, %v531
      %v540 = vsel %vm538, %v527, %v533
      %v541 = vsel %vm538, %v528, %v535
      %v542 = vsel %vm538, %v529, %v537
      %vm543 = vcmask 15360
      %544 = vst.msk [vmem:[%s202] sm:$0xff] %vm543, %v539
      %545 = vst.msk [vmem:[%s202 + $0x8] sm:$0xff] %vm543, %v540
      %546 = vst.msk [vmem:[%s202 + $0x10] sm:$0xff] %vm543, %v541
      %547 = vst.msk [vmem:[%s202 + $0x18] sm:$0xff] %vm543, %v542
      %s548 = smul.u32 4, %s15
      %p549 = scmp.lt.s32.totalorder %s548, 7
      %s550 = scalar_select %p549, %s548, 7
      %s551 = smul.addr %s550, 8
      %s552 = scalar_lea.vmem %s4, %s551
      // Predicated region
      $region37: #{srm_pixel_attention.8} parent=35 // pred_check
        %p553 = pneg %p122
      $region38: #{srm_pixel_attention.8} parent=35 // pred_check_branch
        %555 = sbr.rel (%p553) target = $region40
      $region39: #{srm_pixel_attention.8} parent=35 // pred_region
        %s556 = smul.u32 4, %s15
      $region40: #{srm_pixel_attention.8} parent=35 // pred_fallthru
        _
    $region36: #{srm_pixel_attention.8} parent=5 // pred_fallthru
      _
    %p557 = scmp.le.s32.totalorder 2, %s10
    // Predicated region
    $region41: #{srm_pixel_attention.8} parent=5 // pred_check
      %p558 = pneg %p557
    $region42: #{srm_pixel_attention.8} parent=5 // pred_check_branch
      %560 = sbr.rel (%p558) target = $region44
    $region43: #{srm_pixel_attention.8} parent=5 // pred_region
      %s561 = ssub.s32 %s10, 2
      // Predicated region
      $region45: #{srm_pixel_attention.8} parent=43 // pred_check
        %p562 = pneg %p128
      $region46: #{srm_pixel_attention.8} parent=43 // pred_check_branch
        %564 = sbr.rel (%p562) target = $region48
      $region47: #{srm_pixel_attention.8} parent=43 // pred_region
        %s565 = smul.u32 4, %s16
        %p566 = scmp.lt.s32.totalorder %s565, 7
        %s567 = scalar_select %p566, %s565, 7
        %s568 = smul.addr %s567, 8
        %s569 = scalar_lea.vmem %s4, %s568
      $region48: #{srm_pixel_attention.8} parent=43 // pred_fallthru
        _
    $region44: #{srm_pixel_attention.8} parent=5 // pred_fallthru
      _
  $region6: #{srm_pixel_attention.8} parent=0 // loop_footer
    %s14 = sadd.s32 1, %s10
  $region7: #{srm_pixel_attention.8} parent=0 // loop_footer_branch
    %9 = sbr.rel target = $region3
  $region8: #{srm_pixel_attention.8} parent=0 // loop_exit
    _

// kernel: srm_pixel_attention.7
$region0: #{srm_pixel_attention.7}
  #allocation0 [shape = 'u32[]', space=smem, size = 0x4, offset = 0x4, fixed_abs, tag = 'smem constant byte address 0x4 - core index']
  #allocation1 [shape = 'u32[144,128]{1,0:T(1,128)}', space=vmem, size = 0x12000, scoped, tag = 'internal scratch']
  %s0 = inlined_call_operand.vmem [shape: bf16[64,288], index: 0, kind: input, shape index: {}]
  %s1 = inlined_call_operand.vmem [shape: bf16[288,128], index: 1, kind: input, shape index: {}]
  %s2 = inlined_call_operand.vmem [shape: f32[8,128], index: 2, kind: output, shape index: {}]
  %s3 = sld [smem:[#allocation0]]
  $region45: #{srm_pixel_attention.7} parent=0
    _
  %s5 = ssub.s32 1, %s3
  %s6 = scalar_select 0, %s5, %s3
  loop: start=0, step=1, limit=4
  $region2: #{srm_pixel_attention.7} parent=0 // loop_pre_header
    _
  $region3: #{srm_pixel_attention.7} parent=0 // loop_header
    %s8 = sphi 0, %s12
    %p9 = scmp.ge.s32.totalorder %s8, 4
    %s18 = sphi 0, %s20
    %s21 = sphi 0, %s18
    %s22 = sphi 0, %s21
    %s38 = sphi 0, %s22
    %s42 = sphi 0, %s42
    %s44 = sphi 0, %s42
    %s45 = sphi 0, %s44
    %s59 = sphi 0, %s45
    %s63 = sphi 0, %s63
    %s65 = sphi 0, %s63
    %s66 = sphi 0, %s65
    %s80 = sphi 0, %s66
  $region4: #{srm_pixel_attention.7} parent=0 // loop_header_branch
    %11 = sbr.rel (%p9) target = $region8
  $region5: #{srm_pixel_attention.7} parent=0 // loop_body
    %s13 = ssub.s32 %s8, 1
    %s14 = ssub.s32 %s8, 2
    %s15 = sadd.s32 %s8, 1
    %s16 = ssub.s32 %s8, %s15
    %p17 = scmp.eq.s32.totalorder %s16, 0
    %s19 = sadd.s32 %s18, 1
    %s20 = scalar_select %p17, %s18, %s19
    %p23 = pneg %p17
    %p24 = scmp.eq.s32.totalorder %s8, 1
    %p25 = por %p23, %p24
    %p26 = scmp.ne.s32.totalorder %s18, %s21
    %p27 = scmp.eq.s32.totalorder %s8, 0
    %p28 = por %p26, %p27
    %p29 = scmp.ne.s32.totalorder %s18, %s21
    %p30 = scmp.eq.s32.totalorder %s13, 1
    %p31 = por %p29, %p30
    %p32 = scmp.ne.s32.totalorder %s21, %s22
    %p33 = scmp.eq.s32.totalorder %s13, 0
    %p34 = por %p32, %p33
    %p35 = scmp.ne.s32.totalorder %s21, %s22
    %p36 = scmp.eq.s32.totalorder %s14, 1
    %p37 = por %p35, %p36
    %p39 = scmp.ne.s32.totalorder %s22, %s38
    %p40 = scmp.eq.s32.totalorder %s14, 0
    %p41 = por %p39, %p40
    %s43 = sadd.s32 %s42, 1
    %p46 = scmp.eq.s32.totalorder %s8, 1
    %p47 = scmp.ne.s32.totalorder %s42, %s44
    %p48 = scmp.eq.s32.totalorder %s8, 0
    %p49 = por %p47, %p48
    %p50 = scmp.ne.s32.totalorder %s42, %s44
    %p51 = scmp.eq.s32.totalorder %s13, 1
    %p52 = por %p50, %p51
    %p53 = scmp.ne.s32.totalorder %s44, %s45
    %p54 = scmp.eq.s32.totalorder %s13, 0
    %p55 = por %p53, %p54
    %p56 = scmp.ne.s32.totalorder %s44, %s45
    %p57 = scmp.eq.s32.totalorder %s14, 1
    %p58 = por %p56, %p57
    %p60 = scmp.ne.s32.totalorder %s45, %s59
    %p61 = scmp.eq.s32.totalorder %s14, 0
    %p62 = por %p60, %p61
    %s64 = sadd.s32 %s63, 1
    %p67 = scmp.eq.s32.totalorder %s8, 1
    %p68 = scmp.ne.s32.totalorder %s63, %s65
    %p69 = scmp.eq.s32.totalorder %s8, 0
    %p70 = por %p68, %p69
    %p71 = scmp.ne.s32.totalorder %s63, %s65
    %p72 = scmp.eq.s32.totalorder %s13, 1
    %p73 = por %p71, %p72
    %p74 = scmp.ne.s32.totalorder %s65, %s66
    %p75 = scmp.eq.s32.totalorder %s13, 0
    %p76 = por %p74, %p75
    %p77 = scmp.ne.s32.totalorder %s65, %s66
    %p78 = scmp.eq.s32.totalorder %s14, 1
    %p79 = por %p77, %p78
    %p81 = scmp.ne.s32.totalorder %s66, %s80
    %p82 = scmp.eq.s32.totalorder %s14, 0
    %p83 = por %p81, %p82
    %p84 = scmp.le.s32.totalorder 1, %s8
    %p85 = scmp.lt.s32.totalorder %s8, 3
    %p86 = pnand %p84, %p85
    %p87 = pneg %p86
    // Predicated region
    $region9: #{srm_pixel_attention.7} parent=5 // pred_check
      _
    $region10: #{srm_pixel_attention.7} parent=5 // pred_check_branch
      %89 = sbr.rel (%p86) target = $region12
    $region11: #{srm_pixel_attention.7} parent=5 // pred_region
      %s90 = ssub.s32 %s8, 1
      // Predicated region
      $region13: #{srm_pixel_attention.7} parent=11 // pred_check
        %p91 = pneg %p55
      $region14: #{srm_pixel_attention.7} parent=11 // pred_check_branch
        %93 = sbr.rel (%p91) target = $region16
      $region15: #{srm_pixel_attention.7} parent=11 // pred_region
        _
      $region16: #{srm_pixel_attention.7} parent=11 // pred_fallthru
        _
    $region12: #{srm_pixel_attention.7} parent=5 // pred_fallthru
      _
    %p94 = scmp.lt.s32.totalorder %s8, 2
    // Predicated region
    $region17: #{srm_pixel_attention.7} parent=5 // pred_check
      %p95 = pneg %p94
    $region18: #{srm_pixel_attention.7} parent=5 // pred_check_branch
      %97 = sbr.rel (%p95) target = $region20
    $region19: #{srm_pixel_attention.7} parent=5 // pred_region
      // Predicated region
      $region21: #{srm_pixel_attention.7} parent=19 // pred_check
        %p98 = pneg %p28
      $region22: #{srm_pixel_attention.7} parent=19 // pred_check_branch
        %100 = sbr.rel (%p98) target = $region24
      $region23: #{srm_pixel_attention.7} parent=19 // pred_region
        %s101 = smul.u32 4, %s8
        %p102 = scmp.lt.s32.totalorder %s101, 7
        %s103 = scalar_select %p102, %s101, 7
        %s104 = smul.addr %s103, 3
        %s105 = smul.addr %s104, 4
        %s106 = scalar_lea.vmem %s0, %s105
        %s107 = smul.u32 4, %s8
      $region24: #{srm_pixel_attention.7} parent=19 // pred_fallthru
        _
    $region20: #{srm_pixel_attention.7} parent=5 // pred_fallthru
      _
    %p108 = scmp.le.s32.totalorder 1, %s8
    %p109 = scmp.lt.s32.totalorder %s8, 3
    %p110 = pnand %p108, %p109
    %p111 = pneg %p110
    // Predicated region
    $region25: #{srm_pixel_attention.7} parent=5 // pred_check
      _
    $region26: #{srm_pixel_attention.7} parent=5 // pred_check_branch
      %113 = sbr.rel (%p110) target = $region28
    $region27: #{srm_pixel_attention.7} parent=5 // pred_region
      %s114 = ssub.s32 %s8, 1
      %s115 = smul.u32 4, %s13
      %p116 = scmp.lt.s32.totalorder %s115, 7
      %s117 = scalar_select %p116, %s115, 7
      %s118 = smul.addr %s117, 3
      %s119 = smul.addr %s118, 4
      %s120 = scalar_lea.vmem %s0, %s119
      %p121 = pneg %p34
      %p122 = pneg %p31
      %p123 = pneg %p55
      %p124 = pneg %p52
      %p125 = pneg %p76
      %p126 = pneg %p73
      %s127 = smul.u32 4, %s13
      %p128 = scmp.lt.s32.totalorder %s127, 7
      %s129 = scalar_select %p128, %s127, 7
      %s130 = smul.addr %s129, 3
      %s131 = smul.addr %s130, 4
      %s132 = scalar_lea.vmem %s0, %s131
      %s133 = smul.u32 4, %s13
      %p135 = scmp.eq.s32.totalorder %s13, 0
      // Predicated region
      $region29: #{srm_pixel_attention.7} parent=27 // pred_check
        %p136 = pneg %p135
      $region30: #{srm_pixel_attention.7} parent=27 // pred_check_branch
        %138 = sbr.rel (%p136) target = $region32
      $region31: #{srm_pixel_attention.7} parent=27 // pred_region
        %139 = vst [vmem:[%s2] sm:$0xff] 0.0
      $region32: #{srm_pixel_attention.7} parent=27 // pred_fallthru
        _
      %v140 = vld [vmem:[%s132] sm:$0xff]
      %v141 = vld [vmem:[%s132 + $0x8] sm:$0xf]
      %v142 = vld [vmem:[%s132 + $0xc] sm:$0xff]
      %v143 = vld [vmem:[%s132 + $0x14] sm:$0xf]
      %v144 = vld [vmem:[%s132 + $0x18] sm:$0xff]
      %v145 = vld [vmem:[%s132 + $0x20] sm:$0xf]
      %v146 = vld [vmem:[%s132 + $0x24] sm:$0xff]
      %v147 = vld [vmem:[%s132 + $0x2c] sm:$0xf]
      %v148 = vld [vmem:[%s1] sm:$0xf]
      %v149 = vld [vmem:[%s1 + $0x4] sm:$0xf]
      %v150 = vld [vmem:[%s1 + $0x8] sm:$0xf]
      %v151 = vld [vmem:[%s1 + $0xc] sm:$0xf]
      %v152 = vld [vmem:[%s1 + $0x10] sm:$0xf]
      %v153 = vld [vmem:[%s1 + $0x14] sm:$0xf]
      %v154 = vld [vmem:[%s1 + $0x18] sm:$0xf]
      %v155 = vld [vmem:[%s1 + $0x1c] sm:$0xf]
      %v156 = vld [vmem:[%s1 + $0x20] sm:$0xf]
      %v157 = vld [vmem:[%s1 + $0x24] sm:$0xf]
      %v158 = vld [vmem:[%s1 + $0x28] sm:$0xf]
      %v159 = vld [vmem:[%s1 + $0x2c] sm:$0xf]
      %v160 = vld [vmem:[%s1 + $0x30] sm:$0xf]
      %v161 = vld [vmem:[%s1 + $0x34] sm:$0xf]
      %v162 = vld [vmem:[%s1 + $0x38] sm:$0xf]
      %v163 = vld [vmem:[%s1 + $0x3c] sm:$0xf]
      %v164 = vld [vmem:[%s1 + $0x40] sm:$0xf]
      %v165 = vld [vmem:[%s1 + $0x44] sm:$0xf]
      %v166 = vld [vmem:[%s1 + $0x48] sm:$0xf]
      %v167 = vld [vmem:[%s1 + $0x4c] sm:$0xf]
      %v168 = vld [vmem:[%s1 + $0x50] sm:$0xf]
      %v169 = vld [vmem:[%s1 + $0x54] sm:$0xf]
      %v170 = vld [vmem:[%s1 + $0x58] sm:$0xf]
      %v171 = vld [vmem:[%s1 + $0x5c] sm:$0xf]
      %v172 = vld [vmem:[%s1 + $0x60] sm:$0xf]
      %v173 = vld [vmem:[%s1 + $0x64] sm:$0xf]
      %v174 = vld [vmem:[%s1 + $0x68] sm:$0xf]
      %v175 = vld [vmem:[%s1 + $0x6c] sm:$0xf]
      %v176 = vld [vmem:[%s1 + $0x70] sm:$0xf]
      %v177 = vld [vmem:[%s1 + $0x74] sm:$0xf]
      %v178 = vld [vmem:[%s1 + $0x78] sm:$0xf]
      %v179 = vld [vmem:[%s1 + $0x7c] sm:$0xf]
      %v180 = vld [vmem:[%s1 + $0x80] sm:$0xf]
      %v181 = vld [vmem:[%s1 + $0x84] sm:$0xf]
      %v182 = vld [vmem:[%s1 + $0x88] sm:$0xf]
      %v183 = vld [vmem:[%s1 + $0x8c] sm:$0xf]
      %v192 = vunpack.c.l.b16 %v140
      %v193 = vunpack.c.h.b16 %v140
      %v194 = vunpack.c.l.b16 %v141
      %v195 = vunpack.c.l.b16 %v142
      %v196 = vunpack.c.h.b16 %v142
      %v197 = vunpack.c.l.b16 %v143
      %v198 = vunpack.c.l.b16 %v144
      %v199 = vunpack.c.h.b16 %v144
      %v200 = vunpack.c.l.b16 %v145
      %v201 = vunpack.c.l.b16 %v146
      %v202 = vunpack.c.h.b16 %v146
      %v203 = vunpack.c.l.b16 %v147
      %v204 = vpack.c.b16 %v195, %v192
      %v205 = vpack.c.b16 %v196, %v193
      %v206 = vpack.c.b16 %v197, %v194
      %v207 = vpack.c.b16 %v201, %v198
      %v208 = vpack.c.b16 %v202, %v199
      %v209 = vpack.c.b16 %v203, %v200
      %v250 = vunpack.c.l.b16 %v148
      %v251 = vunpack.c.l.b16 %v149
      %v252 = vunpack.c.l.b16 %v150
      %v253 = vunpack.c.l.b16 %v151
      %v254 = vunpack.c.l.b16 %v152
      %v255 = vunpack.c.l.b16 %v153
      %v256 = vunpack.c.l.b16 %v154
      %v257 = vunpack.c.l.b16 %v155
      %v258 = vunpack.c.l.b16 %v156
      %v259 = vunpack.c.l.b16 %v157
      %v260 = vunpack.c.l.b16 %v158
      %v261 = vunpack.c.l.b16 %v159
      %v262 = vunpack.c.l.b16 %v160
      %v263 = vunpack.c.l.b16 %v161
      %v264 = vunpack.c.l.b16 %v162
      %v265 = vunpack.c.l.b16 %v163
      %v266 = vunpack.c.l.b16 %v164
      %v267 = vunpack.c.l.b16 %v165
      %v268 = vunpack.c.l.b16 %v166
      %v269 = vunpack.c.l.b16 %v167
      %v270 = vunpack.c.l.b16 %v168
      %v271 = vunpack.c.l.b16 %v169
      %v272 = vunpack.c.l.b16 %v170
      %v273 = vunpack.c.l.b16 %v171
      %v274 = vunpack.c.l.b16 %v172
      %v275 = vunpack.c.l.b16 %v173
      %v276 = vunpack.c.l.b16 %v174
      %v277 = vunpack.c.l.b16 %v175
      %v278 = vunpack.c.l.b16 %v176
      %v279 = vunpack.c.l.b16 %v177
      %v280 = vunpack.c.l.b16 %v178
      %v281 = vunpack.c.l.b16 %v179
      %v282 = vunpack.c.l.b16 %v180
      %v283 = vunpack.c.l.b16 %v181
      %v284 = vunpack.c.l.b16 %v182
      %v285 = vunpack.c.l.b16 %v183
      %v286 = vpack.c.b16 %v251, %v250
      %v287 = vpack.c.b16 %v253, %v252
      %v288 = vpack.c.b16 %v255, %v254
      %v289 = vpack.c.b16 %v257, %v256
      %v290 = vpack.c.b16 %v259, %v258
      %v291 = vpack.c.b16 %v261, %v260
      %v292 = vpack.c.b16 %v263, %v262
      %v293 = vpack.c.b16 %v265, %v264
      %v294 = vpack.c.b16 %v267, %v266
      %v295 = vpack.c.b16 %v269, %v268
      %v296 = vpack.c.b16 %v271, %v270
      %v297 = vpack.c.b16 %v273, %v272
      %v298 = vpack.c.b16 %v275, %v274
      %v299 = vpack.c.b16 %v277, %v276
      %v300 = vpack.c.b16 %v279, %v278
      %v301 = vpack.c.b16 %v281, %v280
      %v302 = vpack.c.b16 %v283, %v282
      %v303 = vpack.c.b16 %v285, %v284
      %vm322 = vcmask 261120
      %v324 = vsel %vm322, %v206, 0
      %v327 = vsel %vm322, %v209, 0
      %329 = vmatprep.subr.bf16.mxu0 0
      %330 = vmatpush1.bf16.msra.mxu0 %v286
      %331 = vmatprep.subr.bf16.mxu0 0
      %332 = vmatpush1.bf16.msra.mxu0 %v287
      %333 = vmatprep.subr.bf16.mxu0 0
      %334 = vmatpush1.bf16.msra.mxu0 %v288
      %335 = vmatprep.subr.bf16.mxu0 0
      %336 = vmatpush1.bf16.msra.mxu0 %v289
      %337 = vmatprep.subr.bf16.mxu0 0
      %338 = vmatpush1.bf16.msra.mxu0 %v290
      %339 = vmatprep.subr.bf16.mxu0 0
      %340 = vmatpush1.bf16.msra.mxu0 %v291
      %341 = vmatprep.subr.bf16.mxu0 0
      %342 = vmatpush1.bf16.msra.mxu0 %v292
      %343 = vmatprep.subr.bf16.mxu0 0
      %344 = vmatpush1.bf16.msra.mxu0 %v293
      %345 = vmatprep.subr.bf16.mxu0 0
      %346 = vmatpush1.bf16.msra.mxu0 %v294
      %347 = vmatprep.subr.bf16.mxu0 0
      %348 = vmatpush1.bf16.msra.mxu0 %v295
      %349 = vmatprep.subr.bf16.mxu0 0
      %350 = vmatpush1.bf16.msra.mxu0 %v296
      %351 = vmatprep.subr.bf16.mxu0 0
      %352 = vmatpush1.bf16.msra.mxu0 %v297
      %353 = vmatprep.subr.bf16.mxu0 0
      %354 = vmatpush1.bf16.msra.mxu0 %v298
      %355 = vmatprep.subr.bf16.mxu0 0
      %356 = vmatpush1.bf16.msra.mxu0 %v299
      %357 = vmatprep.subr.bf16.mxu0 0
      %358 = vmatpush1.bf16.msra.mxu0 %v300
      %359 = vmatprep.subr.bf16.mxu0 0
      %360 = vmatpush1.bf16.msra.mxu0 %v301
      %361 = vmatprep.mubr.bf16.mxu0 %v205
      %362 = vmatmul.mubr.bf16.gmra.mrb[0].mxu0 %v204
      %v363 = vpop.f32.mrb[0].mxu0
      %v364 = vadd.f32 0.0, %v363
      %v365 = vpop.f32.mrb[0].mxu0
      %v366 = vpop.f32.mrb[0].mxu0
      %v367 = vadd.f32 0.0, %v366
      %v368 = vpop.f32.mrb[0].mxu0
      %369 = vmatprep.mubr.bf16.mxu0 %v208
      %370 = vmatmul.mubr.bf16.gmra.mrb[0].mxu0 %v207
      %v371 = vpop.f32.mrb[0].mxu0
      %v372 = vadd.f32 0.0, %v371
      %v373 = vpop.f32.mrb[0].mxu0
      %v374 = vpop.f32.mrb[0].mxu0
      %v375 = vadd.f32 0.0, %v374
      %v376 = vpop.f32.mrb[0].mxu0
      %377 = vdwg.mxu0
      %378 = vmatprep.subr.bf16.mxu0 0
      %379 = vmatpush1.bf16.msra.mxu0 %v302
      %380 = vmatprep.subr.bf16.mxu0 0
      %381 = vmatpush1.bf16.msra.mxu0 %v303
      %382 = vmatprep.subr.bf16.mxu0 0
      %383 = vmatpush1.bf16.msra.mxu0 0
      %384 = vmatprep.subr.bf16.mxu0 0
      %385 = vmatpush1.bf16.msra.mxu0 0
      %386 = vmatprep.subr.bf16.mxu0 0
      %387 = vmatpush1.bf16.msra.mxu0 0
      %388 = vmatprep.subr.bf16.mxu0 0
      %389 = vmatpush1.bf16.msra.mxu0 0
      %390 = vmatprep.subr.bf16.mxu0 0
      %391 = vmatpush1.bf16.msra.mxu0 0
      %392 = vmatprep.subr.bf16.mxu0 0
      %393 = vmatpush1.bf16.msra.mxu0 0
      %394 = vmatprep.subr.bf16.mxu0 0
      %395 = vmatpush1.bf16.msra.mxu0 0
      %396 = vmatprep.subr.bf16.mxu0 0
      %397 = vmatpush1.bf16.msra.mxu0 0
      %398 = vmatprep.subr.bf16.mxu0 0
      %399 = vmatpush1.bf16.msra.mxu0 0
      %400 = vmatprep.subr.bf16.mxu0 0
      %401 = vmatpush1.bf16.msra.mxu0 0
      %402 = vmatprep.subr.bf16.mxu0 0
      %403 = vmatpush1.bf16.msra.mxu0 0
      %404 = vmatprep.subr.bf16.mxu0 0
      %405 = vmatpush1.bf16.msra.mxu0 0
      %406 = vmatprep.subr.bf16.mxu0 0
      %407 = vmatpush1.bf16.msra.mxu0 0
      %408 = vmatprep.subr.bf16.mxu0 0
      %409 = vmatpush1.bf16.msra.mxu0 0
      %410 = vmatprep.mubr.bf16.mxu0 0
      %411 = vmatmul.mubr.bf16.gmra.mrb[0].mxu0 %v324
      %v412 = vpop.f32.mrb[0].mxu0
      %v413 = vadd.f32 %v364, %v412
      %v414 = vpop.f32.mrb[0].mxu0
      %v415 = vpop.f32.mrb[0].mxu0
      %v416 = vadd.f32 %v367, %v415
      %v417 = vpop.f32.mrb[0].mxu0
      %418 = vmatprep.mubr.bf16.mxu0 0
      %419 = vmatmul.mubr.bf16.gmra.mrb[0].mxu0 %v327
      %v420 = vpop.f32.mrb[0].mxu0
      %v421 = vadd.f32 %v372, %v420
      %v422 = vpop.f32.mrb[0].mxu0
      %v423 = vpop.f32.mrb[0].mxu0
      %v424 = vadd.f32 %v375, %v423
      %v425 = vpop.f32.mrb[0].mxu0
      %426 = vdwg.mxu0
      %v427 = vadd.f32 %v413, %v416
      %v428 = vadd.f32 %v427, %v421
      %v429 = vadd.f32 %v428, %v424
      %v430 = vrot.slane %v429, 4
      %v431 = vadd.f32 %v429, %v430
      %v432 = vrot.slane %v431, 2
      %v433 = vadd.f32 %v431, %v432
      %v434 = vrot.slane %v433, 1
      %v435 = vadd.f32 %v433, %v434
      %v436 = vmul.f32 %v413, %v413
      %v437 = vmul.f32 %v416, %v416
      %v438 = vmul.f32 %v421, %v421
      %v439 = vmul.f32 %v424, %v424
      %v440 = vadd.f32 %v436, %v437
      %v441 = vadd.f32 %v440, %v438
      %v442 = vadd.f32 %v441, %v439
      %v443 = vrot.slane %v442, 4
      %v444 = vadd.f32 %v442, %v443
      %v445 = vrot.slane %v444, 2
      %v446 = vadd.f32 %v444, %v445
      %v447 = vrot.slane %v446, 1
      %v448 = vadd.f32 %v446, %v447
      %v449 = vld [vmem:[%s2] sm:$0xff]
      %vm450 = vcmask 1040384
      %v451 = vsel %vm450, %v435, %v448
      %vm452 = vcmask 1041408
      %v453 = vsel %vm452, %v451, 0.0
      %v454 = vadd.f32 %v449, %v453
      %455 = vst [vmem:[%s2] sm:$0xff] %v454
      // Predicated region
      $region33: #{srm_pixel_attention.7} parent=27 // pred_check
        %p456 = pneg %p73
      $region34: #{srm_pixel_attention.7} parent=27 // pred_check_branch
        %458 = sbr.rel (%p456) target = $region36
      $region35: #{srm_pixel_attention.7} parent=27 // pred_region
        _
      $region36: #{srm_pixel_attention.7} parent=27 // pred_fallthru
        _
      // Predicated region
      $region37: #{srm_pixel_attention.7} parent=27 // pred_check
        %p459 = pneg %p73
      $region38: #{srm_pixel_attention.7} parent=27 // pred_check_branch
        %461 = sbr.rel (%p459) target = $region40
      $region39: #{srm_pixel_attention.7} parent=27 // pred_region
        _
      $region40: #{srm_pixel_attention.7} parent=27 // pred_fallthru
        _
    $region28: #{srm_pixel_attention.7} parent=5 // pred_fallthru
      _
    %p462 = scmp.le.s32.totalorder 2, %s8
    // Predicated region
    $region41: #{srm_pixel_attention.7} parent=5 // pred_check
      %p463 = pneg %p462
    $region42: #{srm_pixel_attention.7} parent=5 // pred_check_branch
      %465 = sbr.rel (%p463) target = $region44
    $region43: #{srm_pixel_attention.7} parent=5 // pred_region
      %s466 = ssub.s32 %s8, 2
    $region44: #{srm_pixel_attention.7} parent=5 // pred_fallthru
      _
  $region6: #{srm_pixel_attention.7} parent=0 // loop_footer
    %s12 = sadd.s32 1, %s8
  $region7: #{srm_pixel_attention.7} parent=0 // loop_footer_branch
    %7 = sbr.rel target = $region3
  $region8: #{srm_pixel_attention.7} parent=0 // loop_exit
    _

// kernel: srm_pixel_attention.9
$region0: #{srm_pixel_attention.9}
  #allocation0 [shape = 'u32[]', space=smem, size = 0x4, offset = 0x4, fixed_abs, tag = 'smem constant byte address 0x4 - core index']
  #allocation1 [shape = 'u32[144,128]{1,0:T(1,128)}', space=vmem, size = 0x12000, scoped, tag = 'internal scratch']
  %s0 = inlined_call_operand.vmem [shape: f32[98], index: 0, kind: input, shape index: {}]
  %s1 = inlined_call_operand.vmem [shape: f32[2,2,11,11], index: 1, kind: input, shape index: {}]
  %s2 = inlined_call_operand.vmem [shape: f32[2,5,5], index: 2, kind: output, shape index: {}]
  %s3 = sld [smem:[#allocation0]]
  $region45: #{srm_pixel_attention.9} parent=0
    _
  %s5 = ssub.s32 1, %s3
  %s6 = scalar_select 0, %s5, %s3
  $region1: #{srm_pixel_attention.9} parent=0
    #allocation2 [shape = 'u8[512]{0}', space=smem, size = 0x200, scoped, tag = 'input window, operand 0, single buffered']
    #allocation3 [shape = 's32[2]{0}', space=sflag, size = 0x8, scoped, tag = 'scoped memory for srm_pixel_attention.9']
    %7 = vsyncpa [#allocation3], 0
    loop: start=0, step=1, limit=4
    $region2: #{srm_pixel_attention.9} parent=1 // loop_pre_header
      _
    $region3: #{srm_pixel_attention.9} parent=1 // loop_header
      %s9 = sphi 0, %s13
      %p10 = scmp.ge.s32.totalorder %s9, 4
      %s17 = sphi 0, %s17
      %s19 = sphi 0, %s17
      %s20 = sphi 0, %s19
      %s34 = sphi 0, %s20
      %s40 = sphi 0, %s42
      %s43 = sphi 0, %s40
      %s44 = sphi 0, %s43
      %s60 = sphi 0, %s44
      %s66 = sphi 0, %s68
      %s69 = sphi 0, %s66
      %s70 = sphi 0, %s69
      %s86 = sphi 0, %s70
    $region4: #{srm_pixel_attention.9} parent=1 // loop_header_branch
      %12 = sbr.rel (%p10) target = $region8
    $region5: #{srm_pixel_attention.9} parent=1 // loop_body
      %s14 = ssub.s32 %s9, 1
      %s15 = ssub.s32 %s9, 2
      %s16 = sadd.s32 %s9, 1
      %s18 = sadd.s32 %s17, 1
      %p21 = scmp.eq.s32.totalorder %s9, 1
      %p22 = scmp.ne.s32.totalorder %s17, %s19
      %p23 = scmp.eq.s32.totalorder %s9, 0
      %p24 = por %p22, %p23
      %p25 = scmp.ne.s32.totalorder %s17, %s19
      %p26 = scmp.eq.s32.totalorder %s14, 1
      %p27 = por %p25, %p26
      %p28 = scmp.ne.s32.totalorder %s19, %s20
      %p29 = scmp.eq.s32.totalorder %s14, 0
      %p30 = por %p28, %p29
      %p31 = scmp.ne.s32.totalorder %s19, %s20
      %p32 = scmp.eq.s32.totalorder %s15, 1
      %p33 = por %p31, %p32
      %p35 = scmp.ne.s32.totalorder %s20, %s34
      %p36 = scmp.eq.s32.totalorder %s15, 0
      %p37 = por %p35, %p36
      %s38 = ssub.s32 %s9, %s16
      %p39 = scmp.eq.s32.totalorder %s38, 0
      %s41 = sadd.s32 %s40, 1
      %s42 = scalar_select %p39, %s40, %s41
      %p45 = pneg %p39
      %p46 = scmp.eq.s32.totalorder %s9, 1
      %p47 = por %p45, %p46
      %p48 = scmp.ne.s32.totalorder %s40, %s43
      %p49 = scmp.eq.s32.totalorder %s9, 0
      %p50 = por %p48, %p49
      %p51 = scmp.ne.s32.totalorder %s40, %s43
      %p52 = scmp.eq.s32.totalorder %s14, 1
      %p53 = por %p51, %p52
      %p54 = scmp.ne.s32.totalorder %s43, %s44
      %p55 = scmp.eq.s32.totalorder %s14, 0
      %p56 = por %p54, %p55
      %p57 = scmp.ne.s32.totalorder %s43, %s44
      %p58 = scmp.eq.s32.totalorder %s15, 1
      %p59 = por %p57, %p58
      %p61 = scmp.ne.s32.totalorder %s44, %s60
      %p62 = scmp.eq.s32.totalorder %s15, 0
      %p63 = por %p61, %p62
      %s64 = ssub.s32 %s9, %s16
      %p65 = scmp.eq.s32.totalorder %s64, 0
      %s67 = sadd.s32 %s66, 1
      %s68 = scalar_select %p65, %s66, %s67
      %p71 = pneg %p65
      %p72 = scmp.eq.s32.totalorder %s9, 1
      %p73 = por %p71, %p72
      %p74 = scmp.ne.s32.totalorder %s66, %s69
      %p75 = scmp.eq.s32.totalorder %s9, 0
      %p76 = por %p74, %p75
      %p77 = scmp.ne.s32.totalorder %s66, %s69
      %p78 = scmp.eq.s32.totalorder %s14, 1
      %p79 = por %p77, %p78
      %p80 = scmp.ne.s32.totalorder %s69, %s70
      %p81 = scmp.eq.s32.totalorder %s14, 0
      %p82 = por %p80, %p81
      %p83 = scmp.ne.s32.totalorder %s69, %s70
      %p84 = scmp.eq.s32.totalorder %s15, 1
      %p85 = por %p83, %p84
      %p87 = scmp.ne.s32.totalorder %s70, %s86
      %p88 = scmp.eq.s32.totalorder %s15, 0
      %p89 = por %p87, %p88
      %p90 = scmp.le.s32.totalorder 1, %s9
      %p91 = scmp.lt.s32.totalorder %s9, 3
      %p92 = pnand %p90, %p91
      %p93 = pneg %p92
      // Predicated region
      $region9: #{srm_pixel_attention.9} parent=5 // pred_check
        _
      $region10: #{srm_pixel_attention.9} parent=5 // pred_check_branch
        %95 = sbr.rel (%p92) target = $region12
      $region11: #{srm_pixel_attention.9} parent=5 // pred_region
        %s96 = ssub.s32 %s9, 1
        // Predicated region
        $region13: #{srm_pixel_attention.9} parent=11 // pred_check
          %p97 = pneg %p30
        $region14: #{srm_pixel_attention.9} parent=11 // pred_check_branch
          %99 = sbr.rel (%p97) target = $region16
        $region15: #{srm_pixel_attention.9} parent=11 // pred_region
          %s101 = ssub.s32 16, 16
          %102 = vsyncadd [#allocation3], %s101
          %s104 = sshll.u32 %s0, 4
          %s105 = int_to_ptr.vmem [resolvable:$true] %s104
          %107 = dma.vmem_to_smem %s105, 16, [#allocation2], [#allocation3]
        $region16: #{srm_pixel_attention.9} parent=11 // pred_fallthru
          _
      $region12: #{srm_pixel_attention.9} parent=5 // pred_fallthru
        _
      %p108 = scmp.lt.s32.totalorder %s9, 2
      // Predicated region
      $region17: #{srm_pixel_attention.9} parent=5 // pred_check
        %p109 = pneg %p108
      $region18: #{srm_pixel_attention.9} parent=5 // pred_check_branch
        %111 = sbr.rel (%p109) target = $region20
      $region19: #{srm_pixel_attention.9} parent=5 // pred_region
        // Predicated region
        $region21: #{srm_pixel_attention.9} parent=19 // pred_check
          %p112 = pneg %p50
        $region22: #{srm_pixel_attention.9} parent=19 // pred_check_branch
          %114 = sbr.rel (%p112) target = $region24
        $region23: #{srm_pixel_attention.9} parent=19 // pred_region
          %p115 = scmp.lt.s32.totalorder %s9, 1
          %s116 = scalar_select %p115, %s9, 1
          %s117 = smul.addr %s116, 4
          %s118 = smul.addr %s117, 8
          %s119 = scalar_lea.vmem %s1, %s118
        $region24: #{srm_pixel_attention.9} parent=19 // pred_fallthru
          _
      $region20: #{srm_pixel_attention.9} parent=5 // pred_fallthru
        _
      %p120 = scmp.le.s32.totalorder 1, %s9
      %p121 = scmp.lt.s32.totalorder %s9, 3
      %p122 = pnand %p120, %p121
      %p123 = pneg %p122
      // Predicated region
      $region25: #{srm_pixel_attention.9} parent=5 // pred_check
        _
      $region26: #{srm_pixel_attention.9} parent=5 // pred_check_branch
        %125 = sbr.rel (%p122) target = $region28
      $region27: #{srm_pixel_attention.9} parent=5 // pred_region
        %s126 = ssub.s32 %s9, 1
        // Predicated region
        $region29: #{srm_pixel_attention.9} parent=27 // pred_check
          %p127 = pneg %p30
        $region30: #{srm_pixel_attention.9} parent=27 // pred_check_branch
          %129 = sbr.rel (%p127) target = $region32
        $region31: #{srm_pixel_attention.9} parent=27 // pred_region
          %130 = dma.done [#allocation3], 16
        $region32: #{srm_pixel_attention.9} parent=27 // pred_fallthru
          _
        %131 = sfence
        %p132 = pneg %p30
        %p133 = pneg %p27
        %p134 = scmp.lt.s32.totalorder %s14, 1
        %s135 = scalar_select %p134, %s14, 1
        %s136 = smul.addr %s135, 4
        %s137 = smul.addr %s136, 8
        %s138 = scalar_lea.vmem %s1, %s137
        %p139 = pneg %p56
        %p140 = pneg %p53
        %p141 = pneg %p82
        %p142 = pneg %p79
        %p143 = scmp.lt.s32.totalorder %s14, 1
        %s144 = scalar_select %p143, %s14, 1
        %s145 = smul.addr %s144, 8
        %s146 = scalar_lea.vmem %s2, %s145
        %p147 = scmp.lt.s32.totalorder %s14, 1
        %s148 = scalar_select %p147, %s14, 1
        %s149 = smul.addr %s148, 4
        %s150 = smul.addr %s149, 8
        %s151 = scalar_lea.vmem %s1, %s150
        %p152 = scmp.lt.s32.totalorder %s14, 1
        %s153 = scalar_select %p152, %s14, 1
        %s154 = smul.addr %s153, 8
        %s155 = scalar_lea.vmem %s2, %s154
        %v156 = vld [vmem:[%s151] sm:$0xff]
        %v157 = vld [vmem:[%s151 + $0x8] sm:$0x7]
        %s158 = sld [smem:[#allocation2]]
        %v159 = vstv %s158
        %v160 = vmul.f32 %v159, %v156
        %v161 = vadd.f32 %v160, 0.0
        %s162 = sld [smem:[#allocation2 + $0x1]]
        %v163 = vstv %s162
        %v164 = vmul.f32 %v163, %v156
        %166 = vrot.lane.b32.xlu0 %v164, 127
        %v167 = vpop.permute.xlu0 %166
        %v169 = vadd.f32 %v161, %v167
        %s170 = sld [smem:[#allocation2 + $0x2]]
        %v171 = vstv %s170
        %v172 = vmul.f32 %v171, %v156
        %174 = vrot.lane.b32.xlu0 %v172, 126
        %v175 = vpop.permute.xlu0 %174
        %v177 = vadd.f32 %v169, %v175
        %s178 = sld [smem:[#allocation2 + $0x3]]
        %v179 = vstv %s178
        %v180 = vmul.f32 %v179, %v156
        %182 = vrot.lane.b32.xlu0 %v180, 125
        %v183 = vpop.permute.xlu0 %182
        %v185 = vadd.f32 %v177, %v183
        %s186 = sld [smem:[#allocation2 + $0x4]]
        %v187 = vstv %s186
        %v188 = vmul.f32 %v187, %v156
        %190 = vrot.lane.b32.xlu0 %v188, 124
        %v191 = vpop.permute.xlu0 %190
        %v193 = vadd.f32 %v185, %v191
        %s194 = sld [smem:[#allocation2 + $0x5]]
        %v195 = vstv %s194
        %v196 = vmul.f32 %v195, %v156
        %198 = vrot.lane.b32.xlu0 %v196, 123
        %v199 = vpop.permute.xlu0 %198
        %v201 = vadd.f32 %v193, %v199
        %s202 = sld [smem:[#allocation2 + $0x6]]
        %v203 = vstv %s202
        %v204 = vmul.f32 %v203, %v156
        %206 = vrot.lane.b32.xlu0 %v204, 122
        %v207 = vpop.permute.xlu0 %206
        %v209 = vadd.f32 %v201, %v207
        %s210 = sld [smem:[#allocation2 + $0x7]]
        %v211 = vstv %s210
        %v212 = vmul.f32 %v211, %v156
        %v214 = vrot.slane %v212, 1
        %v216 = vadd.f32 %v209, %v214
        %s217 = sld [smem:[#allocation2 + $0x8]]
        %v218 = vstv %s217
        %v219 = vmul.f32 %v218, %v156
        %v221 = vrot.slane %v219, 1
        %222 = vrot.lane.b32.xlu0 %v221, 127
        %v223 = vpop.permute.xlu0 %222
        %v225 = vadd.f32 %v216, %v223
        %s226 = sld [smem:[#allocation2 + $0x9]]
        %v227 = vstv %s226
        %v228 = vmul.f32 %v227, %v156
        %v230 = vrot.slane %v228, 1
        %231 = vrot.lane.b32.xlu0 %v230, 126
        %v232 = vpop.permute.xlu0 %231
        %v234 = vadd.f32 %v225, %v232
        %s235 = sld [smem:[#allocation2 + $0xa]]
        %v236 = vstv %s235
        %v237 = vmul.f32 %v236, %v156
        %v239 = vrot.slane %v237, 1
        %240 = vrot.lane.b32.xlu0 %v239, 125
        %v241 = vpop.permute.xlu0 %240
        %v243 = vadd.f32 %v234, %v241
        %s244 = sld [smem:[#allocation2 + $0xb]]
        %v245 = vstv %s244
        %v246 = vmul.f32 %v245, %v156
        %v248 = vrot.slane %v246, 1
        %249 = vrot.lane.b32.xlu0 %v248, 124
        %v250 = vpop.permute.xlu0 %249
        %v252 = vadd.f32 %v243, %v250
        %s253 = sld [smem:[#allocation2 + $0xc]]
        %v254 = vstv %s253
        %v255 = vmul.f32 %v254, %v156
        %v257 = vrot.slane %v255, 1
        %258 = vrot.lane.b32.xlu0 %v257, 123
        %v259 = vpop.permute.xlu0 %258
        %v261 = vadd.f32 %v252, %v259
        %s262 = sld [smem:[#allocation2 + $0xd]]
        %v263 = vstv %s262
        %v264 = vmul.f32 %v263, %v156
        %v266 = vrot.slane %v264, 1
        %267 = vrot.lane.b32.xlu0 %v266, 122
        %v268 = vpop.permute.xlu0 %267
        %v270 = vadd.f32 %v261, %v268
        %s271 = sld [smem:[#allocation2 + $0xe]]
        %v272 = vstv %s271
        %v273 = vmul.f32 %v272, %v156
        %v275 = vrot.slane %v273, 2
        %v277 = vadd.f32 %v270, %v275
        %s278 = sld [smem:[#allocation2 + $0xf]]
        %v279 = vstv %s278
        %v280 = vmul.f32 %v279, %v156
        %v282 = vrot.slane %v280, 2
        %283 = vrot.lane.b32.xlu0 %v282, 127
        %v284 = vpop.permute.xlu0 %283
        %v286 = vadd.f32 %v277, %v284
        %s287 = sld [smem:[#allocation2 + $0x10]]
        %v288 = vstv %s287
        %v289 = vmul.f32 %v288, %v156
        %v291 = vrot.slane %v289, 2
        %292 = vrot.lane.b32.xlu0 %v291, 126
        %v293 = vpop.permute.xlu0 %292
        %v295 = vadd.f32 %v286, %v293
        %s296 = sld [smem:[#allocation2 + $0x11]]
        %v297 = vstv %s296
        %v298 = vmul.f32 %v297, %v156
        %v300 = vrot.slane %v298, 2
        %301 = vrot.lane.b32.xlu0 %v300, 125
        %v302 = vpop.permute.xlu0 %301
        %v304 = vadd.f32 %v295, %v302
        %s305 = sld [smem:[#allocation2 + $0x12]]
        %v306 = vstv %s305
        %v307 = vmul.f32 %v306, %v156
        %v309 = vrot.slane %v307, 2
        %310 = vrot.lane.b32.xlu0 %v309, 124
        %v311 = vpop.permute.xlu0 %310
        %v313 = vadd.f32 %v304, %v311
        %s314 = sld [smem:[#allocation2 + $0x13]]
        %v315 = vstv %s314
        %v316 = vmul.f32 %v315, %v156
        %v318 = vrot.slane %v316, 2
        %319 = vrot.lane.b32.xlu0 %v318, 123
        %v320 = vpop.permute.xlu0 %319
        %v322 = vadd.f32 %v313, %v320
        %s323 = sld [smem:[#allocation2 + $0x14]]
        %v324 = vstv %s323
        %v325 = vmul.f32 %v324, %v156
        %v327 = vrot.slane %v325, 2
        %328 = vrot.lane.b32.xlu0 %v327, 122
        %v329 = vpop.permute.xlu0 %328
        %v331 = vadd.f32 %v322, %v329
        %s332 = sld [smem:[#allocation2 + $0x15]]
        %v333 = vstv %s332
        %v334 = vmul.f32 %v333, %v156
        %v336 = vrot.slane %v334, 3
        %v338 = vadd.f32 %v331, %v336
        %s339 = sld [smem:[#allocation2 + $0x16]]
        %v340 = vstv %s339
        %v341 = vmul.f32 %v340, %v156
        %v343 = vrot.slane %v341, 3
        %344 = vrot.lane.b32.xlu0 %v343, 127
        %v345 = vpop.permute.xlu0 %344
        %v347 = vadd.f32 %v338, %v345
        %s348 = sld [smem:[#allocation2 + $0x17]]
        %v349 = vstv %s348
        %v350 = vmul.f32 %v349, %v156
        %v352 = vrot.slane %v350, 3
        %353 = vrot.lane.b32.xlu0 %v352, 126
        %v354 = vpop.permute.xlu0 %353
        %v356 = vadd.f32 %v347, %v354
        %s357 = sld [smem:[#allocation2 + $0x18]]
        %v358 = vstv %s357
        %v359 = vmul.f32 %v358, %v156
        %v361 = vrot.slane %v359, 3
        %362 = vrot.lane.b32.xlu0 %v361, 125
        %v363 = vpop.permute.xlu0 %362
        %v365 = vadd.f32 %v356, %v363
        %s366 = sld [smem:[#allocation2 + $0x19]]
        %v367 = vstv %s366
        %v368 = vmul.f32 %v367, %v156
        %v370 = vrot.slane %v368, 3
        %371 = vrot.lane.b32.xlu0 %v370, 124
        %v372 = vpop.permute.xlu0 %371
        %v374 = vadd.f32 %v365, %v372
        %s375 = sld [smem:[#allocation2 + $0x1a]]
        %v376 = vstv %s375
        %v377 = vmul.f32 %v376, %v156
        %v379 = vrot.slane %v377, 3
        %380 = vrot.lane.b32.xlu0 %v379, 123
        %v381 = vpop.permute.xlu0 %380
        %v383 = vadd.f32 %v374, %v381
        %s384 = sld [smem:[#allocation2 + $0x1b]]
        %v385 = vstv %s384
        %v386 = vmul.f32 %v385, %v156
        %v388 = vrot.slane %v386, 3
        %389 = vrot.lane.b32.xlu0 %v388, 122
        %v390 = vpop.permute.xlu0 %389
        %v392 = vadd.f32 %v383, %v390
        %s393 = sld [smem:[#allocation2 + $0x1c]]
        %v394 = vstv %s393
        %v395 = vmul.f32 %v394, %v156
        %v396 = vmul.f32 %v394, %v157
        %vm399 = vcmask 1043456
        %v400 = vrot.slane %v395, 4
        %v401 = vrot.slane %v396, 4
        %v402 = vsel %vm399, %v400, %v401
        %v404 = vadd.f32 %v392, %v402
        %s405 = sld [smem:[#allocation2 + $0x1d]]
        %v406 = vstv %s405
        %v407 = vmul.f32 %v406, %v156
        %v408 = vmul.f32 %v406, %v157
        %v411 = vrot.slane %v407, 4
        %v412 = vrot.slane %v408, 4
        %v413 = vsel %vm399, %v411, %v412
        %414 = vrot.lane.b32.xlu0 %v413, 127
        %v415 = vpop.permute.xlu0 %414
        %v417 = vadd.f32 %v404, %v415
        %s418 = sld [smem:[#allocation2 + $0x1e]]
        %v419 = vstv %s418
        %v420 = vmul.f32 %v419, %v156
        %v421 = vmul.f32 %v419, %v157
        %v424 = vrot.slane %v420, 4
        %v425 = vrot.slane %v421, 4
        %v426 = vsel %vm399, %v424, %v425
        %427 = vrot.lane.b32.xlu0 %v426, 126
        %v428 = vpop.permute.xlu0 %427
        %v430 = vadd.f32 %v417, %v428
        %s431 = sld [smem:[#allocation2 + $0x1f]]
        %v432 = vstv %s431
        %v433 = vmul.f32 %v432, %v156
        %v434 = vmul.f32 %v432, %v157
        %v437 = vrot.slane %v433, 4
        %v438 = vrot.slane %v434, 4
        %v439 = vsel %vm399, %v437, %v438
        %440 = vrot.lane.b32.xlu0 %v439, 125
        %v441 = vpop.permute.xlu0 %440
        %v443 = vadd.f32 %v430, %v441
        %s444 = sld [smem:[#allocation2 + $0x20]]
        %v445 = vstv %s444
        %v446 = vmul.f32 %v445, %v156
        %v447 = vmul.f32 %v445, %v157
        %v450 = vrot.slane %v446, 4
        %v451 = vrot.slane %v447, 4
        %v452 = vsel %vm399, %v450, %v451
        %453 = vrot.lane.b32.xlu0 %v452, 124
        %v454 = vpop.permute.xlu0 %453
        %v456 = vadd.f32 %v443, %v454
        %s457 = sld [smem:[#allocation2 + $0x21]]
        %v458 = vstv %s457
        %v459 = vmul.f32 %v458, %v156
        %v460 = vmul.f32 %v458, %v157
        %v463 = vrot.slane %v459, 4
        %v464 = vrot.slane %v460, 4
        %v465 = vsel %vm399, %v463, %v464
        %466 = vrot.lane.b32.xlu0 %v465, 123
        %v467 = vpop.permute.xlu0 %466
        %v469 = vadd.f32 %v456, %v467
        %s470 = sld [smem:[#allocation2 + $0x22]]
        %v471 = vstv %s470
        %v472 = vmul.f32 %v471, %v156
        %v473 = vmul.f32 %v471, %v157
        %v476 = vrot.slane %v472, 4
        %v477 = vrot.slane %v473, 4
        %v478 = vsel %vm399, %v476, %v477
        %479 = vrot.lane.b32.xlu0 %v478, 122
        %v480 = vpop.permute.xlu0 %479
        %v482 = vadd.f32 %v469, %v480
        %s483 = sld [smem:[#allocation2 + $0x23]]
        %v484 = vstv %s483
        %v485 = vmul.f32 %v484, %v156
        %v486 = vmul.f32 %v484, %v157
        %vm489 = vcmask 1042432
        %v490 = vrot.slane %v485, 5
        %v491 = vrot.slane %v486, 5
        %v492 = vsel %vm489, %v490, %v491
        %v494 = vadd.f32 %v482, %v492
        %s495 = sld [smem:[#allocation2 + $0x24]]
        %v496 = vstv %s495
        %v497 = vmul.f32 %v496, %v156
        %v498 = vmul.f32 %v496, %v157
        %v501 = vrot.slane %v497, 5
        %v502 = vrot.slane %v498, 5
        %v503 = vsel %vm489, %v501, %v502
        %504 = vrot.lane.b32.xlu0 %v503, 127
        %v505 = vpop.permute.xlu0 %504
        %v507 = vadd.f32 %v494, %v505
        %s508 = sld [smem:[#allocation2 + $0x25]]
        %v509 = vstv %s508
        %v510 = vmul.f32 %v509, %v156
        %v511 = vmul.f32 %v509, %v157
        %v514 = vrot.slane %v510, 5
        %v515 = vrot.slane %v511, 5
        %v516 = vsel %vm489, %v514, %v515
        %517 = vrot.lane.b32.xlu0 %v516, 126
        %v518 = vpop.permute.xlu0 %517
        %v520 = vadd.f32 %v507, %v518
        %s521 = sld [smem:[#allocation2 + $0x26]]
        %v522 = vstv %s521
        %v523 = vmul.f32 %v522, %v156
        %v524 = vmul.f32 %v522, %v157
        %v527 = vrot.slane %v523, 5
        %v528 = vrot.slane %v524, 5
        %v529 = vsel %vm489, %v527, %v528
        %530 = vrot.lane.b32.xlu0 %v529, 125
        %v531 = vpop.permute.xlu0 %530
        %v533 = vadd.f32 %v520, %v531
        %s534 = sld [smem:[#allocation2 + $0x27]]
        %v535 = vstv %s534
        %v536 = vmul.f32 %v535, %v156
        %v537 = vmul.f32 %v535, %v157
        %v540 = vrot.slane %v536, 5
        %v541 = vrot.slane %v537, 5
        %v542 = vsel %vm489, %v540, %v541
        %543 = vrot.lane.b32.xlu0 %v542, 124
        %v544 = vpop.permute.xlu0 %543
        %v546 = vadd.f32 %v533, %v544
        %s547 = sld [smem:[#allocation2 + $0x28]]
        %v548 = vstv %s547
        %v549 = vmul.f32 %v548, %v156
        %v550 = vmul.f32 %v548, %v157
        %v553 = vrot.slane %v549, 5
        %v554 = vrot.slane %v550, 5
        %v555 = vsel %vm489, %v553, %v554
        %556 = vrot.lane.b32.xlu0 %v555, 123
        %v557 = vpop.permute.xlu0 %556
        %v559 = vadd.f32 %v546, %v557
        %s560 = sld [smem:[#allocation2 + $0x29]]
        %v561 = vstv %s560
        %v562 = vmul.f32 %v561, %v156
        %v563 = vmul.f32 %v561, %v157
        %v566 = vrot.slane %v562, 5
        %v567 = vrot.slane %v563, 5
        %v568 = vsel %vm489, %v566, %v567
        %569 = vrot.lane.b32.xlu0 %v568, 122
        %v570 = vpop.permute.xlu0 %569
        %v572 = vadd.f32 %v559, %v570
        %s573 = sld [smem:[#allocation2 + $0x2a]]
        %v574 = vstv %s573
        %v575 = vmul.f32 %v574, %v156
        %v576 = vmul.f32 %v574, %v157
        %vm579 = vcmask 1041408
        %v580 = vrot.slane %v575, 6
        %v581 = vrot.slane %v576, 6
        %v582 = vsel %vm579, %v580, %v581
        %v584 = vadd.f32 %v572, %v582
        %s585 = sld [smem:[#allocation2 + $0x2b]]
        %v586 = vstv %s585
        %v587 = vmul.f32 %v586, %v156
        %v588 = vmul.f32 %v586, %v157
        %v591 = vrot.slane %v587, 6
        %v592 = vrot.slane %v588, 6
        %v593 = vsel %vm579, %v591, %v592
        %594 = vrot.lane.b32.xlu0 %v593, 127
        %v595 = vpop.permute.xlu0 %594
        %v597 = vadd.f32 %v584, %v595
        %s598 = sld [smem:[#allocation2 + $0x2c]]
        %v599 = vstv %s598
        %v600 = vmul.f32 %v599, %v156
        %v601 = vmul.f32 %v599, %v157
        %v604 = vrot.slane %v600, 6
        %v605 = vrot.slane %v601, 6
        %v606 = vsel %vm579, %v604, %v605
        %607 = vrot.lane.b32.xlu0 %v606, 126
        %v608 = vpop.permute.xlu0 %607
        %v610 = vadd.f32 %v597, %v608
        %s611 = sld [smem:[#allocation2 + $0x2d]]
        %v612 = vstv %s611
        %v613 = vmul.f32 %v612, %v156
        %v614 = vmul.f32 %v612, %v157
        %v617 = vrot.slane %v613, 6
        %v618 = vrot.slane %v614, 6
        %v619 = vsel %vm579, %v617, %v618
        %620 = vrot.lane.b32.xlu0 %v619, 125
        %v621 = vpop.permute.xlu0 %620
        %v623 = vadd.f32 %v610, %v621
        %s624 = sld [smem:[#allocation2 + $0x2e]]
        %v625 = vstv %s624
        %v626 = vmul.f32 %v625, %v156
        %v627 = vmul.f32 %v625, %v157
        %v630 = vrot.slane %v626, 6
        %v631 = vrot.slane %v627, 6
        %v632 = vsel %vm579, %v630, %v631
        %633 = vrot.lane.b32.xlu0 %v632, 124
        %v634 = vpop.permute.xlu0 %633
        %v636 = vadd.f32 %v623, %v634
        %s637 = sld [smem:[#allocation2 + $0x2f]]
        %v638 = vstv %s637
        %v639 = vmul.f32 %v638, %v156
        %v640 = vmul.f32 %v638, %v157
        %v643 = vrot.slane %v639, 6
        %v644 = vrot.slane %v640, 6
        %v645 = vsel %vm579, %v643, %v644
        %646 = vrot.lane.b32.xlu0 %v645, 123
        %v647 = vpop.permute.xlu0 %646
        %v649 = vadd.f32 %v636, %v647
        %s650 = sld [smem:[#allocation2 + $0x30]]
        %v651 = vstv %s650
        %v652 = vmul.f32 %v651, %v156
        %v653 = vmul.f32 %v651, %v157
        %v656 = vrot.slane %v652, 6
        %v657 = vrot.slane %v653, 6
        %v658 = vsel %vm579, %v656, %v657
        %659 = vrot.lane.b32.xlu0 %v658, 122
        %v660 = vpop.permute.xlu0 %659
        %v662 = vadd.f32 %v649, %v660
        %s663 = scalar_lea.vmem %s151, 16
        %v664 = vld [vmem:[%s663] sm:$0xff]
        %v665 = vld [vmem:[%s663 + $0x8] sm:$0x7]
        %s666 = sld [smem:[#allocation2 + $0x31]]
        %v667 = vstv %s666
        %v668 = vmul.f32 %v667, %v664
        %v669 = vadd.f32 %v662, %v668
        %s670 = sld [smem:[#allocation2 + $0x32]]
        %v671 = vstv %s670
        %v672 = vmul.f32 %v671, %v664
        %674 = vrot.lane.b32.xlu0 %v672, 127
        %v675 = vpop.permute.xlu0 %674
        %v677 = vadd.f32 %v669, %v675
        %s678 = sld [smem:[#allocation2 + $0x33]]
        %v679 = vstv %s678
        %v680 = vmul.f32 %v679, %v664
        %682 = vrot.lane.b32.xlu0 %v680, 126
        %v683 = vpop.permute.xlu0 %682
        %v685 = vadd.f32 %v677, %v683
        %s686 = sld [smem:[#allocation2 + $0x34]]
        %v687 = vstv %s686
        %v688 = vmul.f32 %v687, %v664
        %690 = vrot.lane.b32.xlu0 %v688, 125
        %v691 = vpop.permute.xlu0 %690
        %v693 = vadd.f32 %v685, %v691
        %s694 = sld [smem:[#allocation2 + $0x35]]
        %v695 = vstv %s694
        %v696 = vmul.f32 %v695, %v664
        %698 = vrot.lane.b32.xlu0 %v696, 124
        %v699 = vpop.permute.xlu0 %698
        %v701 = vadd.f32 %v693, %v699
        %s702 = sld [smem:[#allocation2 + $0x36]]
        %v703 = vstv %s702
        %v704 = vmul.f32 %v703, %v664
        %706 = vrot.lane.b32.xlu0 %v704, 123
        %v707 = vpop.permute.xlu0 %706
        %v709 = vadd.f32 %v701, %v707
        %s710 = sld [smem:[#allocation2 + $0x37]]
        %v711 = vstv %s710
        %v712 = vmul.f32 %v711, %v664
        %714 = vrot.lane.b32.xlu0 %v712, 122
        %v715 = vpop.permute.xlu0 %714
        %v717 = vadd.f32 %v709, %v715
        %s718 = sld [smem:[#allocation2 + $0x38]]
        %v719 = vstv %s718
        %v720 = vmul.f32 %v719, %v664
        %v722 = vrot.slane %v720, 1
        %v724 = vadd.f32 %v717, %v722
        %s725 = sld [smem:[#allocation2 + $0x39]]
        %v726 = vstv %s725
        %v727 = vmul.f32 %v726, %v664
        %v729 = vrot.slane %v727, 1
        %730 = vrot.lane.b32.xlu0 %v729, 127
        %v731 = vpop.permute.xlu0 %730
        %v733 = vadd.f32 %v724, %v731
        %s734 = sld [smem:[#allocation2 + $0x3a]]
        %v735 = vstv %s734
        %v736 = vmul.f32 %v735, %v664
        %v738 = vrot.slane %v736, 1
        %739 = vrot.lane.b32.xlu0 %v738, 126
        %v740 = vpop.permute.xlu0 %739
        %v742 = vadd.f32 %v733, %v740
        %s743 = sld [smem:[#allocation2 + $0x3b]]
        %v744 = vstv %s743
        %v745 = vmul.f32 %v744, %v664
        %v747 = vrot.slane %v745, 1
        %748 = vrot.lane.b32.xlu0 %v747, 125
        %v749 = vpop.permute.xlu0 %748
        %v751 = vadd.f32 %v742, %v749
        %s752 = sld [smem:[#allocation2 + $0x3c]]
        %v753 = vstv %s752
        %v754 = vmul.f32 %v753, %v664
        %v756 = vrot.slane %v754, 1
        %757 = vrot.lane.b32.xlu0 %v756, 124
        %v758 = vpop.permute.xlu0 %757
        %v760 = vadd.f32 %v751, %v758
        %s761 = sld [smem:[#allocation2 + $0x3d]]
        %v762 = vstv %s761
        %v763 = vmul.f32 %v762, %v664
        %v765 = vrot.slane %v763, 1
        %766 = vrot.lane.b32.xlu0 %v765, 123
        %v767 = vpop.permute.xlu0 %766
        %v769 = vadd.f32 %v760, %v767
        %s770 = sld [smem:[#allocation2 + $0x3e]]
        %v771 = vstv %s770
        %v772 = vmul.f32 %v771, %v664
        %v774 = vrot.slane %v772, 1
        %775 = vrot.lane.b32.xlu0 %v774, 122
        %v776 = vpop.permute.xlu0 %775
        %v778 = vadd.f32 %v769, %v776
        %s779 = sld [smem:[#allocation2 + $0x3f]]
        %v780 = vstv %s779
        %v781 = vmul.f32 %v780, %v664
        %v783 = vrot.slane %v781, 2
        %v785 = vadd.f32 %v778, %v783
        %s786 = sld [smem:[#allocation2 + $0x40]]
        %v787 = vstv %s786
        %v788 = vmul.f32 %v787, %v664
        %v790 = vrot.slane %v788, 2
        %791 = vrot.lane.b32.xlu0 %v790, 127
        %v792 = vpop.permute.xlu0 %791
        %v794 = vadd.f32 %v785, %v792
        %s795 = sld [smem:[#allocation2 + $0x41]]
        %v796 = vstv %s795
        %v797 = vmul.f32 %v796, %v664
        %v799 = vrot.slane %v797, 2
        %800 = vrot.lane.b32.xlu0 %v799, 126
        %v801 = vpop.permute.xlu0 %800
        %v803 = vadd.f32 %v794, %v801
        %s804 = sld [smem:[#allocation2 + $0x42]]
        %v805 = vstv %s804
        %v806 = vmul.f32 %v805, %v664
        %v808 = vrot.slane %v806, 2
        %809 = vrot.lane.b32.xlu0 %v808, 125
        %v810 = vpop.permute.xlu0 %809
        %v812 = vadd.f32 %v803, %v810
        %s813 = sld [smem:[#allocation2 + $0x43]]
        %v814 = vstv %s813
        %v815 = vmul.f32 %v814, %v664
        %v817 = vrot.slane %v815, 2
        %818 = vrot.lane.b32.xlu0 %v817, 124
        %v819 = vpop.permute.xlu0 %818
        %v821 = vadd.f32 %v812, %v819
        %s822 = sld [smem:[#allocation2 + $0x44]]
        %v823 = vstv %s822
        %v824 = vmul.f32 %v823, %v664
        %v826 = vrot.slane %v824, 2
        %827 = vrot.lane.b32.xlu0 %v826, 123
        %v828 = vpop.permute.xlu0 %827
        %v830 = vadd.f32 %v821, %v828
        %s831 = sld [smem:[#allocation2 + $0x45]]
        %v832 = vstv %s831
        %v833 = vmul.f32 %v832, %v664
        %v835 = vrot.slane %v833, 2
        %836 = vrot.lane.b32.xlu0 %v835, 122
        %v837 = vpop.permute.xlu0 %836
        %v839 = vadd.f32 %v830, %v837
        %s840 = sld [smem:[#allocation2 + $0x46]]
        %v841 = vstv %s840
        %v842 = vmul.f32 %v841, %v664
        %v844 = vrot.slane %v842, 3
        %v846 = vadd.f32 %v839, %v844
        %s847 = sld [smem:[#allocation2 + $0x47]]
        %v848 = vstv %s847
        %v849 = vmul.f32 %v848, %v664
        %v851 = vrot.slane %v849, 3
        %852 = vrot.lane.b32.xlu0 %v851, 127
        %v853 = vpop.permute.xlu0 %852
        %v855 = vadd.f32 %v846, %v853
        %s856 = sld [smem:[#allocation2 + $0x48]]
        %v857 = vstv %s856
        %v858 = vmul.f32 %v857, %v664
        %v860 = vrot.slane %v858, 3
        %861 = vrot.lane.b32.xlu0 %v860, 126
        %v862 = vpop.permute.xlu0 %861
        %v864 = vadd.f32 %v855, %v862
        %s865 = sld [smem:[#allocation2 + $0x49]]
        %v866 = vstv %s865
        %v867 = vmul.f32 %v866, %v664
        %v869 = vrot.slane %v867, 3
        %870 = vrot.lane.b32.xlu0 %v869, 125
        %v871 = vpop.permute.xlu0 %870
        %v873 = vadd.f32 %v864, %v871
        %s874 = sld [smem:[#allocation2 + $0x4a]]
        %v875 = vstv %s874
        %v876 = vmul.f32 %v875, %v664
        %v878 = vrot.slane %v876, 3
        %879 = vrot.lane.b32.xlu0 %v878, 124
        %v880 = vpop.permute.xlu0 %879
        %v882 = vadd.f32 %v873, %v880
        %s883 = sld [smem:[#allocation2 + $0x4b]]
        %v884 = vstv %s883
        %v885 = vmul.f32 %v884, %v664
        %v887 = vrot.slane %v885, 3
        %888 = vrot.lane.b32.xlu0 %v887, 123
        %v889 = vpop.permute.xlu0 %888
        %v891 = vadd.f32 %v882, %v889
        %s892 = sld [smem:[#allocation2 + $0x4c]]
        %v893 = vstv %s892
        %v894 = vmul.f32 %v893, %v664
        %v896 = vrot.slane %v894, 3
        %897 = vrot.lane.b32.xlu0 %v896, 122
        %v898 = vpop.permute.xlu0 %897
        %v900 = vadd.f32 %v891, %v898
        %s901 = sld [smem:[#allocation2 + $0x4d]]
        %v902 = vstv %s901
        %v903 = vmul.f32 %v902, %v664
        %v904 = vmul.f32 %v902, %v665
        %v907 = vrot.slane %v903, 4
        %v908 = vrot.slane %v904, 4
        %v909 = vsel %vm399, %v907, %v908
        %v911 = vadd.f32 %v900, %v909
        %s912 = sld [smem:[#allocation2 + $0x4e]]
        %v913 = vstv %s912
        %v914 = vmul.f32 %v913, %v664
        %v915 = vmul.f32 %v913, %v665
        %v918 = vrot.slane %v914, 4
        %v919 = vrot.slane %v915, 4
        %v920 = vsel %vm399, %v918, %v919
        %921 = vrot.lane.b32.xlu0 %v920, 127
        %v922 = vpop.permute.xlu0 %921
        %v924 = vadd.f32 %v911, %v922
        %s925 = sld [smem:[#allocation2 + $0x4f]]
        %v926 = vstv %s925
        %v927 = vmul.f32 %v926, %v664
        %v928 = vmul.f32 %v926, %v665
        %v931 = vrot.slane %v927, 4
        %v932 = vrot.slane %v928, 4
        %v933 = vsel %vm399, %v931, %v932
        %934 = vrot.lane.b32.xlu0 %v933, 126
        %v935 = vpop.permute.xlu0 %934
        %v937 = vadd.f32 %v924, %v935
        %s938 = sld [smem:[#allocation2 + $0x50]]
        %v939 = vstv %s938
        %v940 = vmul.f32 %v939, %v664
        %v941 = vmul.f32 %v939, %v665
        %v944 = vrot.slane %v940, 4
        %v945 = vrot.slane %v941, 4
        %v946 = vsel %vm399, %v944, %v945
        %947 = vrot.lane.b32.xlu0 %v946, 125
        %v948 = vpop.permute.xlu0 %947
        %v950 = vadd.f32 %v937, %v948
        %s951 = sld [smem:[#allocation2 + $0x51]]
        %v952 = vstv %s951
        %v953 = vmul.f32 %v952, %v664
        %v954 = vmul.f32 %v952, %v665
        %v957 = vrot.slane %v953, 4
        %v958 = vrot.slane %v954, 4
        %v959 = vsel %vm399, %v957, %v958
        %960 = vrot.lane.b32.xlu0 %v959, 124
        %v961 = vpop.permute.xlu0 %960
        %v963 = vadd.f32 %v950, %v961
        %s964 = sld [smem:[#allocation2 + $0x52]]
        %v965 = vstv %s964
        %v966 = vmul.f32 %v965, %v664
        %v967 = vmul.f32 %v965, %v665
        %v970 = vrot.slane %v966, 4
        %v971 = vrot.slane %v967, 4
        %v972 = vsel %vm399, %v970, %v971
        %973 = vrot.lane.b32.xlu0 %v972, 123
        %v974 = vpop.permute.xlu0 %973
        %v976 = vadd.f32 %v963, %v974
        %s977 = sld [smem:[#allocation2 + $0x53]]
        %v978 = vstv %s977
        %v979 = vmul.f32 %v978, %v664
        %v980 = vmul.f32 %v978, %v665
        %v983 = vrot.slane %v979, 4
        %v984 = vrot.slane %v980, 4
        %v985 = vsel %vm399, %v983, %v984
        %986 = vrot.lane.b32.xlu0 %v985, 122
        %v987 = vpop.permute.xlu0 %986
        %v989 = vadd.f32 %v976, %v987
        %s990 = sld [smem:[#allocation2 + $0x54]]
        %v991 = vstv %s990
        %v992 = vmul.f32 %v991, %v664
        %v993 = vmul.f32 %v991, %v665
        %v996 = vrot.slane %v992, 5
        %v997 = vrot.slane %v993, 5
        %v998 = vsel %vm489, %v996, %v997
        %v1000 = vadd.f32 %v989, %v998
        %s1001 = sld [smem:[#allocation2 + $0x55]]
        %v1002 = vstv %s1001
        %v1003 = vmul.f32 %v1002, %v664
        %v1004 = vmul.f32 %v1002, %v665
        %v1007 = vrot.slane %v1003, 5
        %v1008 = vrot.slane %v1004, 5
        %v1009 = vsel %vm489, %v1007, %v1008
        %1010 = vrot.lane.b32.xlu0 %v1009, 127
        %v1011 = vpop.permute.xlu0 %1010
        %v1013 = vadd.f32 %v1000, %v1011
        %s1014 = sld [smem:[#allocation2 + $0x56]]
        %v1015 = vstv %s1014
        %v1016 = vmul.f32 %v1015, %v664
        %v1017 = vmul.f32 %v1015, %v665
        %v1020 = vrot.slane %v1016, 5
        %v1021 = vrot.slane %v1017, 5
        %v1022 = vsel %vm489, %v1020, %v1021
        %1023 = vrot.lane.b32.xlu0 %v1022, 126
        %v1024 = vpop.permute.xlu0 %1023
        %v1026 = vadd.f32 %v1013, %v1024
        %s1027 = sld [smem:[#allocation2 + $0x57]]
        %v1028 = vstv %s1027
        %v1029 = vmul.f32 %v1028, %v664
        %v1030 = vmul.f32 %v1028, %v665
        %v1033 = vrot.slane %v1029, 5
        %v1034 = vrot.slane %v1030, 5
        %v1035 = vsel %vm489, %v1033, %v1034
        %1036 = vrot.lane.b32.xlu0 %v1035, 125
        %v1037 = vpop.permute.xlu0 %1036
        %v1039 = vadd.f32 %v1026, %v1037
        %s1040 = sld [smem:[#allocation2 + $0x58]]
        %v1041 = vstv %s1040
        %v1042 = vmul.f32 %v1041, %v664
        %v1043 = vmul.f32 %v1041, %v665
        %v1046 = vrot.slane %v1042, 5
        %v1047 = vrot.slane %v1043, 5
        %v1048 = vsel %vm489, %v1046, %v1047
        %1049 = vrot.lane.b32.xlu0 %v1048, 124
        %v1050 = vpop.permute.xlu0 %1049
        %v1052 = vadd.f32 %v1039, %v1050
        %s1053 = sld [smem:[#allocation2 + $0x59]]
        %v1054 = vstv %s1053
        %v1055 = vmul.f32 %v1054, %v664
        %v1056 = vmul.f32 %v1054, %v665
        %v1059 = vrot.slane %v1055, 5
        %v1060 = vrot.slane %v1056, 5
        %v1061 = vsel %vm489, %v1059, %v1060
        %1062 = vrot.lane.b32.xlu0 %v1061, 123
        %v1063 = vpop.permute.xlu0 %1062
        %v1065 = vadd.f32 %v1052, %v1063
        %s1066 = sld [smem:[#allocation2 + $0x5a]]
        %v1067 = vstv %s1066
        %v1068 = vmul.f32 %v1067, %v664
        %v1069 = vmul.f32 %v1067, %v665
        %v1072 = vrot.slane %v1068, 5
        %v1073 = vrot.slane %v1069, 5
        %v1074 = vsel %vm489, %v1072, %v1073
        %1075 = vrot.lane.b32.xlu0 %v1074, 122
        %v1076 = vpop.permute.xlu0 %1075
        %v1078 = vadd.f32 %v1065, %v1076
        %s1079 = sld [smem:[#allocation2 + $0x5b]]
        %v1080 = vstv %s1079
        %v1081 = vmul.f32 %v1080, %v664
        %v1082 = vmul.f32 %v1080, %v665
        %v1085 = vrot.slane %v1081, 6
        %v1086 = vrot.slane %v1082, 6
        %v1087 = vsel %vm579, %v1085, %v1086
        %v1089 = vadd.f32 %v1078, %v1087
        %s1090 = sld [smem:[#allocation2 + $0x5c]]
        %v1091 = vstv %s1090
        %v1092 = vmul.f32 %v1091, %v664
        %v1093 = vmul.f32 %v1091, %v665
        %v1096 = vrot.slane %v1092, 6
        %v1097 = vrot.slane %v1093, 6
        %v1098 = vsel %vm579, %v1096, %v1097
        %1099 = vrot.lane.b32.xlu0 %v1098, 127
        %v1100 = vpop.permute.xlu0 %1099
        %v1102 = vadd.f32 %v1089, %v1100
        %s1103 = sld [smem:[#allocation2 + $0x5d]]
        %v1104 = vstv %s1103
        %v1105 = vmul.f32 %v1104, %v664
        %v1106 = vmul.f32 %v1104, %v665
        %v1109 = vrot.slane %v1105, 6
        %v1110 = vrot.slane %v1106, 6
        %v1111 = vsel %vm579, %v1109, %v1110
        %1112 = vrot.lane.b32.xlu0 %v1111, 126
        %v1113 = vpop.permute.xlu0 %1112
        %v1115 = vadd.f32 %v1102, %v1113
        %s1116 = sld [smem:[#allocation2 + $0x5e]]
        %v1117 = vstv %s1116
        %v1118 = vmul.f32 %v1117, %v664
        %v1119 = vmul.f32 %v1117, %v665
        %v1122 = vrot.slane %v1118, 6
        %v1123 = vrot.slane %v1119, 6
        %v1124 = vsel %vm579, %v1122, %v1123
        %1125 = vrot.lane.b32.xlu0 %v1124, 125
        %v1126 = vpop.permute.xlu0 %1125
        %v1128 = vadd.f32 %v1115, %v1126
        %s1129 = sld [smem:[#allocation2 + $0x5f]]
        %v1130 = vstv %s1129
        %v1131 = vmul.f32 %v1130, %v664
        %v1132 = vmul.f32 %v1130, %v665
        %v1135 = vrot.slane %v1131, 6
        %v1136 = vrot.slane %v1132, 6
        %v1137 = vsel %vm579, %v1135, %v1136
        %1138 = vrot.lane.b32.xlu0 %v1137, 124
        %v1139 = vpop.permute.xlu0 %1138
        %v1141 = vadd.f32 %v1128, %v1139
        %s1142 = sld [smem:[#allocation2 + $0x60]]
        %v1143 = vstv %s1142
        %v1144 = vmul.f32 %v1143, %v664
        %v1145 = vmul.f32 %v1143, %v665
        %v1148 = vrot.slane %v1144, 6
        %v1149 = vrot.slane %v1145, 6
        %v1150 = vsel %vm579, %v1148, %v1149
        %1151 = vrot.lane.b32.xlu0 %v1150, 123
        %v1152 = vpop.permute.xlu0 %1151
        %v1154 = vadd.f32 %v1141, %v1152
        %s1155 = sld [smem:[#allocation2 + $0x61]]
        %v1156 = vstv %s1155
        %v1157 = vmul.f32 %v1156, %v664
        %v1158 = vmul.f32 %v1156, %v665
        %v1161 = vrot.slane %v1157, 6
        %v1162 = vrot.slane %v1158, 6
        %v1163 = vsel %vm579, %v1161, %v1162
        %1164 = vrot.lane.b32.xlu0 %v1163, 122
        %v1165 = vpop.permute.xlu0 %1164
        %v1167 = vadd.f32 %v1154, %v1165
        %v1168 = vxor.u32 %v1167, 2147483648
        %v1169 = vmul.f32 %v1168, 1.442695
        %v1170 = vpow.pop %v1169
        %v1171 = vadd.f32 %v1170, 1.0
        %v1172 = vrcp.pop %v1171
        %v1173 = vmul.f32 1.0, %v1172
        %vm1174 = vcmask 36864
        %1175 = vst.msk [vmem:[%s155] sm:$0x1f] %vm1174, %v1173
        %p1176 = scmp.lt.s32.totalorder %s14, 1
        %s1177 = scalar_select %p1176, %s14, 1
        %s1178 = smul.addr %s1177, 8
        %s1179 = scalar_lea.vmem %s2, %s1178
        // Predicated region
        $region33: #{srm_pixel_attention.9} parent=27 // pred_check
          %p1180 = pneg %p79
        $region34: #{srm_pixel_attention.9} parent=27 // pred_check_branch
          %1182 = sbr.rel (%p1180) target = $region36
        $region35: #{srm_pixel_attention.9} parent=27 // pred_region
          _
        $region36: #{srm_pixel_attention.9} parent=27 // pred_fallthru
          _
      $region28: #{srm_pixel_attention.9} parent=5 // pred_fallthru
        _
      %p1183 = scmp.le.s32.totalorder 2, %s9
      // Predicated region
      $region37: #{srm_pixel_attention.9} parent=5 // pred_check
        %p1184 = pneg %p1183
      $region38: #{srm_pixel_attention.9} parent=5 // pred_check_branch
        %1186 = sbr.rel (%p1184) target = $region40
      $region39: #{srm_pixel_attention.9} parent=5 // pred_region
        %s1187 = ssub.s32 %s9, 2
        // Predicated region
        $region41: #{srm_pixel_attention.9} parent=39 // pred_check
          %p1188 = pneg %p85
        $region42: #{srm_pixel_attention.9} parent=39 // pred_check_branch
          %1190 = sbr.rel (%p1188) target = $region44
        $region43: #{srm_pixel_attention.9} parent=39 // pred_region
          %p1191 = scmp.lt.s32.totalorder %s15, 1
          %s1192 = scalar_select %p1191, %s15, 1
          %s1193 = smul.addr %s1192, 8
          %s1194 = scalar_lea.vmem %s2, %s1193
        $region44: #{srm_pixel_attention.9} parent=39 // pred_fallthru
          _
      $region40: #{srm_pixel_attention.9} parent=5 // pred_fallthru
        _
    $region6: #{srm_pixel_attention.9} parent=1 // loop_footer
      %s13 = sadd.s32 1, %s9
    $region7: #{srm_pixel_attention.9} parent=1 // loop_footer_branch
      %8 = sbr.rel target = $region3
    $region8: #{srm_pixel_attention.9} parent=1 // loop_exit
      _
    %1195 = vsyncpa [#allocation3], 1
    %s1196 = scalar_lea.sflag [#allocation3], 1
    %1197 = vsyncpa %s1196, 1

</llo_original>
